<compile_context>
chip_gen: v7x
topology: tpu7x:2x2x1
jax: 0.10.0
libtpu: 0.0.40
codegen_flags: <defaults>
</compile_context>

<pallas_src>
import functools

import jax
import jax.numpy as jnp
from jax.experimental import pallas as pl
from jax.experimental.pallas import tpu as pltpu

EPS = 1e-5
_MAX_EW_LANES = 1024          # widest lane-dense row (8 vregs) for the elementwise kernels
_EW_BLOCK_BYTES = 2 << 20     # ~2 MiB per elementwise operand block
_EW_MIN_BLOCK_BYTES = 512 << 10


@functools.lru_cache(maxsize=None)
def _vmem_limit_bytes():
    """Per-generation scoped-VMEM budget (96 MiB on 128-MiB parts, 48 MiB on v7x)."""
    phys = None
    try:
        phys = getattr(pltpu.get_tpu_info(), "vmem_capacity_bytes", None)
    except Exception:
        phys = None
    if not phys:
        phys = 64 * 1024 * 1024       # conservative fallback (safe on every generation)
    return int(min(96 * 1024 * 1024, max(32 * 1024 * 1024, (int(phys) * 3) // 4)))


def _cparams():
    return pltpu.CompilerParams(
        dimension_semantics=("parallel",),
        vmem_limit_bytes=_vmem_limit_bytes())


def _pick_row_tile(r, lanes, itemsize=4, max_bytes=_EW_BLOCK_BYTES,
                   min_steps=4, min_bytes=_EW_MIN_BLOCK_BYTES):
    """Largest legal row tile (multiple of 8, or full extent) under a per-block byte budget;
    mildly prefers >=4 grid steps (v7x 2-TC sharding / pipelining) when blocks stay big."""
    cap = max(1, max_bytes // max(1, lanes * itemsize))
    cands = [t for t in range(8, min(r, cap) + 1, 8) if r % t == 0]
    if r <= cap:
        cands.append(r)
    if not cands:
        return r                      # no legal tile under budget: single full-extent block
    big = max(cands)
    multi = [t for t in cands
             if r // t >= min_steps and t * lanes * itemsize >= min_bytes]
    return max(multi) if multi else big


def _ew_layout(m, c, max_lanes=_MAX_EW_LANES):
    """Lane-dense layout for elementwise kernels: row-major (m, c) -> (R, L) with L a
    multiple of 128 and of c (so a single (1, L) scale/offset row broadcasts correctly)."""
    total = m * c
    best = None
    lanes = 128
    while lanes <= min(max_lanes, total):
        if total % lanes == 0 and lanes % c == 0:
            best = lanes
        lanes += 128
    if best is None:
        return m, c, 1                # fallback: natural (rows, channels) layout
    return total // best, best, best // c


# ----------------------------------------------------------------------------
# Pallas kernels
# ----------------------------------------------------------------------------
def _conv3x3_bias_stats_kernel(x_ref, w_ref, b_ref, y_ref, s_ref, q_ref, *,
                               stride, ho, wo, wq):
    """3x3 conv (pad 1, stride s) for one image, fused bias + masked partial BN stats.

    x_ref: (s*s, Hq*Wq, Cin)  zero-padded input split into s x s parity planes and
                              flattened so every (kh, kw) tap is a constant-offset,
                              unit-stride row window (no im2col anywhere).
    w_ref: (9, Cin, Cout)     per-tap weight matrices (index = kh*3 + kw).
    b_ref: (1, Cout) f32      bias.
    y_ref: (Ho*Wq, Cout)      conv+bias output in the "wide" layout (columns >= Wo are
                              don't-care filler, dropped downstream); bf16 by default.
    s_ref, q_ref: (1, Cout)   f32 partial sum / sum-of-squares over this image's VALID pixels.
    """
    rows = ho * wq
    acc = None
    for t in range(9):                                   # 9 taps -> 9 MXU matmuls
        dh, dw = t // 3, t % 3
        p = (dh % stride) * stride + (dw % stride)       # parity plane for this tap
        off = (dh // stride) * wq + (dw // stride)       # constant row offset in the plane
        part = jnp.dot(x_ref[p, off:off + rows, :], w_ref[t],
                       preferred_element_type=jnp.float32)
        acc = part if acc is None else acc + part
    acc = acc + b_ref[...]
    y_ref[...] = acc.astype(y_ref.dtype)                 # bf16 store (f32 in check mode)
    # Masked partial batch-norm stats (exclude the Wq-Wo filler columns), fused here so
    # the activation is never re-read from HBM just for statistics.
    col = jax.lax.broadcasted_iota(jnp.int32, (rows, 1), 0) % wq
    acc_m = jnp.where(col < wo, acc, 0.0)
    s_ref[...] = jnp.sum(acc_m, axis=0, keepdims=True)
    q_ref[...] = jnp.sum(acc_m * acc, axis=0, keepdims=True)


def _matmul_bias_kernel(a_ref, w_ref, b_ref, o_ref):
    # (tm, K) @ (K, Cout) + (1, Cout) on the MXU, f32 accumulation (1x1-conv skip path).
    o_ref[...] = (jnp.dot(a_ref[...], w_ref[...],
                          preferred_element_type=jnp.float32) + b_ref[...])


def _scale_shift_relu_kernel(y_ref, sc_ref, of_ref, o_ref):
    # lane-dense fused BN-normalize + ReLU:  relu(y * scale + offset)
    y = y_ref[...].astype(jnp.float32)
    o_ref[...] = jnp.maximum(y * sc_ref[...] + of_ref[...], 0.0).astype(o_ref.dtype)


def _scale_shift_add_relu_kernel(y_ref, r_ref, sc_ref, of_ref, o_ref):
    # lane-dense fused BN-normalize + residual add + ReLU
    y = y_ref[...].astype(jnp.float32)
    o_ref[...] = jnp.maximum(y * sc_ref[...] + of_ref[...] + r_ref[...],
                             0.0).astype(o_ref.dtype)


# ----------------------------------------------------------------------------
# Pallas wrappers
# ----------------------------------------------------------------------------
def _conv_parity_planes(x_nhwc, stride, mxu_dtype):
    """Pad and split the NHWC input into stride x stride parity planes (no HBM inflation).

    In plane (dh%s, dw%s) the (dh, dw) conv tap for flat wide-output row r lives at plane
    row  r + (dh//s)*Wq + (dw//s)  -- i.e. a constant-offset, unit-stride window.
    Returns (N, s*s, Hq*Wq, Cin) in mxu_dtype plus (Ho, Wo, Wq).
    """
    N, H, W, C = x_nhwc.shape
    s = stride
    Ho = (H - 1) // s + 1
    Wo = (W - 1) // s + 1
    ext = 2 // s                       # extra tap reach (in plane units) beyond the parity
    Wq = Wo + ext
    Hq = Ho + ext + (1 if ext else 0)  # +1 row so flat tap windows may run past the last row
    xp = jnp.pad(x_nhwc.astype(mxu_dtype), ((0, 0), (1, 1), (1, 1), (0, 0)))
    planes = []
    for ph in range(s):
        for pw in range(s):
            pln = xp[:, ph::s, pw::s, :][:, :Hq, :Wq, :]
            pad_h, pad_w = Hq - pln.shape[1], Wq - pln.shape[2]
            if pad_h or pad_w:
                pln = jnp.pad(pln, ((0, 0), (0, pad_h), (0, pad_w), (0, 0)))
            planes.append(pln)
    xq = jnp.stack(planes, axis=1)                       # (N, s*s, Hq, Wq, C)
    return xq.reshape(N, s * s, Hq * Wq, C), (Ho, Wo, Wq)


def conv3x3_bias_stats(x_nhwc, w_oihw, bias, stride, mxu_dtype):
    """Fused 3x3 conv (pad 1, stride) + bias + masked partial batch statistics."""
    N, H, W, Cin = x_nhwc.shape
    Cout = w_oihw.shape[0]
    planes, (Ho, Wo, Wq) = _conv_parity_planes(x_nhwc, stride, mxu_dtype)
    Pq = planes.shape[2]                                  # Hq * Wq
    w_taps = jnp.transpose(w_oihw, (2, 3, 1, 0)).reshape(9, Cin, Cout).astype(mxu_dtype)
    b2 = bias.reshape(1, Cout).astype(jnp.float32)

    kern = functools.partial(_conv3x3_bias_stats_kernel,
                             stride=stride, ho=Ho, wo=Wo, wq=Wq)
    # TODO(synk): for large images, tile the Ho axis as a second grid dimension (halo'd
    # row windows via manual DMA) instead of one whole image per grid step -- needed on
    # v7x (64 MiB VMEM, 2 TCs) once H*W*C no longer fits a whole-image block.
    # TODO(synk): pad Cout to a lane multiple (128) when channel counts are tiny so the
    # conv/matmul output stores are full-width unmasked vst.
    y, psum, psq = pl.pallas_call(
        kern,
        out_shape=(jax.ShapeDtypeStruct((N, Ho * Wq, Cout), mxu_dtype),
                   jax.ShapeDtypeStruct((N, 1, Cout), jnp.float32),
                   jax.ShapeDtypeStruct((N, 1, Cout), jnp.float32)),
        grid=(N,),
        in_specs=[
            pl.BlockSpec((None, stride * stride, Pq, Cin), lambda n: (n, 0, 0, 0)),
            pl.BlockSpec((9, Cin, Cout), lambda n: (0, 0, 0)),
            pl.BlockSpec((1, Cout), lambda n: (0, 0)),
        ],
        out_specs=(
            pl.BlockSpec((None, Ho * Wq, Cout), lambda n: (n, 0, 0)),
            pl.BlockSpec((None, 1, Cout), lambda n: (n, 0, 0)),
            pl.BlockSpec((None, 1, Cout), lambda n: (n, 0, 0)),
        ),
        compiler_params=_cparams(),
    )(planes, w_taps, b2)

    m_rows = N * Ho * Wo
    mean = jnp.sum(psum, axis=0) / m_rows                 # (1, Cout)
    # One-pass variance; clamp guards the E[x^2]-E[x]^2 cancellation at these magnitudes.
    # TODO(synk): use a shifted/Welford accumulation if activations become large-mean.
    var = jnp.maximum(jnp.sum(psq, axis=0) / m_rows - mean * mean, 0.0)
    return y, mean, var, (Ho, Wo, Wq)


def matmul_bias(a, w, b):
    """a: (M, K) @ w: (K, Cout) + b: (1, Cout) -> (M, Cout) f32 (1x1-conv skip path)."""
    M, K = a.shape
    Cout = w.shape[1]
    tm = _pick_row_tile(M, K + Cout)
    return pl.pallas_call(
        _matmul_bias_kernel,
        out_shape=jax.ShapeDtypeStruct((M, Cout), jnp.float32),
        grid=(M // tm,),
        in_specs=[
            pl.BlockSpec((tm, K), lambda i: (i, 0)),
            pl.BlockSpec((K, Cout), lambda i: (0, 0)),
            pl.BlockSpec((1, Cout), lambda i: (0, 0)),
        ],
        out_specs=pl.BlockSpec((tm, Cout), lambda i: (i, 0)),
        compiler_params=_cparams(),
    )(a, w, b)


def bn_relu_lane_dense(y_flat, scale_row, offset_row, out_dtype):
    R, L = y_flat.shape
    tr = _pick_row_tile(R, L)
    return pl.pallas_call(
        _scale_shift_relu_kernel,
        out_shape=jax.ShapeDtypeStruct((R, L), out_dtype),
        grid=(R // tr,),
        in_specs=[
            pl.BlockSpec((tr, L), lambda i: (i, 0)),
            pl.BlockSpec((1, L), lambda i: (0, 0)),
            pl.BlockSpec((1, L), lambda i: (0, 0)),
        ],
        out_specs=pl.BlockSpec((tr, L), lambda i: (i, 0)),
        compiler_params=_cparams(),
    )(y_flat, scale_row, offset_row)


def bn_add_relu_lane_dense(y_flat, res_flat, scale_row, offset_row):
    R, L = y_flat.shape
    tr = _pick_row_tile(R, L)
    return pl.pallas_call(
        _scale_shift_add_relu_kernel,
        out_shape=jax.ShapeDtypeStruct((R, L), jnp.float32),
        grid=(R // tr,),
        in_specs=[
            pl.BlockSpec((tr, L), lambda i: (i, 0)),
            pl.BlockSpec((tr, L), lambda i: (i, 0)),
            pl.BlockSpec((1, L), lambda i: (0, 0)),
            pl.BlockSpec((1, L), lambda i: (0, 0)),
        ],
        out_specs=pl.BlockSpec((tr, L), lambda i: (i, 0)),
        input_output_aliases={1: 0},     # write the result over the residual's f32 buffer
        compiler_params=_cparams(),
    )(y_flat, res_flat, scale_row, offset_row)


def _bn_scale_offset(mean, var, gamma, beta, reps):
    # Fold BN (train-mode batch stats) + affine into per-channel scale/offset (f32),
    # tiled `reps` times so a single (1, L) row broadcasts over the lane-dense layout.
    scale = gamma.reshape(1, -1) * jax.lax.rsqrt(var + EPS)
    offset = beta.reshape(1, -1) - mean * scale
    return jnp.tile(scale, (1, reps)), jnp.tile(offset, (1, reps))


# ----------------------------------------------------------------------------
# Residual forward built from the Pallas kernels
# ----------------------------------------------------------------------------
@functools.partial(jax.jit, static_argnames=("stride", "mxu_dtype"))
def residual_forward(x_nchw, params, stride=1, mxu_dtype=jnp.bfloat16):
    N, Cin, H, W = x_nchw.shape
    Cout = params["w1"].shape[0]
    x = jnp.transpose(x_nchw, (0, 2, 3, 1)).astype(jnp.float32)        # NHWC

    # conv1 (3x3, pad 1, stride s) + bias + fused masked partial BN stats (wide layout)
    y1w, m1, v1, (ho, wo, wq1) = conv3x3_bias_stats(
        x, params["w1"], params["b1"], stride, mxu_dtype)

    # bn1 + relu over the wide layout (per-channel affine, so the filler columns are
    # harmless; they get dropped while building conv2's parity planes in the same copy).
    R1, L1, reps1 = _ew_layout(N * ho * wq1, Cout)
    sc1, of1 = _bn_scale_offset(m1, v1, params["g1"], params["be1"], reps1)
    y1n = bn_relu_lane_dense(y1w.reshape(R1, L1), sc1, of1, out_dtype=mxu_dtype)
    y1n = y1n.reshape(N, ho, wq1, Cout)[:, :, :wo, :]   # strip filler (fuses with the pad)

    # conv2 (3x3, pad 1, stride 1) + bias + fused masked partial BN stats
    y2w, m2, v2, (_, _, wq2) = conv3x3_bias_stats(
        y1n, params["w2"], params["b2"], 1, mxu_dtype)
    m_rows = N * ho * wo
    # TODO(synk): emit valid-only rows from the conv kernel (row copies from the wide
    # accumulator) to avoid this extra bf16 strip copy of y2.
    y2 = y2w.reshape(N, ho, wq2, Cout)[:, :, :wo, :].reshape(m_rows, Cout)

    # skip path: identity or 1x1 conv with stride s (MXU)
    x_s = x[:, ::stride, ::stride, :]
    if "w3" in params:
        # TODO(synk): fuse this projection into the final kernel once Cout is a lane
        # multiple, to avoid materializing `res` in HBM.
        res = matmul_bias(
            x_s.reshape(-1, Cin).astype(mxu_dtype),
            params["w3"].reshape(Cout, Cin).T.astype(mxu_dtype),
            params["b3"].reshape(1, Cout).astype(jnp.float32))
    else:
        assert Cin == Cout, "identity skip path requires matching channel counts"
        res = x_s.reshape(-1, Cout)

    # bn2 + residual add + relu, lane-dense, written in place over the residual buffer
    R2, L2, reps2 = _ew_layout(m_rows, Cout)
    sc2, of2 = _bn_scale_offset(m2, v2, params["g2"], params["be2"], reps2)
    out = bn_add_relu_lane_dense(y2.reshape(R2, L2),
                                 res.astype(jnp.float32).reshape(R2, L2), sc2, of2)
    return jnp.transpose(out.reshape(N, ho, wo, Cout), (0, 3, 1, 2))   # back to NCHW


# ----------------------------------------------------------------------------
# Parameter init (matches nn.Conv2d / nn.BatchNorm2d defaults, perturbed affines)
# ----------------------------------------------------------------------------
def init_residual_params(key, cin, cout, use_1x1conv):
    ks = jax.random.split(key, 8)

    def conv_init(k, shape):
        fan_in = shape[1] * shape[2] * shape[3]
        bound = 1.0 / jnp.sqrt(jnp.float32(fan_in))
        return jax.random.uniform(k, shape, jnp.float32, -bound, bound)

    p = {
        "w1": conv_init(ks[0], (cout, cin, 3, 3)),
        "b1": 0.1 * jax.random.uniform(ks[1], (cout,), jnp.float32, -1.0, 1.0),
        "w2": conv_init(ks[2], (cout, cout, 3, 3)),
        "b2": 0.1 * jax.random.uniform(ks[3], (cout,), jnp.float32, -1.0, 1.0),
        "g1": 1.0 + 0.1 * jax.random.uniform(ks[4], (cout,), jnp.float32, -1.0, 1.0),
        "be1": 0.1 * jax.random.uniform(ks[5], (cout,), jnp.float32, -1.0, 1.0),
        "g2": 1.0 + 0.1 * jax.random.uniform(ks[6], (cout,), jnp.float32, -1.0, 1.0),
        "be2": 0.1 * jax.random.uniform(ks[7], (cout,), jnp.float32, -1.0, 1.0),
    }
    if use_1x1conv:
        k3a, k3b = jax.random.split(jax.random.fold_in(key, 123))
        p["w3"] = conv_init(k3a, (cout, cin, 1, 1))
        p["b3"] = 0.1 * jax.random.uniform(k3b, (cout,), jnp.float32, -1.0, 1.0)
    return p


# ----------------------------------------------------------------------------
# Pure-JAX reference (matches the PyTorch train-mode forward) for correctness check
# ----------------------------------------------------------------------------
def residual_ref(x, p, stride, use_1x1conv):
    def conv(x, w, b, s, pad):
        y = jax.lax.conv_general_dilated(
            x, w, (s, s), [(pad, pad), (pad, pad)],
            dimension_numbers=("NCHW", "OIHW", "NCHW"))
        return y + b.reshape(1, -1, 1, 1)

    def bn(y, g, be):
        m = jnp.mean(y, axis=(0, 2, 3), keepdims=True)
        v = jnp.mean((y - m) ** 2, axis=(0, 2, 3), keepdims=True)
        return (y - m) * jax.lax.rsqrt(v + EPS) * g.reshape(1, -1, 1, 1) + be.reshape(1, -1, 1, 1)

    y = jax.nn.relu(bn(conv(x, p["w1"], p["b1"], stride, 1), p["g1"], p["be1"]))
    y = bn(conv(y, p["w2"], p["b2"], 1, 1), p["g2"], p["be2"])
    if use_1x1conv:
        x = conv(x, p["w3"], p["b3"], stride, 0)
    return jax.nn.relu(y + x)


# ----------------------------------------------------------------------------
if __name__ == "__main__":
    key = jax.random.PRNGKey(0)
    kx, kp1, kp2 = jax.random.split(key, 3)
    x = jax.random.normal(kx, (2, 4, 16, 16), jnp.float32)

    # Config A: identity skip (4 -> 4 channels, stride 1, no 1x1 conv)
    pA = init_residual_params(kp1, 4, 4, use_1x1conv=False)
    # Config B: projection skip (4 -> 8 channels, stride 2, 1x1 conv on skip path)
    pB = init_residual_params(kp2, 4, 8, use_1x1conv=True)

    refA = residual_ref(x, pA, 1, False)
    refB = residual_ref(x, pB, 2, True)

    # Tight check with f32 MXU operands / f32 stores (exact PyTorch-module semantics).
    outA32 = jax.block_until_ready(residual_forward(x, pA, stride=1, mxu_dtype=jnp.float32))
    outB32 = jax.block_until_ready(residual_forward(x, pB, stride=2, mxu_dtype=jnp.float32))
    errA32 = float(jnp.max(jnp.abs(outA32 - refA)))
    errB32 = float(jnp.max(jnp.abs(outB32 - refB)))

    # Default fast path: bf16 MXU operands + bf16 intermediate stores (f32 accumulation
    # and f32 BN statistics) -> looser bound.
    outA = jax.block_until_ready(residual_forward(x, pA, stride=1))
    outB = jax.block_until_ready(residual_forward(x, pB, stride=2))
    errA = float(jnp.max(jnp.abs(outA - refA)))
    errB = float(jnp.max(jnp.abs(outB - refB)))

    assert outA.shape == (2, 4, 16, 16) and outB.shape == (2, 8, 8, 8)
    assert errA32 < 2e-3 and errB32 < 2e-3, (errA32, errB32)
    assert errA < 1e-1 and errB < 1e-1, (errA, errB)
    print("KERNEL_OK")
</pallas_src>

<mosaic_0001>
module attributes {stable_mosaic.version = 11 : i64} {
  func.func @_conv3x3_bias_stats_kernel(%arg0: i32, %arg1: memref<1x1x342x4xf32, #tpu.memory_space<vmem>>, %arg2: memref<9x4x4xf32, #tpu.memory_space<vmem>>, %arg3: memref<1x4xf32, #tpu.memory_space<vmem>>, %arg4: memref<1x288x4xf32, #tpu.memory_space<vmem>>, %arg5: memref<1x1x4xf32, #tpu.memory_space<vmem>>, %arg6: memref<1x1x4xf32, #tpu.memory_space<vmem>>) attributes {dimension_semantics = [#tpu.dimension_semantics<parallel>], iteration_bounds = array<i64: 2>, scalar_prefetch = 0 : i64, scratch_operands = 0 : i64, tpu.core_type = #tpu.core_type<tc>, window_params = [{transform_indices = @transform_0, window_bounds = array<i64: 1, 1, 342, 4>}, {pipeline_mode = #tpu.pipeline_mode<synchronous>, transform_indices = @transform_1, window_bounds = array<i64: 9, 4, 4>}, {pipeline_mode = #tpu.pipeline_mode<synchronous>, transform_indices = @transform_2, window_bounds = array<i64: 1, 4>}, {transform_indices = @transform_3, window_bounds = array<i64: 1, 288, 4>}, {transform_indices = @transform_4, window_bounds = array<i64: 1, 1, 4>}, {transform_indices = @transform_5, window_bounds = array<i64: 1, 1, 4>}]} {
    %c0 = arith.constant 0 : index
    %c0_0 = arith.constant 0 : index
    %c0_1 = arith.constant 0 : index
    %c0_2 = arith.constant 0 : index
    %0 = vector.load %arg1[%c0, %c0_0, %c0_1, %c0_2] : memref<1x1x342x4xf32, #tpu.memory_space<vmem>>, vector<1x1x288x4xf32>
    %1 = vector.shape_cast %0 : vector<1x1x288x4xf32> to vector<288x4xf32>
    %c0_3 = arith.constant 0 : index
    %c0_4 = arith.constant 0 : index
    %c0_5 = arith.constant 0 : index
    %2 = vector.load %arg2[%c0_3, %c0_4, %c0_5] : memref<9x4x4xf32, #tpu.memory_space<vmem>>, vector<1x4x4xf32>
    %3 = vector.shape_cast %2 : vector<1x4x4xf32> to vector<4x4xf32>
    %cst = arith.constant dense<0.000000e+00> : vector<288x4xf32>
    %4 = tpu.matmul %1, %3, %cst {dimension_numbers = #tpu.dot_dimension_numbers<[1], [0], [0], [1], [0, 0, 1, 1], [], []>} : vector<288x4xf32>, vector<4x4xf32>, vector<288x4xf32> -> vector<288x4xf32>
    %c0_6 = arith.constant 0 : index
    %c0_7 = arith.constant 0 : index
    %c1 = arith.constant 1 : index
    %c0_8 = arith.constant 0 : index
    %5 = vector.load %arg1[%c0_6, %c0_7, %c1, %c0_8] : memref<1x1x342x4xf32, #tpu.memory_space<vmem>>, vector<1x1x288x4xf32>
    %6 = vector.shape_cast %5 : vector<1x1x288x4xf32> to vector<288x4xf32>
    %c1_9 = arith.constant 1 : index
    %c0_10 = arith.constant 0 : index
    %c0_11 = arith.constant 0 : index
    %7 = vector.load %arg2[%c1_9, %c0_10, %c0_11] : memref<9x4x4xf32, #tpu.memory_space<vmem>>, vector<1x4x4xf32>
    %8 = vector.shape_cast %7 : vector<1x4x4xf32> to vector<4x4xf32>
    %cst_12 = arith.constant dense<0.000000e+00> : vector<288x4xf32>
    %9 = tpu.matmul %6, %8, %cst_12 {dimension_numbers = #tpu.dot_dimension_numbers<[1], [0], [0], [1], [0, 0, 1, 1], [], []>} : vector<288x4xf32>, vector<4x4xf32>, vector<288x4xf32> -> vector<288x4xf32>
    %10 = arith.addf %4, %9 : vector<288x4xf32>
    %c0_13 = arith.constant 0 : index
    %c0_14 = arith.constant 0 : index
    %c2 = arith.constant 2 : index
    %c0_15 = arith.constant 0 : index
    %11 = vector.load %arg1[%c0_13, %c0_14, %c2, %c0_15] : memref<1x1x342x4xf32, #tpu.memory_space<vmem>>, vector<1x1x288x4xf32>
    %12 = vector.shape_cast %11 : vector<1x1x288x4xf32> to vector<288x4xf32>
    %c2_16 = arith.constant 2 : index
    %c0_17 = arith.constant 0 : index
    %c0_18 = arith.constant 0 : index
    %13 = vector.load %arg2[%c2_16, %c0_17, %c0_18] : memref<9x4x4xf32, #tpu.memory_space<vmem>>, vector<1x4x4xf32>
    %14 = vector.shape_cast %13 : vector<1x4x4xf32> to vector<4x4xf32>
    %cst_19 = arith.constant dense<0.000000e+00> : vector<288x4xf32>
    %15 = tpu.matmul %12, %14, %cst_19 {dimension_numbers = #tpu.dot_dimension_numbers<[1], [0], [0], [1], [0, 0, 1, 1], [], []>} : vector<288x4xf32>, vector<4x4xf32>, vector<288x4xf32> -> vector<288x4xf32>
    %16 = arith.addf %10, %15 : vector<288x4xf32>
    %c0_20 = arith.constant 0 : index
    %c0_21 = arith.constant 0 : index
    %c18 = arith.constant 18 : index
    %c0_22 = arith.constant 0 : index
    %17 = vector.load %arg1[%c0_20, %c0_21, %c18, %c0_22] : memref<1x1x342x4xf32, #tpu.memory_space<vmem>>, vector<1x1x288x4xf32>
    %18 = vector.shape_cast %17 : vector<1x1x288x4xf32> to vector<288x4xf32>
    %c3 = arith.constant 3 : index
    %c0_23 = arith.constant 0 : index
    %c0_24 = arith.constant 0 : index
    %19 = vector.load %arg2[%c3, %c0_23, %c0_24] : memref<9x4x4xf32, #tpu.memory_space<vmem>>, vector<1x4x4xf32>
    %20 = vector.shape_cast %19 : vector<1x4x4xf32> to vector<4x4xf32>
    %cst_25 = arith.constant dense<0.000000e+00> : vector<288x4xf32>
    %21 = tpu.matmul %18, %20, %cst_25 {dimension_numbers = #tpu.dot_dimension_numbers<[1], [0], [0], [1], [0, 0, 1, 1], [], []>} : vector<288x4xf32>, vector<4x4xf32>, vector<288x4xf32> -> vector<288x4xf32>
    %22 = arith.addf %16, %21 : vector<288x4xf32>
    %c0_26 = arith.constant 0 : index
    %c0_27 = arith.constant 0 : index
    %c19 = arith.constant 19 : index
    %c0_28 = arith.constant 0 : index
    %23 = vector.load %arg1[%c0_26, %c0_27, %c19, %c0_28] : memref<1x1x342x4xf32, #tpu.memory_space<vmem>>, vector<1x1x288x4xf32>
    %24 = vector.shape_cast %23 : vector<1x1x288x4xf32> to vector<288x4xf32>
    %c4 = arith.constant 4 : index
    %c0_29 = arith.constant 0 : index
    %c0_30 = arith.constant 0 : index
    %25 = vector.load %arg2[%c4, %c0_29, %c0_30] : memref<9x4x4xf32, #tpu.memory_space<vmem>>, vector<1x4x4xf32>
    %26 = vector.shape_cast %25 : vector<1x4x4xf32> to vector<4x4xf32>
    %cst_31 = arith.constant dense<0.000000e+00> : vector<288x4xf32>
    %27 = tpu.matmul %24, %26, %cst_31 {dimension_numbers = #tpu.dot_dimension_numbers<[1], [0], [0], [1], [0, 0, 1, 1], [], []>} : vector<288x4xf32>, vector<4x4xf32>, vector<288x4xf32> -> vector<288x4xf32>
    %28 = arith.addf %22, %27 : vector<288x4xf32>
    %c0_32 = arith.constant 0 : index
    %c0_33 = arith.constant 0 : index
    %c20 = arith.constant 20 : index
    %c0_34 = arith.constant 0 : index
    %29 = vector.load %arg1[%c0_32, %c0_33, %c20, %c0_34] : memref<1x1x342x4xf32, #tpu.memory_space<vmem>>, vector<1x1x288x4xf32>
    %30 = vector.shape_cast %29 : vector<1x1x288x4xf32> to vector<288x4xf32>
    %c5 = arith.constant 5 : index
    %c0_35 = arith.constant 0 : index
    %c0_36 = arith.constant 0 : index
    %31 = vector.load %arg2[%c5, %c0_35, %c0_36] : memref<9x4x4xf32, #tpu.memory_space<vmem>>, vector<1x4x4xf32>
    %32 = vector.shape_cast %31 : vector<1x4x4xf32> to vector<4x4xf32>
    %cst_37 = arith.constant dense<0.000000e+00> : vector<288x4xf32>
    %33 = tpu.matmul %30, %32, %cst_37 {dimension_numbers = #tpu.dot_dimension_numbers<[1], [0], [0], [1], [0, 0, 1, 1], [], []>} : vector<288x4xf32>, vector<4x4xf32>, vector<288x4xf32> -> vector<288x4xf32>
    %34 = arith.addf %28, %33 : vector<288x4xf32>
    %c0_38 = arith.constant 0 : index
    %c0_39 = arith.constant 0 : index
    %c36 = arith.constant 36 : index
    %c0_40 = arith.constant 0 : index
    %35 = vector.load %arg1[%c0_38, %c0_39, %c36, %c0_40] : memref<1x1x342x4xf32, #tpu.memory_space<vmem>>, vector<1x1x288x4xf32>
    %36 = vector.shape_cast %35 : vector<1x1x288x4xf32> to vector<288x4xf32>
    %c6 = arith.constant 6 : index
    %c0_41 = arith.constant 0 : index
    %c0_42 = arith.constant 0 : index
    %37 = vector.load %arg2[%c6, %c0_41, %c0_42] : memref<9x4x4xf32, #tpu.memory_space<vmem>>, vector<1x4x4xf32>
    %38 = vector.shape_cast %37 : vector<1x4x4xf32> to vector<4x4xf32>
    %cst_43 = arith.constant dense<0.000000e+00> : vector<288x4xf32>
    %39 = tpu.matmul %36, %38, %cst_43 {dimension_numbers = #tpu.dot_dimension_numbers<[1], [0], [0], [1], [0, 0, 1, 1], [], []>} : vector<288x4xf32>, vector<4x4xf32>, vector<288x4xf32> -> vector<288x4xf32>
    %40 = arith.addf %34, %39 : vector<288x4xf32>
    %c0_44 = arith.constant 0 : index
    %c0_45 = arith.constant 0 : index
    %c37 = arith.constant 37 : index
    %c0_46 = arith.constant 0 : index
    %41 = vector.load %arg1[%c0_44, %c0_45, %c37, %c0_46] : memref<1x1x342x4xf32, #tpu.memory_space<vmem>>, vector<1x1x288x4xf32>
    %42 = vector.shape_cast %41 : vector<1x1x288x4xf32> to vector<288x4xf32>
    %c7 = arith.constant 7 : index
    %c0_47 = arith.constant 0 : index
    %c0_48 = arith.constant 0 : index
    %43 = vector.load %arg2[%c7, %c0_47, %c0_48] : memref<9x4x4xf32, #tpu.memory_space<vmem>>, vector<1x4x4xf32>
    %44 = vector.shape_cast %43 : vector<1x4x4xf32> to vector<4x4xf32>
    %cst_49 = arith.constant dense<0.000000e+00> : vector<288x4xf32>
    %45 = tpu.matmul %42, %44, %cst_49 {dimension_numbers = #tpu.dot_dimension_numbers<[1], [0], [0], [1], [0, 0, 1, 1], [], []>} : vector<288x4xf32>, vector<4x4xf32>, vector<288x4xf32> -> vector<288x4xf32>
    %46 = arith.addf %40, %45 : vector<288x4xf32>
    %c0_50 = arith.constant 0 : index
    %c0_51 = arith.constant 0 : index
    %c38 = arith.constant 38 : index
    %c0_52 = arith.constant 0 : index
    %47 = vector.load %arg1[%c0_50, %c0_51, %c38, %c0_52] : memref<1x1x342x4xf32, #tpu.memory_space<vmem>>, vector<1x1x288x4xf32>
    %48 = vector.shape_cast %47 : vector<1x1x288x4xf32> to vector<288x4xf32>
    %c8 = arith.constant 8 : index
    %c0_53 = arith.constant 0 : index
    %c0_54 = arith.constant 0 : index
    %49 = vector.load %arg2[%c8, %c0_53, %c0_54] : memref<9x4x4xf32, #tpu.memory_space<vmem>>, vector<1x4x4xf32>
    %50 = vector.shape_cast %49 : vector<1x4x4xf32> to vector<4x4xf32>
    %cst_55 = arith.constant dense<0.000000e+00> : vector<288x4xf32>
    %51 = tpu.matmul %48, %50, %cst_55 {dimension_numbers = #tpu.dot_dimension_numbers<[1], [0], [0], [1], [0, 0, 1, 1], [], []>} : vector<288x4xf32>, vector<4x4xf32>, vector<288x4xf32> -> vector<288x4xf32>
    %52 = arith.addf %46, %51 : vector<288x4xf32>
    %c0_56 = arith.constant 0 : index
    %c0_57 = arith.constant 0 : index
    %53 = vector.load %arg3[%c0_56, %c0_57] : memref<1x4xf32, #tpu.memory_space<vmem>>, vector<1x4xf32>
    %54 = vector.broadcast %53 : vector<1x4xf32> to vector<288x4xf32>
    %55 = arith.addf %52, %54 : vector<288x4xf32>
    %c0_58 = arith.constant 0 : index
    %c0_59 = arith.constant 0 : index
    %c0_60 = arith.constant 0 : index
    %56 = vector.load %arg4[%c0_58, %c0_59, %c0_60] : memref<1x288x4xf32, #tpu.memory_space<vmem>>, vector<1x288x4xf32>
    %57 = vector.shape_cast %56 : vector<1x288x4xf32> to vector<288x4xf32>
    %58 = vector.shape_cast %55 : vector<288x4xf32> to vector<1x288x4xf32>
    tpu.vector_store %arg4[%c0_58, %c0_59, %c0_60], %58 {strides = array<i32>} : memref<1x288x4xf32, #tpu.memory_space<vmem>>, vector<1x288x4xf32>,
    %59 = tpu.iota {dimensions = array<i32: 0>} : vector<288x1xi32>
    %c18_i32 = arith.constant 18 : i32
    %c0_i32 = arith.constant 0 : i32
    %60 = arith.cmpi eq, %c18_i32, %c0_i32 : i32
    %c1_i32 = arith.constant 1 : i32
    %61 = arith.select %60, %c1_i32, %c18_i32 : i32
    %62 = vector.broadcast %61 : i32 to vector<288x1xi32>
    %63 = arith.remsi %59, %62 : vector<288x1xi32>
    %c0_i32_61 = arith.constant 0 : i32
    %64 = vector.broadcast %c0_i32_61 : i32 to vector<288x1xi32>
    %65 = arith.cmpi ne, %63, %64 : vector<288x1xi32>
    %c0_i32_62 = arith.constant 0 : i32
    %66 = vector.broadcast %c0_i32_62 : i32 to vector<288x1xi32>
    %67 = arith.cmpi slt, %63, %66 : vector<288x1xi32>
    %c0_i32_63 = arith.constant 0 : i32
    %68 = arith.cmpi slt, %61, %c0_i32_63 : i32
    %69 = vector.broadcast %68 : i1 to vector<288x1xi1>
    %70 = vector.broadcast %69 : vector<288x1xi1> to vector<288x1xi1>
    %71 = arith.xori %67, %70 : vector<288x1xi1>
    %72 = arith.andi %71, %65 : vector<288x1xi1>
    %73 = vector.broadcast %61 : i32 to vector<288x1xi32>
    %74 = arith.addi %63, %73 : vector<288x1xi32>
    %75 = arith.select %72, %74, %63 : vector<288x1xi1>, vector<288x1xi32>
    %c16_i32 = arith.constant 16 : i32
    %76 = vector.broadcast %c16_i32 : i32 to vector<288x1xi32>
    %77 = arith.cmpi slt, %75, %76 : vector<288x1xi32>
    %cst_64 = arith.constant 0.000000e+00 : f32
    %78 = vector.shape_cast %77 : vector<288x1xi1> to vector<288x1xi1>
    %79 = vector.broadcast %78 : vector<288x1xi1> to vector<288x4xi1>
    %80 = vector.broadcast %cst_64 : f32 to vector<288x4xf32>
    %81 = arith.select %79, %55, %80 : vector<288x4xi1>, vector<288x4xf32>
    %cst_65 = arith.constant dense<0.000000e+00> : vector<4xf32>
    %82 = vector.multi_reduction <add>, %81, %cst_65 [0] : vector<288x4xf32> to vector<4xf32>
    %83 = vector.shape_cast %82 : vector<4xf32> to vector<1x4xf32>
    %c0_66 = arith.constant 0 : index
    %c0_67 = arith.constant 0 : index
    %c0_68 = arith.constant 0 : index
    %84 = vector.load %arg5[%c0_66, %c0_67, %c0_68] : memref<1x1x4xf32, #tpu.memory_space<vmem>>, vector<1x1x4xf32>
    %85 = vector.shape_cast %84 : vector<1x1x4xf32> to vector<1x4xf32>
    %86 = vector.shape_cast %83 : vector<1x4xf32> to vector<1x1x4xf32>
    tpu.vector_store %arg5[%c0_66, %c0_67, %c0_68], %86 {strides = array<i32>} : memref<1x1x4xf32, #tpu.memory_space<vmem>>, vector<1x1x4xf32>,
    %87 = arith.mulf %81, %55 : vector<288x4xf32>
    %cst_69 = arith.constant dense<0.000000e+00> : vector<4xf32>
    %88 = vector.multi_reduction <add>, %87, %cst_69 [0] : vector<288x4xf32> to vector<4xf32>
    %89 = vector.shape_cast %88 : vector<4xf32> to vector<1x4xf32>
    %c0_70 = arith.constant 0 : index
    %c0_71 = arith.constant 0 : index
    %c0_72 = arith.constant 0 : index
    %90 = vector.load %arg6[%c0_70, %c0_71, %c0_72] : memref<1x1x4xf32, #tpu.memory_space<vmem>>, vector<1x1x4xf32>
    %91 = vector.shape_cast %90 : vector<1x1x4xf32> to vector<1x4xf32>
    %92 = vector.shape_cast %89 : vector<1x4xf32> to vector<1x1x4xf32>
    tpu.vector_store %arg6[%c0_70, %c0_71, %c0_72], %92 {strides = array<i32>} : memref<1x1x4xf32, #tpu.memory_space<vmem>>, vector<1x1x4xf32>,
    return
  }
  func.func @transform_0(%arg0: i32) -> (i32, i32, i32, i32) {
    %c0_i32 = arith.constant 0 : i32
    %c0_i32_0 = arith.constant 0 : i32
    %c0_i32_1 = arith.constant 0 : i32
    %c0_i32_2 = arith.constant 0 : i32
    return %arg0, %c0_i32, %c0_i32_0, %c0_i32_1 : i32, i32, i32, i32
  }
  func.func @transform_1(%arg0: i32) -> (i32, i32, i32) {
    %c0_i32 = arith.constant 0 : i32
    %c0_i32_0 = arith.constant 0 : i32
    %c0_i32_1 = arith.constant 0 : i32
    %c0_i32_2 = arith.constant 0 : i32
    return %c0_i32, %c0_i32_0, %c0_i32_1 : i32, i32, i32
  }
  func.func @transform_2(%arg0: i32) -> (i32, i32) {
    %c0_i32 = arith.constant 0 : i32
    %c0_i32_0 = arith.constant 0 : i32
    %c0_i32_1 = arith.constant 0 : i32
    return %c0_i32, %c0_i32_0 : i32, i32
  }
  func.func @transform_3(%arg0: i32) -> (i32, i32, i32) {
    %c0_i32 = arith.constant 0 : i32
    %c0_i32_0 = arith.constant 0 : i32
    %c0_i32_1 = arith.constant 0 : i32
    return %arg0, %c0_i32, %c0_i32_0 : i32, i32, i32
  }
  func.func @transform_4(%arg0: i32) -> (i32, i32, i32) {
    %c0_i32 = arith.constant 0 : i32
    %c0_i32_0 = arith.constant 0 : i32
    %c0_i32_1 = arith.constant 0 : i32
    return %arg0, %c0_i32, %c0_i32_0 : i32, i32, i32
  }
  func.func @transform_5(%arg0: i32) -> (i32, i32, i32) {
    %c0_i32 = arith.constant 0 : i32
    %c0_i32_0 = arith.constant 0 : i32
    %c0_i32_1 = arith.constant 0 : i32
    return %arg0, %c0_i32, %c0_i32_0 : i32, i32, i32
  }
}

module attributes {stable_mosaic.version = 11 : i64} {
  func.func @_scale_shift_relu_kernel(%arg0: i32, %arg1: memref<3x768xf32, #tpu.memory_space<vmem>>, %arg2: memref<1x768xf32, #tpu.memory_space<vmem>>, %arg3: memref<1x768xf32, #tpu.memory_space<vmem>>, %arg4: memref<3x768xf32, #tpu.memory_space<vmem>>) attributes {dimension_semantics = [#tpu.dimension_semantics<parallel>], iteration_bounds = array<i64: 1>, scalar_prefetch = 0 : i64, scratch_operands = 0 : i64, tpu.core_type = #tpu.core_type<tc>, window_params = [{transform_indices = @transform_0, window_bounds = array<i64: 3, 768>}, {pipeline_mode = #tpu.pipeline_mode<synchronous>, transform_indices = @transform_1, window_bounds = array<i64: 1, 768>}, {pipeline_mode = #tpu.pipeline_mode<synchronous>, transform_indices = @transform_2, window_bounds = array<i64: 1, 768>}, {transform_indices = @transform_3, window_bounds = array<i64: 3, 768>}]} {
    %c0 = arith.constant 0 : index
    %c0_0 = arith.constant 0 : index
    %0 = vector.load %arg1[%c0, %c0_0] : memref<3x768xf32, #tpu.memory_space<vmem>>, vector<3x768xf32>
    %c0_1 = arith.constant 0 : index
    %c0_2 = arith.constant 0 : index
    %1 = vector.load %arg2[%c0_1, %c0_2] : memref<1x768xf32, #tpu.memory_space<vmem>>, vector<1x768xf32>
    %2 = vector.broadcast %1 : vector<1x768xf32> to vector<3x768xf32>
    %3 = arith.mulf %0, %2 : vector<3x768xf32>
    %c0_3 = arith.constant 0 : index
    %c0_4 = arith.constant 0 : index
    %4 = vector.load %arg3[%c0_3, %c0_4] : memref<1x768xf32, #tpu.memory_space<vmem>>, vector<1x768xf32>
    %5 = vector.broadcast %4 : vector<1x768xf32> to vector<3x768xf32>
    %6 = arith.addf %3, %5 : vector<3x768xf32>
    %cst = arith.constant 0.000000e+00 : f32
    %7 = vector.broadcast %cst : f32 to vector<3x768xf32>
    %8 = arith.maximumf %6, %7 : vector<3x768xf32>
    %c0_5 = arith.constant 0 : index
    %c0_6 = arith.constant 0 : index
    %9 = vector.load %arg4[%c0_5, %c0_6] : memref<3x768xf32, #tpu.memory_space<vmem>>, vector<3x768xf32>
    tpu.vector_store %arg4[%c0_5, %c0_6], %8 {strides = array<i32>} : memref<3x768xf32, #tpu.memory_space<vmem>>, vector<3x768xf32>,
    return
  }
  func.func @transform_0(%arg0: i32) -> (i32, i32) {
    %c0_i32 = arith.constant 0 : i32
    %c0_i32_0 = arith.constant 0 : i32
    return %arg0, %c0_i32 : i32, i32
  }
  func.func @transform_1(%arg0: i32) -> (i32, i32) {
    %c0_i32 = arith.constant 0 : i32
    %c0_i32_0 = arith.constant 0 : i32
    %c0_i32_1 = arith.constant 0 : i32
    return %c0_i32, %c0_i32_0 : i32, i32
  }
  func.func @transform_2(%arg0: i32) -> (i32, i32) {
    %c0_i32 = arith.constant 0 : i32
    %c0_i32_0 = arith.constant 0 : i32
    %c0_i32_1 = arith.constant 0 : i32
    return %c0_i32, %c0_i32_0 : i32, i32
  }
  func.func @transform_3(%arg0: i32) -> (i32, i32) {
    %c0_i32 = arith.constant 0 : i32
    %c0_i32_0 = arith.constant 0 : i32
    return %arg0, %c0_i32 : i32, i32
  }
}

module attributes {stable_mosaic.version = 11 : i64} {
  func.func @_scale_shift_add_relu_kernel(%arg0: i32, %arg1: memref<2x1024xf32, #tpu.memory_space<vmem>>, %arg2: memref<2x1024xf32, #tpu.memory_space<vmem>>, %arg3: memref<1x1024xf32, #tpu.memory_space<vmem>>, %arg4: memref<1x1024xf32, #tpu.memory_space<vmem>>, %arg5: memref<2x1024xf32, #tpu.memory_space<vmem>>) attributes {dimension_semantics = [#tpu.dimension_semantics<parallel>], iteration_bounds = array<i64: 1>, scalar_prefetch = 0 : i64, scratch_operands = 0 : i64, tpu.core_type = #tpu.core_type<tc>, window_params = [{transform_indices = @transform_0, window_bounds = array<i64: 2, 1024>}, {transform_indices = @transform_1, window_bounds = array<i64: 2, 1024>}, {pipeline_mode = #tpu.pipeline_mode<synchronous>, transform_indices = @transform_2, window_bounds = array<i64: 1, 1024>}, {pipeline_mode = #tpu.pipeline_mode<synchronous>, transform_indices = @transform_3, window_bounds = array<i64: 1, 1024>}, {transform_indices = @transform_4, window_bounds = array<i64: 2, 1024>}]} {
    %c0 = arith.constant 0 : index
    %c0_0 = arith.constant 0 : index
    %0 = vector.load %arg1[%c0, %c0_0] : memref<2x1024xf32, #tpu.memory_space<vmem>>, vector<2x1024xf32>
    %c0_1 = arith.constant 0 : index
    %c0_2 = arith.constant 0 : index
    %1 = vector.load %arg3[%c0_1, %c0_2] : memref<1x1024xf32, #tpu.memory_space<vmem>>, vector<1x1024xf32>
    %2 = vector.broadcast %1 : vector<1x1024xf32> to vector<2x1024xf32>
    %3 = arith.mulf %0, %2 : vector<2x1024xf32>
    %c0_3 = arith.constant 0 : index
    %c0_4 = arith.constant 0 : index
    %4 = vector.load %arg4[%c0_3, %c0_4] : memref<1x1024xf32, #tpu.memory_space<vmem>>, vector<1x1024xf32>
    %5 = vector.broadcast %4 : vector<1x1024xf32> to vector<2x1024xf32>
    %6 = arith.addf %3, %5 : vector<2x1024xf32>
    %c0_5 = arith.constant 0 : index
    %c0_6 = arith.constant 0 : index
    %7 = vector.load %arg2[%c0_5, %c0_6] : memref<2x1024xf32, #tpu.memory_space<vmem>>, vector<2x1024xf32>
    %8 = arith.addf %6, %7 : vector<2x1024xf32>
    %cst = arith.constant 0.000000e+00 : f32
    %9 = vector.broadcast %cst : f32 to vector<2x1024xf32>
    %10 = arith.maximumf %8, %9 : vector<2x1024xf32>
    %c0_7 = arith.constant 0 : index
    %c0_8 = arith.constant 0 : index
    %11 = vector.load %arg5[%c0_7, %c0_8] : memref<2x1024xf32, #tpu.memory_space<vmem>>, vector<2x1024xf32>
    tpu.vector_store %arg5[%c0_7, %c0_8], %10 {strides = array<i32>} : memref<2x1024xf32, #tpu.memory_space<vmem>>, vector<2x1024xf32>,
    return
  }
  func.func @transform_0(%arg0: i32) -> (i32, i32) {
    %c0_i32 = arith.constant 0 : i32
    %c0_i32_0 = arith.constant 0 : i32
    return %arg0, %c0_i32 : i32, i32
  }
  func.func @transform_1(%arg0: i32) -> (i32, i32) {
    %c0_i32 = arith.constant 0 : i32
    %c0_i32_0 = arith.constant 0 : i32
    return %arg0, %c0_i32 : i32, i32
  }
  func.func @transform_2(%arg0: i32) -> (i32, i32) {
    %c0_i32 = arith.constant 0 : i32
    %c0_i32_0 = arith.constant 0 : i32
    %c0_i32_1 = arith.constant 0 : i32
    return %c0_i32, %c0_i32_0 : i32, i32
  }
  func.func @transform_3(%arg0: i32) -> (i32, i32) {
    %c0_i32 = arith.constant 0 : i32
    %c0_i32_0 = arith.constant 0 : i32
    %c0_i32_1 = arith.constant 0 : i32
    return %c0_i32, %c0_i32_0 : i32, i32
  }
  func.func @transform_4(%arg0: i32) -> (i32, i32) {
    %c0_i32 = arith.constant 0 : i32
    %c0_i32_0 = arith.constant 0 : i32
    return %arg0, %c0_i32 : i32, i32
  }
}

</mosaic_0001>

<llo_original>
// kernel: residual_forward.5
$region0: #{residual_forward.5}
  #allocation0 [shape = 'u32[]', space=smem, size = 0x4, offset = 0x4, fixed_abs, tag = 'smem constant byte address 0x4 - core index']
  #allocation1 [shape = 'u32[144,128]{1,0:T(1,128)}', space=vmem, size = 0x12000, scoped, tag = 'internal scratch']
  %s0 = inlined_call_operand.vmem [shape: f32[3,768], index: 0, kind: input, shape index: {}]
  %s1 = inlined_call_operand.vmem [shape: f32[1,768], index: 1, kind: input, shape index: {}]
  %s2 = inlined_call_operand.vmem [shape: f32[1,768], index: 2, kind: input, shape index: {}]
  %s3 = inlined_call_operand.vmem [shape: f32[3,768], index: 3, kind: output, shape index: {}]
  %s4 = sld [smem:[#allocation0]]
  $region22: #{residual_forward.5} parent=0
    _
  %s6 = ssub.s32 1, %s4
  %s7 = scalar_select 0, %s6, %s4
  // Predicated region
  $region2: #{residual_forward.5} parent=0 // pred_check
    _
  $region3: #{residual_forward.5} parent=0 // pred_check_branch
    %9 = sbr.rel (0) target = $region5
  $region4: #{residual_forward.5} parent=0 // pred_region
    _
  $region5: #{residual_forward.5} parent=0 // pred_fallthru
    _
  // Predicated region
  $region6: #{residual_forward.5} parent=0 // pred_check
    _
  $region7: #{residual_forward.5} parent=0 // pred_check_branch
    %11 = sbr.rel (0) target = $region9
  $region8: #{residual_forward.5} parent=0 // pred_region
    _
  $region9: #{residual_forward.5} parent=0 // pred_fallthru
    _
  // Predicated region
  $region10: #{residual_forward.5} parent=0 // pred_check
    _
  $region11: #{residual_forward.5} parent=0 // pred_check_branch
    %13 = sbr.rel (0) target = $region13
  $region12: #{residual_forward.5} parent=0 // pred_region
    _
  $region13: #{residual_forward.5} parent=0 // pred_fallthru
    _
  %v14 = vld [vmem:[%s0] sm:$0x77]
  %v15 = vld [vmem:[%s0 + $0x8] sm:$0x77]
  %v16 = vld [vmem:[%s0 + $0x10] sm:$0x77]
  %v17 = vld [vmem:[%s1] sm:$0x3f]
  %v19 = vlaneseq
  %v20 = vshrl.u32 %v19, 7
  %v21 = vsub.s32 0, %v20
  %v22 = vrot.slane %v17, %v21
  %v23 = vlaneseq
  %v24 = vshrl.u32 %v23, 7
  %v25 = vsub.s32 1, %v24
  %v26 = vrot.slane %v17, %v25
  %v27 = vlaneseq
  %v28 = vshrl.u32 %v27, 7
  %v29 = vsub.s32 2, %v28
  %v30 = vrot.slane %v17, %v29
  %v31 = vlaneseq
  %v32 = vshrl.u32 %v31, 7
  %v33 = vsub.s32 3, %v32
  %v34 = vrot.slane %v17, %v33
  %v35 = vlaneseq
  %v36 = vshrl.u32 %v35, 7
  %v37 = vsub.s32 4, %v36
  %v38 = vrot.slane %v17, %v37
  %v39 = vlaneseq
  %v40 = vshrl.u32 %v39, 7
  %v41 = vsub.s32 5, %v40
  %v42 = vrot.slane %v17, %v41
  %v43 = vcombine.low %v22, %v26
  %v44 = vcombine.low %v30, %v34
  %v45 = vcombine.low %v38, %v42
  %v49 = vmul.f32 %v14, %v43
  %v50 = vmul.f32 %v15, %v44
  %v51 = vmul.f32 %v16, %v45
  %v52 = vld [vmem:[%s2] sm:$0x3f]
  %v54 = vlaneseq
  %v55 = vshrl.u32 %v54, 7
  %v56 = vsub.s32 0, %v55
  %v57 = vrot.slane %v52, %v56
  %v58 = vlaneseq
  %v59 = vshrl.u32 %v58, 7
  %v60 = vsub.s32 1, %v59
  %v61 = vrot.slane %v52, %v60
  %v62 = vlaneseq
  %v63 = vshrl.u32 %v62, 7
  %v64 = vsub.s32 2, %v63
  %v65 = vrot.slane %v52, %v64
  %v66 = vlaneseq
  %v67 = vshrl.u32 %v66, 7
  %v68 = vsub.s32 3, %v67
  %v69 = vrot.slane %v52, %v68
  %v70 = vlaneseq
  %v71 = vshrl.u32 %v70, 7
  %v72 = vsub.s32 4, %v71
  %v73 = vrot.slane %v52, %v72
  %v74 = vlaneseq
  %v75 = vshrl.u32 %v74, 7
  %v76 = vsub.s32 5, %v75
  %v77 = vrot.slane %v52, %v76
  %v78 = vcombine.low %v57, %v61
  %v79 = vcombine.low %v65, %v69
  %v80 = vcombine.low %v73, %v77
  %v84 = vadd.f32 %v49, %v78
  %v85 = vadd.f32 %v50, %v79
  %v86 = vadd.f32 %v51, %v80
  %v87 = vmax.f32 %v84, 0.0
  %v88 = vmax.f32 %v85, 0.0
  %v89 = vmax.f32 %v86, 0.0
  %90 = vst [vmem:[%s3] sm:$0x77] %v87
  %91 = vst [vmem:[%s3 + $0x8] sm:$0x77] %v88
  %92 = vst [vmem:[%s3 + $0x10] sm:$0x77] %v89
  // Predicated region
  $region14: #{residual_forward.5} parent=0 // pred_check
    _
  $region15: #{residual_forward.5} parent=0 // pred_check_branch
    %94 = sbr.rel (0) target = $region17
  $region16: #{residual_forward.5} parent=0 // pred_region
    _
  $region17: #{residual_forward.5} parent=0 // pred_fallthru
    _
  // Predicated region
  $region18: #{residual_forward.5} parent=0 // pred_check
    _
  $region19: #{residual_forward.5} parent=0 // pred_check_branch
    %96 = sbr.rel (0) target = $region21
  $region20: #{residual_forward.5} parent=0 // pred_region
    _
  $region21: #{residual_forward.5} parent=0 // pred_fallthru
    _

// kernel: residual_forward.4
$region0: #{residual_forward.4}
  #allocation0 [shape = 'u32[]', space=smem, size = 0x4, offset = 0x4, fixed_abs, tag = 'smem constant byte address 0x4 - core index']
  #allocation1 [shape = 'u32[144,128]{1,0:T(1,128)}', space=vmem, size = 0x12000, scoped, tag = 'internal scratch']
  %s0 = inlined_call_operand.vmem [shape: f32[2,1,342,4], index: 0, kind: input, shape index: {}]
  %s1 = inlined_call_operand.vmem [shape: f32[9,4,4], index: 1, kind: input, shape index: {}]
  %s2 = inlined_call_operand.vmem [shape: f32[1,4], index: 2, kind: input, shape index: {}]
  %s3 = inlined_call_operand.vmem [shape: f32[2,288,4], index: 3, kind: output, shape index: {0}]
  %s4 = inlined_call_operand.vmem [shape: f32[2,1,4], index: 4, kind: output, shape index: {1}]
  %s5 = inlined_call_operand.vmem [shape: f32[2,1,4], index: 5, kind: output, shape index: {2}]
  %6 = xla_tuple %s3, %s4, %s5
  %s7 = sld [smem:[#allocation0]]
  $region61: #{residual_forward.4} parent=0
    _
  %s9 = ssub.s32 1, %s7
  %s10 = scalar_select 0, %s9, %s7
  loop: start=0, step=1, limit=4
  $region2: #{residual_forward.4} parent=0 // loop_pre_header
    _
  $region3: #{residual_forward.4} parent=0 // loop_header
    %s12 = sphi 0, %s16
    %p13 = scmp.ge.s32.totalorder %s12, 4
    %s22 = sphi 0, %s24
    %s25 = sphi 0, %s22
    %s26 = sphi 0, %s25
    %s42 = sphi 0, %s26
    %s46 = sphi 0, %s46
    %s48 = sphi 0, %s46
    %s49 = sphi 0, %s48
    %s63 = sphi 0, %s49
    %s67 = sphi 0, %s67
    %s69 = sphi 0, %s67
    %s70 = sphi 0, %s69
    %s84 = sphi 0, %s70
    %s90 = sphi 0, %s92
    %s93 = sphi 0, %s90
    %s94 = sphi 0, %s93
    %s110 = sphi 0, %s94
    %s116 = sphi 0, %s118
    %s119 = sphi 0, %s116
    %s120 = sphi 0, %s119
    %s136 = sphi 0, %s120
    %s142 = sphi 0, %s144
    %s145 = sphi 0, %s142
    %s146 = sphi 0, %s145
    %s162 = sphi 0, %s146
  $region4: #{residual_forward.4} parent=0 // loop_header_branch
    %15 = sbr.rel (%p13) target = $region8
  $region5: #{residual_forward.4} parent=0 // loop_body
    %s17 = ssub.s32 %s12, 1
    %s18 = ssub.s32 %s12, 2
    %s19 = sadd.s32 %s12, 1
    %s20 = ssub.s32 %s12, %s19
    %p21 = scmp.eq.s32.totalorder %s20, 0
    %s23 = sadd.s32 %s22, 1
    %s24 = scalar_select %p21, %s22, %s23
    %p27 = pneg %p21
    %p28 = scmp.eq.s32.totalorder %s12, 1
    %p29 = por %p27, %p28
    %p30 = scmp.ne.s32.totalorder %s22, %s25
    %p31 = scmp.eq.s32.totalorder %s12, 0
    %p32 = por %p30, %p31
    %p33 = scmp.ne.s32.totalorder %s22, %s25
    %p34 = scmp.eq.s32.totalorder %s17, 1
    %p35 = por %p33, %p34
    %p36 = scmp.ne.s32.totalorder %s25, %s26
    %p37 = scmp.eq.s32.totalorder %s17, 0
    %p38 = por %p36, %p37
    %p39 = scmp.ne.s32.totalorder %s25, %s26
    %p40 = scmp.eq.s32.totalorder %s18, 1
    %p41 = por %p39, %p40
    %p43 = scmp.ne.s32.totalorder %s26, %s42
    %p44 = scmp.eq.s32.totalorder %s18, 0
    %p45 = por %p43, %p44
    %s47 = sadd.s32 %s46, 1
    %p50 = scmp.eq.s32.totalorder %s12, 1
    %p51 = scmp.ne.s32.totalorder %s46, %s48
    %p52 = scmp.eq.s32.totalorder %s12, 0
    %p53 = por %p51, %p52
    %p54 = scmp.ne.s32.totalorder %s46, %s48
    %p55 = scmp.eq.s32.totalorder %s17, 1
    %p56 = por %p54, %p55
    %p57 = scmp.ne.s32.totalorder %s48, %s49
    %p58 = scmp.eq.s32.totalorder %s17, 0
    %p59 = por %p57, %p58
    %p60 = scmp.ne.s32.totalorder %s48, %s49
    %p61 = scmp.eq.s32.totalorder %s18, 1
    %p62 = por %p60, %p61
    %p64 = scmp.ne.s32.totalorder %s49, %s63
    %p65 = scmp.eq.s32.totalorder %s18, 0
    %p66 = por %p64, %p65
    %s68 = sadd.s32 %s67, 1
    %p71 = scmp.eq.s32.totalorder %s12, 1
    %p72 = scmp.ne.s32.totalorder %s67, %s69
    %p73 = scmp.eq.s32.totalorder %s12, 0
    %p74 = por %p72, %p73
    %p75 = scmp.ne.s32.totalorder %s67, %s69
    %p76 = scmp.eq.s32.totalorder %s17, 1
    %p77 = por %p75, %p76
    %p78 = scmp.ne.s32.totalorder %s69, %s70
    %p79 = scmp.eq.s32.totalorder %s17, 0
    %p80 = por %p78, %p79
    %p81 = scmp.ne.s32.totalorder %s69, %s70
    %p82 = scmp.eq.s32.totalorder %s18, 1
    %p83 = por %p81, %p82
    %p85 = scmp.ne.s32.totalorder %s70, %s84
    %p86 = scmp.eq.s32.totalorder %s18, 0
    %p87 = por %p85, %p86
    %s88 = ssub.s32 %s12, %s19
    %p89 = scmp.eq.s32.totalorder %s88, 0
    %s91 = sadd.s32 %s90, 1
    %s92 = scalar_select %p89, %s90, %s91
    %p95 = pneg %p89
    %p96 = scmp.eq.s32.totalorder %s12, 1
    %p97 = por %p95, %p96
    %p98 = scmp.ne.s32.totalorder %s90, %s93
    %p99 = scmp.eq.s32.totalorder %s12, 0
    %p100 = por %p98, %p99
    %p101 = scmp.ne.s32.totalorder %s90, %s93
    %p102 = scmp.eq.s32.totalorder %s17, 1
    %p103 = por %p101, %p102
    %p104 = scmp.ne.s32.totalorder %s93, %s94
    %p105 = scmp.eq.s32.totalorder %s17, 0
    %p106 = por %p104, %p105
    %p107 = scmp.ne.s32.totalorder %s93, %s94
    %p108 = scmp.eq.s32.totalorder %s18, 1
    %p109 = por %p107, %p108
    %p111 = scmp.ne.s32.totalorder %s94, %s110
    %p112 = scmp.eq.s32.totalorder %s18, 0
    %p113 = por %p111, %p112
    %s114 = ssub.s32 %s12, %s19
    %p115 = scmp.eq.s32.totalorder %s114, 0
    %s117 = sadd.s32 %s116, 1
    %s118 = scalar_select %p115, %s116, %s117
    %p121 = pneg %p115
    %p122 = scmp.eq.s32.totalorder %s12, 1
    %p123 = por %p121, %p122
    %p124 = scmp.ne.s32.totalorder %s116, %s119
    %p125 = scmp.eq.s32.totalorder %s12, 0
    %p126 = por %p124, %p125
    %p127 = scmp.ne.s32.totalorder %s116, %s119
    %p128 = scmp.eq.s32.totalorder %s17, 1
    %p129 = por %p127, %p128
    %p130 = scmp.ne.s32.totalorder %s119, %s120
    %p131 = scmp.eq.s32.totalorder %s17, 0
    %p132 = por %p130, %p131
    %p133 = scmp.ne.s32.totalorder %s119, %s120
    %p134 = scmp.eq.s32.totalorder %s18, 1
    %p135 = por %p133, %p134
    %p137 = scmp.ne.s32.totalorder %s120, %s136
    %p138 = scmp.eq.s32.totalorder %s18, 0
    %p139 = por %p137, %p138
    %s140 = ssub.s32 %s12, %s19
    %p141 = scmp.eq.s32.totalorder %s140, 0
    %s143 = sadd.s32 %s142, 1
    %s144 = scalar_select %p141, %s142, %s143
    %p147 = pneg %p141
    %p148 = scmp.eq.s32.totalorder %s12, 1
    %p149 = por %p147, %p148
    %p150 = scmp.ne.s32.totalorder %s142, %s145
    %p151 = scmp.eq.s32.totalorder %s12, 0
    %p152 = por %p150, %p151
    %p153 = scmp.ne.s32.totalorder %s142, %s145
    %p154 = scmp.eq.s32.totalorder %s17, 1
    %p155 = por %p153, %p154
    %p156 = scmp.ne.s32.totalorder %s145, %s146
    %p157 = scmp.eq.s32.totalorder %s17, 0
    %p158 = por %p156, %p157
    %p159 = scmp.ne.s32.totalorder %s145, %s146
    %p160 = scmp.eq.s32.totalorder %s18, 1
    %p161 = por %p159, %p160
    %p163 = scmp.ne.s32.totalorder %s146, %s162
    %p164 = scmp.eq.s32.totalorder %s18, 0
    %p165 = por %p163, %p164
    %p166 = scmp.le.s32.totalorder 1, %s12
    %p167 = scmp.lt.s32.totalorder %s12, 3
    %p168 = pnand %p166, %p167
    %p169 = pneg %p168
    // Predicated region
    $region9: #{residual_forward.4} parent=5 // pred_check
      _
    $region10: #{residual_forward.4} parent=5 // pred_check_branch
      %171 = sbr.rel (%p168) target = $region12
    $region11: #{residual_forward.4} parent=5 // pred_region
      %s172 = ssub.s32 %s12, 1
      // Predicated region
      $region13: #{residual_forward.4} parent=11 // pred_check
        %p173 = pneg %p59
      $region14: #{residual_forward.4} parent=11 // pred_check_branch
        %175 = sbr.rel (%p173) target = $region16
      $region15: #{residual_forward.4} parent=11 // pred_region
        _
      $region16: #{residual_forward.4} parent=11 // pred_fallthru
        _
      // Predicated region
      $region17: #{residual_forward.4} parent=11 // pred_check
        %p176 = pneg %p80
      $region18: #{residual_forward.4} parent=11 // pred_check_branch
        %178 = sbr.rel (%p176) target = $region20
      $region19: #{residual_forward.4} parent=11 // pred_region
        _
      $region20: #{residual_forward.4} parent=11 // pred_fallthru
        _
    $region12: #{residual_forward.4} parent=5 // pred_fallthru
      _
    %p179 = scmp.lt.s32.totalorder %s12, 2
    // Predicated region
    $region21: #{residual_forward.4} parent=5 // pred_check
      %p180 = pneg %p179
    $region22: #{residual_forward.4} parent=5 // pred_check_branch
      %182 = sbr.rel (%p180) target = $region24
    $region23: #{residual_forward.4} parent=5 // pred_region
      // Predicated region
      $region25: #{residual_forward.4} parent=23 // pred_check
        %p183 = pneg %p32
      $region26: #{residual_forward.4} parent=23 // pred_check_branch
        %185 = sbr.rel (%p183) target = $region28
      $region27: #{residual_forward.4} parent=23 // pred_region
        %p186 = scmp.lt.s32.totalorder %s12, 1
        %s187 = scalar_select %p186, %s12, 1
        %s188 = smul.addr %s187, 43
        %s189 = smul.addr %s188, 8
        %s190 = scalar_lea.vmem %s0, %s189
      $region28: #{residual_forward.4} parent=23 // pred_fallthru
        _
    $region24: #{residual_forward.4} parent=5 // pred_fallthru
      _
    %p191 = scmp.le.s32.totalorder 1, %s12
    %p192 = scmp.lt.s32.totalorder %s12, 3
    %p193 = pnand %p191, %p192
    %p194 = pneg %p193
    // Predicated region
    $region29: #{residual_forward.4} parent=5 // pred_check
      _
    $region30: #{residual_forward.4} parent=5 // pred_check_branch
      %196 = sbr.rel (%p193) target = $region32
    $region31: #{residual_forward.4} parent=5 // pred_region
      %s197 = ssub.s32 %s12, 1
      %p198 = scmp.lt.s32.totalorder %s17, 1
      %s199 = scalar_select %p198, %s17, 1
      %s200 = smul.addr %s199, 43
      %s201 = smul.addr %s200, 8
      %s202 = scalar_lea.vmem %s0, %s201
      %p203 = pneg %p38
      %p204 = pneg %p35
      %p205 = pneg %p59
      %p206 = pneg %p56
      %p207 = pneg %p80
      %p208 = pneg %p77
      %p209 = pneg %p106
      %p210 = pneg %p103
      %p211 = scmp.lt.s32.totalorder %s17, 1
      %s212 = scalar_select %p211, %s17, 1
      %s213 = smul.addr %s212, 36
      %s214 = smul.addr %s213, 8
      %s215 = scalar_lea.vmem %s3, %s214
      %p216 = pneg %p132
      %p217 = pneg %p129
      %p218 = scmp.lt.s32.totalorder %s17, 1
      %s219 = scalar_select %p218, %s17, 1
      %s220 = scalar_lea.vmem %s4, %s219
      %p221 = pneg %p158
      %p222 = pneg %p155
      %p223 = scmp.lt.s32.totalorder %s17, 1
      %s224 = scalar_select %p223, %s17, 1
      %s225 = scalar_lea.vmem %s5, %s224
      %p226 = scmp.lt.s32.totalorder %s17, 1
      %s227 = scalar_select %p226, %s17, 1
      %s228 = smul.addr %s227, 43
      %s229 = smul.addr %s228, 8
      %s230 = scalar_lea.vmem %s0, %s229
      %p231 = scmp.lt.s32.totalorder %s17, 1
      %s232 = scalar_select %p231, %s17, 1
      %s233 = smul.addr %s232, 36
      %s234 = smul.addr %s233, 8
      %s235 = scalar_lea.vmem %s3, %s234
      %p236 = scmp.lt.s32.totalorder %s17, 1
      %s237 = scalar_select %p236, %s17, 1
      %s238 = scalar_lea.vmem %s4, %s237
      %p239 = scmp.lt.s32.totalorder %s17, 1
      %s240 = scalar_select %p239, %s17, 1
      %s241 = scalar_lea.vmem %s5, %s240
      %v242 = vld [vmem:[%s230] sm:$0xff]
      %v243 = vld [vmem:[%s230 + $0x8] sm:$0xff]
      %v244 = vld [vmem:[%s230 + $0x10] sm:$0xff]
      %v245 = vld [vmem:[%s230 + $0x18] sm:$0xff]
      %v246 = vld [vmem:[%s230 + $0x20] sm:$0xff]
      %v247 = vld [vmem:[%s230 + $0x28] sm:$0xff]
      %v248 = vld [vmem:[%s230 + $0x30] sm:$0xff]
      %v249 = vld [vmem:[%s230 + $0x38] sm:$0xff]
      %v250 = vld [vmem:[%s230 + $0x40] sm:$0xff]
      %v251 = vld [vmem:[%s230 + $0x48] sm:$0xff]
      %v252 = vld [vmem:[%s230 + $0x50] sm:$0xff]
      %v253 = vld [vmem:[%s230 + $0x58] sm:$0xff]
      %v254 = vld [vmem:[%s230 + $0x60] sm:$0xff]
      %v255 = vld [vmem:[%s230 + $0x68] sm:$0xff]
      %v256 = vld [vmem:[%s230 + $0x70] sm:$0xff]
      %v257 = vld [vmem:[%s230 + $0x78] sm:$0xff]
      %v258 = vld [vmem:[%s230 + $0x80] sm:$0xff]
      %v259 = vld [vmem:[%s230 + $0x88] sm:$0xff]
      %v260 = vld [vmem:[%s230 + $0x90] sm:$0xff]
      %v261 = vld [vmem:[%s230 + $0x98] sm:$0xff]
      %v262 = vld [vmem:[%s230 + $0xa0] sm:$0xff]
      %v263 = vld [vmem:[%s230 + $0xa8] sm:$0xff]
      %v264 = vld [vmem:[%s230 + $0xb0] sm:$0xff]
      %v265 = vld [vmem:[%s230 + $0xb8] sm:$0xff]
      %v266 = vld [vmem:[%s230 + $0xc0] sm:$0xff]
      %v267 = vld [vmem:[%s230 + $0xc8] sm:$0xff]
      %v268 = vld [vmem:[%s230 + $0xd0] sm:$0xff]
      %v269 = vld [vmem:[%s230 + $0xd8] sm:$0xff]
      %v270 = vld [vmem:[%s230 + $0xe0] sm:$0xff]
      %v271 = vld [vmem:[%s230 + $0xe8] sm:$0xff]
      %v272 = vld [vmem:[%s230 + $0xf0] sm:$0xff]
      %v273 = vld [vmem:[%s230 + $0xf8] sm:$0xff]
      %v274 = vld [vmem:[%s230 + $0x100] sm:$0xff]
      %v275 = vld [vmem:[%s230 + $0x108] sm:$0xff]
      %v276 = vld [vmem:[%s230 + $0x110] sm:$0xff]
      %v277 = vld [vmem:[%s230 + $0x118] sm:$0xff]
      %v278 = vld [vmem:[%s1] sm:$0xf]
      %v279 = vld [vmem:[%s230 + $0x1] sm:$0xff]
      %v280 = vld [vmem:[%s230 + $0x9] sm:$0xff]
      %v281 = vld [vmem:[%s230 + $0x11] sm:$0xff]
      %v282 = vld [vmem:[%s230 + $0x19] sm:$0xff]
      %v283 = vld [vmem:[%s230 + $0x21] sm:$0xff]
      %v284 = vld [vmem:[%s230 + $0x29] sm:$0xff]
      %v285 = vld [vmem:[%s230 + $0x31] sm:$0xff]
      %v286 = vld [vmem:[%s230 + $0x39] sm:$0xff]
      %v287 = vld [vmem:[%s230 + $0x41] sm:$0xff]
      %v288 = vld [vmem:[%s230 + $0x49] sm:$0xff]
      %v289 = vld [vmem:[%s230 + $0x51] sm:$0xff]
      %v290 = vld [vmem:[%s230 + $0x59] sm:$0xff]
      %v291 = vld [vmem:[%s230 + $0x61] sm:$0xff]
      %v292 = vld [vmem:[%s230 + $0x69] sm:$0xff]
      %v293 = vld [vmem:[%s230 + $0x71] sm:$0xff]
      %v294 = vld [vmem:[%s230 + $0x79] sm:$0xff]
      %v295 = vld [vmem:[%s230 + $0x81] sm:$0xff]
      %v296 = vld [vmem:[%s230 + $0x89] sm:$0xff]
      %v297 = vld [vmem:[%s230 + $0x91] sm:$0xff]
      %v298 = vld [vmem:[%s230 + $0x99] sm:$0xff]
      %v299 = vld [vmem:[%s230 + $0xa1] sm:$0xff]
      %v300 = vld [vmem:[%s230 + $0xa9] sm:$0xff]
      %v301 = vld [vmem:[%s230 + $0xb1] sm:$0xff]
      %v302 = vld [vmem:[%s230 + $0xb9] sm:$0xff]
      %v303 = vld [vmem:[%s230 + $0xc1] sm:$0xff]
      %v304 = vld [vmem:[%s230 + $0xc9] sm:$0xff]
      %v305 = vld [vmem:[%s230 + $0xd1] sm:$0xff]
      %v306 = vld [vmem:[%s230 + $0xd9] sm:$0xff]
      %v307 = vld [vmem:[%s230 + $0xe1] sm:$0xff]
      %v308 = vld [vmem:[%s230 + $0xe9] sm:$0xff]
      %v309 = vld [vmem:[%s230 + $0xf1] sm:$0xff]
      %v310 = vld [vmem:[%s230 + $0xf9] sm:$0xff]
      %v311 = vld [vmem:[%s230 + $0x101] sm:$0xff]
      %v312 = vld [vmem:[%s230 + $0x109] sm:$0xff]
      %v313 = vld [vmem:[%s230 + $0x111] sm:$0xff]
      %v314 = vld [vmem:[%s230 + $0x119] sm:$0xff]
      %s315 = scalar_lea.vmem %s1, 4
      %v316 = vld [vmem:[%s315] sm:$0xf]
      %vm317 = vcmask 31744
      %v319 = vsel %vm317, %v279, 0
      %v322 = vsel %vm317, %v280, 0
      %v325 = vsel %vm317, %v281, 0
      %v328 = vsel %vm317, %v282, 0
      %v331 = vsel %vm317, %v283, 0
      %v334 = vsel %vm317, %v284, 0
      %v337 = vsel %vm317, %v285, 0
      %v340 = vsel %vm317, %v286, 0
      %v343 = vsel %vm317, %v287, 0
      %v346 = vsel %vm317, %v288, 0
      %v349 = vsel %vm317, %v289, 0
      %v352 = vsel %vm317, %v290, 0
      %v355 = vsel %vm317, %v291, 0
      %v358 = vsel %vm317, %v292, 0
      %v361 = vsel %vm317, %v293, 0
      %v364 = vsel %vm317, %v294, 0
      %v367 = vsel %vm317, %v295, 0
      %v370 = vsel %vm317, %v296, 0
      %v373 = vsel %vm317, %v297, 0
      %v376 = vsel %vm317, %v298, 0
      %v379 = vsel %vm317, %v299, 0
      %v382 = vsel %vm317, %v300, 0
      %v385 = vsel %vm317, %v301, 0
      %v388 = vsel %vm317, %v302, 0
      %v391 = vsel %vm317, %v303, 0
      %v394 = vsel %vm317, %v304, 0
      %v397 = vsel %vm317, %v305, 0
      %v400 = vsel %vm317, %v306, 0
      %v403 = vsel %vm317, %v307, 0
      %v406 = vsel %vm317, %v308, 0
      %v409 = vsel %vm317, %v309, 0
      %v412 = vsel %vm317, %v310, 0
      %v415 = vsel %vm317, %v311, 0
      %v418 = vsel %vm317, %v312, 0
      %v421 = vsel %vm317, %v313, 0
      %v424 = vsel %vm317, %v314, 0
      %vm426 = vcmask 1043456
      %v428 = vsel %vm426, %v316, 0
      %430 = vmatprep.subr.mxu0 0.0
      %431 = vmatpush1.msra.mxu0 %v428
      %432 = vmatprep.subr.mxu0 0.0
      %433 = vmatpush1.msra.mxu0 0.0
      %434 = vmatprep.subr.mxu0 0.0
      %435 = vmatpush1.msra.mxu0 0.0
      %436 = vmatprep.subr.mxu0 0.0
      %437 = vmatpush1.msra.mxu0 0.0
      %438 = vmatprep.subr.mxu0 0.0
      %439 = vmatpush1.msra.mxu0 0.0
      %440 = vmatprep.subr.mxu0 0.0
      %441 = vmatpush1.msra.mxu0 0.0
      %442 = vmatprep.subr.mxu0 0.0
      %443 = vmatpush1.msra.mxu0 0.0
      %444 = vmatprep.subr.mxu0 0.0
      %445 = vmatpush1.msra.mxu0 0.0
      %446 = vmatprep.subr.mxu0 0.0
      %447 = vmatpush1.msra.mxu0 0.0
      %448 = vmatprep.subr.mxu0 0.0
      %449 = vmatpush1.msra.mxu0 0.0
      %450 = vmatprep.subr.mxu0 0.0
      %451 = vmatpush1.msra.mxu0 0.0
      %452 = vmatprep.subr.mxu0 0.0
      %453 = vmatpush1.msra.mxu0 0.0
      %454 = vmatprep.subr.mxu0 0.0
      %455 = vmatpush1.msra.mxu0 0.0
      %456 = vmatprep.subr.mxu0 0.0
      %457 = vmatpush1.msra.mxu0 0.0
      %458 = vmatprep.subr.mxu0 0.0
      %459 = vmatpush1.msra.mxu0 0.0
      %460 = vmatprep.subr.mxu0 0.0
      %461 = vmatpush1.msra.mxu0 0.0
      %462 = vmatprep.subr.mxu0 0.0
      %463 = vmatpush1.msra.mxu0 0.0
      %464 = vmatprep.subr.mxu0 0.0
      %465 = vmatpush1.msra.mxu0 0.0
      %466 = vmatprep.subr.mxu0 0.0
      %467 = vmatpush1.msra.mxu0 0.0
      %468 = vmatprep.subr.mxu0 0.0
      %469 = vmatpush1.msra.mxu0 0.0
      %470 = vmatprep.subr.mxu0 0.0
      %471 = vmatpush1.msra.mxu0 0.0
      %472 = vmatprep.subr.mxu0 0.0
      %473 = vmatpush1.msra.mxu0 0.0
      %474 = vmatprep.subr.mxu0 0.0
      %475 = vmatpush1.msra.mxu0 0.0
      %476 = vmatprep.subr.mxu0 0.0
      %477 = vmatpush1.msra.mxu0 0.0
      %478 = vmatprep.subr.mxu0 0.0
      %479 = vmatpush1.msra.mxu0 0.0
      %480 = vmatprep.subr.mxu0 0.0
      %481 = vmatpush1.msra.mxu0 0.0
      %482 = vmatprep.subr.mxu0 0.0
      %483 = vmatpush1.msra.mxu0 0.0
      %484 = vmatprep.subr.mxu0 0.0
      %485 = vmatpush1.msra.mxu0 0.0
      %486 = vmatprep.subr.mxu0 0.0
      %487 = vmatpush1.msra.mxu0 0.0
      %488 = vmatprep.subr.mxu0 0.0
      %489 = vmatpush1.msra.mxu0 0.0
      %490 = vmatprep.subr.mxu0 0.0
      %491 = vmatpush1.msra.mxu0 0.0
      %492 = vmatprep.subr.mxu0 0.0
      %493 = vmatpush1.msra.mxu0 0.0
      %494 = vmatprep.mubr.f32.mxu0 0.0
      %495 = vmatmul.mubr.f32.gmra.mrb[0].mxu0 %v319
      %v496 = vpop.f32.mrb[0].mxu0
      %v497 = vadd.f32 0.0, %v496
      %v498 = vpop.f32.mrb[0].mxu0
      %499 = vmatprep.mubr.f32.mxu0 0.0
      %500 = vmatmul.mubr.f32.gmra.mrb[0].mxu0 %v322
      %v501 = vpop.f32.mrb[0].mxu0
      %v502 = vadd.f32 0.0, %v501
      %v503 = vpop.f32.mrb[0].mxu0
      %504 = vmatprep.mubr.f32.mxu0 0.0
      %505 = vmatmul.mubr.f32.gmra.mrb[0].mxu0 %v325
      %v506 = vpop.f32.mrb[0].mxu0
      %v507 = vadd.f32 0.0, %v506
      %v508 = vpop.f32.mrb[0].mxu0
      %509 = vmatprep.mubr.f32.mxu0 0.0
      %510 = vmatmul.mubr.f32.gmra.mrb[0].mxu0 %v328
      %v511 = vpop.f32.mrb[0].mxu0
      %v512 = vadd.f32 0.0, %v511
      %v513 = vpop.f32.mrb[0].mxu0
      %514 = vmatprep.mubr.f32.mxu0 0.0
      %515 = vmatmul.mubr.f32.gmra.mrb[0].mxu0 %v331
      %v516 = vpop.f32.mrb[0].mxu0
      %v517 = vadd.f32 0.0, %v516
      %v518 = vpop.f32.mrb[0].mxu0
      %519 = vmatprep.mubr.f32.mxu0 0.0
      %520 = vmatmul.mubr.f32.gmra.mrb[0].mxu0 %v334
      %v521 = vpop.f32.mrb[0].mxu0
      %v522 = vadd.f32 0.0, %v521
      %v523 = vpop.f32.mrb[0].mxu0
      %524 = vmatprep.mubr.f32.mxu0 0.0
      %525 = vmatmul.mubr.f32.gmra.mrb[0].mxu0 %v337
      %v526 = vpop.f32.mrb[0].mxu0
      %v527 = vadd.f32 0.0, %v526
      %v528 = vpop.f32.mrb[0].mxu0
      %529 = vmatprep.mubr.f32.mxu0 0.0
      %530 = vmatmul.mubr.f32.gmra.mrb[0].mxu0 %v340
      %v531 = vpop.f32.mrb[0].mxu0
      %v532 = vadd.f32 0.0, %v531
      %v533 = vpop.f32.mrb[0].mxu0
      %534 = vmatprep.mubr.f32.mxu0 0.0
      %535 = vmatmul.mubr.f32.gmra.mrb[0].mxu0 %v343
      %v536 = vpop.f32.mrb[0].mxu0
      %v537 = vadd.f32 0.0, %v536
      %v538 = vpop.f32.mrb[0].mxu0
      %539 = vmatprep.mubr.f32.mxu0 0.0
      %540 = vmatmul.mubr.f32.gmra.mrb[0].mxu0 %v346
      %v541 = vpop.f32.mrb[0].mxu0
      %v542 = vadd.f32 0.0, %v541
      %v543 = vpop.f32.mrb[0].mxu0
      %544 = vmatprep.mubr.f32.mxu0 0.0
      %545 = vmatmul.mubr.f32.gmra.mrb[0].mxu0 %v349
      %v546 = vpop.f32.mrb[0].mxu0
      %v547 = vadd.f32 0.0, %v546
      %v548 = vpop.f32.mrb[0].mxu0
      %549 = vmatprep.mubr.f32.mxu0 0.0
      %550 = vmatmul.mubr.f32.gmra.mrb[0].mxu0 %v352
      %v551 = vpop.f32.mrb[0].mxu0
      %v552 = vadd.f32 0.0, %v551
      %v553 = vpop.f32.mrb[0].mxu0
      %554 = vmatprep.mubr.f32.mxu0 0.0
      %555 = vmatmul.mubr.f32.gmra.mrb[0].mxu0 %v355
      %v556 = vpop.f32.mrb[0].mxu0
      %v557 = vadd.f32 0.0, %v556
      %v558 = vpop.f32.mrb[0].mxu0
      %559 = vmatprep.mubr.f32.mxu0 0.0
      %560 = vmatmul.mubr.f32.gmra.mrb[0].mxu0 %v358
      %v561 = vpop.f32.mrb[0].mxu0
      %v562 = vadd.f32 0.0, %v561
      %v563 = vpop.f32.mrb[0].mxu0
      %564 = vmatprep.mubr.f32.mxu0 0.0
      %565 = vmatmul.mubr.f32.gmra.mrb[0].mxu0 %v361
      %v566 = vpop.f32.mrb[0].mxu0
      %v567 = vadd.f32 0.0, %v566
      %v568 = vpop.f32.mrb[0].mxu0
      %569 = vmatprep.mubr.f32.mxu0 0.0
      %570 = vmatmul.mubr.f32.gmra.mrb[0].mxu0 %v364
      %v571 = vpop.f32.mrb[0].mxu0
      %v572 = vadd.f32 0.0, %v571
      %v573 = vpop.f32.mrb[0].mxu0
      %574 = vmatprep.mubr.f32.mxu0 0.0
      %575 = vmatmul.mubr.f32.gmra.mrb[0].mxu0 %v367
      %v576 = vpop.f32.mrb[0].mxu0
      %v577 = vadd.f32 0.0, %v576
      %v578 = vpop.f32.mrb[0].mxu0
      %579 = vmatprep.mubr.f32.mxu0 0.0
      %580 = vmatmul.mubr.f32.gmra.mrb[0].mxu0 %v370
      %v581 = vpop.f32.mrb[0].mxu0
      %v582 = vadd.f32 0.0, %v581
      %v583 = vpop.f32.mrb[0].mxu0
      %584 = vmatprep.mubr.f32.mxu0 0.0
      %585 = vmatmul.mubr.f32.gmra.mrb[0].mxu0 %v373
      %v586 = vpop.f32.mrb[0].mxu0
      %v587 = vadd.f32 0.0, %v586
      %v588 = vpop.f32.mrb[0].mxu0
      %589 = vmatprep.mubr.f32.mxu0 0.0
      %590 = vmatmul.mubr.f32.gmra.mrb[0].mxu0 %v376
      %v591 = vpop.f32.mrb[0].mxu0
      %v592 = vadd.f32 0.0, %v591
      %v593 = vpop.f32.mrb[0].mxu0
      %594 = vmatprep.mubr.f32.mxu0 0.0
      %595 = vmatmul.mubr.f32.gmra.mrb[0].mxu0 %v379
      %v596 = vpop.f32.mrb[0].mxu0
      %v597 = vadd.f32 0.0, %v596
      %v598 = vpop.f32.mrb[0].mxu0
      %599 = vmatprep.mubr.f32.mxu0 0.0
      %600 = vmatmul.mubr.f32.gmra.mrb[0].mxu0 %v382
      %v601 = vpop.f32.mrb[0].mxu0
      %v602 = vadd.f32 0.0, %v601
      %v603 = vpop.f32.mrb[0].mxu0
      %604 = vmatprep.mubr.f32.mxu0 0.0
      %605 = vmatmul.mubr.f32.gmra.mrb[0].mxu0 %v385
      %v606 = vpop.f32.mrb[0].mxu0
      %v607 = vadd.f32 0.0, %v606
      %v608 = vpop.f32.mrb[0].mxu0
      %609 = vmatprep.mubr.f32.mxu0 0.0
      %610 = vmatmul.mubr.f32.gmra.mrb[0].mxu0 %v388
      %v611 = vpop.f32.mrb[0].mxu0
      %v612 = vadd.f32 0.0, %v611
      %v613 = vpop.f32.mrb[0].mxu0
      %614 = vmatprep.mubr.f32.mxu0 0.0
      %615 = vmatmul.mubr.f32.gmra.mrb[0].mxu0 %v391
      %v616 = vpop.f32.mrb[0].mxu0
      %v617 = vadd.f32 0.0, %v616
      %v618 = vpop.f32.mrb[0].mxu0
      %619 = vmatprep.mubr.f32.mxu0 0.0
      %620 = vmatmul.mubr.f32.gmra.mrb[0].mxu0 %v394
      %v621 = vpop.f32.mrb[0].mxu0
      %v622 = vadd.f32 0.0, %v621
      %v623 = vpop.f32.mrb[0].mxu0
      %624 = vmatprep.mubr.f32.mxu0 0.0
      %625 = vmatmul.mubr.f32.gmra.mrb[0].mxu0 %v397
      %v626 = vpop.f32.mrb[0].mxu0
      %v627 = vadd.f32 0.0, %v626
      %v628 = vpop.f32.mrb[0].mxu0
      %629 = vmatprep.mubr.f32.mxu0 0.0
      %630 = vmatmul.mubr.f32.gmra.mrb[0].mxu0 %v400
      %v631 = vpop.f32.mrb[0].mxu0
      %v632 = vadd.f32 0.0, %v631
      %v633 = vpop.f32.mrb[0].mxu0
      %634 = vmatprep.mubr.f32.mxu0 0.0
      %635 = vmatmul.mubr.f32.gmra.mrb[0].mxu0 %v403
      %v636 = vpop.f32.mrb[0].mxu0
      %v637 = vadd.f32 0.0, %v636
      %v638 = vpop.f32.mrb[0].mxu0
      %639 = vmatprep.mubr.f32.mxu0 0.0
      %640 = vmatmul.mubr.f32.gmra.mrb[0].mxu0 %v406
      %v641 = vpop.f32.mrb[0].mxu0
      %v642 = vadd.f32 0.0, %v641
      %v643 = vpop.f32.mrb[0].mxu0
      %644 = vmatprep.mubr.f32.mxu0 0.0
      %645 = vmatmul.mubr.f32.gmra.mrb[0].mxu0 %v409
      %v646 = vpop.f32.mrb[0].mxu0
      %v647 = vadd.f32 0.0, %v646
      %v648 = vpop.f32.mrb[0].mxu0
      %649 = vmatprep.mubr.f32.mxu0 0.0
      %650 = vmatmul.mubr.f32.gmra.mrb[0].mxu0 %v412
      %v651 = vpop.f32.mrb[0].mxu0
      %v652 = vadd.f32 0.0, %v651
      %v653 = vpop.f32.mrb[0].mxu0
      %654 = vmatprep.mubr.f32.mxu0 0.0
      %655 = vmatmul.mubr.f32.gmra.mrb[0].mxu0 %v415
      %v656 = vpop.f32.mrb[0].mxu0
      %v657 = vadd.f32 0.0, %v656
      %v658 = vpop.f32.mrb[0].mxu0
      %659 = vmatprep.mubr.f32.mxu0 0.0
      %660 = vmatmul.mubr.f32.gmra.mrb[0].mxu0 %v418
      %v661 = vpop.f32.mrb[0].mxu0
      %v662 = vadd.f32 0.0, %v661
      %v663 = vpop.f32.mrb[0].mxu0
      %664 = vmatprep.mubr.f32.mxu0 0.0
      %665 = vmatmul.mubr.f32.gmra.mrb[0].mxu0 %v421
      %v666 = vpop.f32.mrb[0].mxu0
      %v667 = vadd.f32 0.0, %v666
      %v668 = vpop.f32.mrb[0].mxu0
      %669 = vmatprep.mubr.f32.mxu0 0.0
      %670 = vmatmul.mubr.f32.gmra.mrb[0].mxu0 %v424
      %v671 = vpop.f32.mrb[0].mxu0
      %v672 = vadd.f32 0.0, %v671
      %v673 = vpop.f32.mrb[0].mxu0
      %674 = vdwg.mxu0
      %v676 = vsel %vm317, %v242, 0
      %v679 = vsel %vm317, %v243, 0
      %v682 = vsel %vm317, %v244, 0
      %v685 = vsel %vm317, %v245, 0
      %v688 = vsel %vm317, %v246, 0
      %v691 = vsel %vm317, %v247, 0
      %v694 = vsel %vm317, %v248, 0
      %v697 = vsel %vm317, %v249, 0
      %v700 = vsel %vm317, %v250, 0
      %v703 = vsel %vm317, %v251, 0
      %v706 = vsel %vm317, %v252, 0
      %v709 = vsel %vm317, %v253, 0
      %v712 = vsel %vm317, %v254, 0
      %v715 = vsel %vm317, %v255, 0
      %v718 = vsel %vm317, %v256, 0
      %v721 = vsel %vm317, %v257, 0
      %v724 = vsel %vm317, %v258, 0
      %v727 = vsel %vm317, %v259, 0
      %v730 = vsel %vm317, %v260, 0
      %v733 = vsel %vm317, %v261, 0
      %v736 = vsel %vm317, %v262, 0
      %v739 = vsel %vm317, %v263, 0
      %v742 = vsel %vm317, %v264, 0
      %v745 = vsel %vm317, %v265, 0
      %v748 = vsel %vm317, %v266, 0
      %v751 = vsel %vm317, %v267, 0
      %v754 = vsel %vm317, %v268, 0
      %v757 = vsel %vm317, %v269, 0
      %v760 = vsel %vm317, %v270, 0
      %v763 = vsel %vm317, %v271, 0
      %v766 = vsel %vm317, %v272, 0
      %v769 = vsel %vm317, %v273, 0
      %v772 = vsel %vm317, %v274, 0
      %v775 = vsel %vm317, %v275, 0
      %v778 = vsel %vm317, %v276, 0
      %v781 = vsel %vm317, %v277, 0
      %v784 = vsel %vm426, %v278, 0
      %786 = vmatprep.subr.mxu0 0.0
      %787 = vmatpush1.msra.mxu0 %v784
      %788 = vmatprep.subr.mxu0 0.0
      %789 = vmatpush1.msra.mxu0 0.0
      %790 = vmatprep.subr.mxu0 0.0
      %791 = vmatpush1.msra.mxu0 0.0
      %792 = vmatprep.subr.mxu0 0.0
      %793 = vmatpush1.msra.mxu0 0.0
      %794 = vmatprep.subr.mxu0 0.0
      %795 = vmatpush1.msra.mxu0 0.0
      %796 = vmatprep.subr.mxu0 0.0
      %797 = vmatpush1.msra.mxu0 0.0
      %798 = vmatprep.subr.mxu0 0.0
      %799 = vmatpush1.msra.mxu0 0.0
      %800 = vmatprep.subr.mxu0 0.0
      %801 = vmatpush1.msra.mxu0 0.0
      %802 = vmatprep.subr.mxu0 0.0
      %803 = vmatpush1.msra.mxu0 0.0
      %804 = vmatprep.subr.mxu0 0.0
      %805 = vmatpush1.msra.mxu0 0.0
      %806 = vmatprep.subr.mxu0 0.0
      %807 = vmatpush1.msra.mxu0 0.0
      %808 = vmatprep.subr.mxu0 0.0
      %809 = vmatpush1.msra.mxu0 0.0
      %810 = vmatprep.subr.mxu0 0.0
      %811 = vmatpush1.msra.mxu0 0.0
      %812 = vmatprep.subr.mxu0 0.0
      %813 = vmatpush1.msra.mxu0 0.0
      %814 = vmatprep.subr.mxu0 0.0
      %815 = vmatpush1.msra.mxu0 0.0
      %816 = vmatprep.subr.mxu0 0.0
      %817 = vmatpush1.msra.mxu0 0.0
      %818 = vmatprep.subr.mxu0 0.0
      %819 = vmatpush1.msra.mxu0 0.0
      %820 = vmatprep.subr.mxu0 0.0
      %821 = vmatpush1.msra.mxu0 0.0
      %822 = vmatprep.subr.mxu0 0.0
      %823 = vmatpush1.msra.mxu0 0.0
      %824 = vmatprep.subr.mxu0 0.0
      %825 = vmatpush1.msra.mxu0 0.0
      %826 = vmatprep.subr.mxu0 0.0
      %827 = vmatpush1.msra.mxu0 0.0
      %828 = vmatprep.subr.mxu0 0.0
      %829 = vmatpush1.msra.mxu0 0.0
      %830 = vmatprep.subr.mxu0 0.0
      %831 = vmatpush1.msra.mxu0 0.0
      %832 = vmatprep.subr.mxu0 0.0
      %833 = vmatpush1.msra.mxu0 0.0
      %834 = vmatprep.subr.mxu0 0.0
      %835 = vmatpush1.msra.mxu0 0.0
      %836 = vmatprep.subr.mxu0 0.0
      %837 = vmatpush1.msra.mxu0 0.0
      %838 = vmatprep.subr.mxu0 0.0
      %839 = vmatpush1.msra.mxu0 0.0
      %840 = vmatprep.subr.mxu0 0.0
      %841 = vmatpush1.msra.mxu0 0.0
      %842 = vmatprep.subr.mxu0 0.0
      %843 = vmatpush1.msra.mxu0 0.0
      %844 = vmatprep.subr.mxu0 0.0
      %845 = vmatpush1.msra.mxu0 0.0
      %846 = vmatprep.subr.mxu0 0.0
      %847 = vmatpush1.msra.mxu0 0.0
      %848 = vmatprep.subr.mxu0 0.0
      %849 = vmatpush1.msra.mxu0 0.0
      %850 = vmatprep.mubr.f32.mxu0 0.0
      %851 = vmatmul.mubr.f32.gmra.mrb[0].mxu0 %v676
      %v852 = vpop.f32.mrb[0].mxu0
      %v853 = vadd.f32 %v497, %v852
      %v854 = vpop.f32.mrb[0].mxu0
      %855 = vmatprep.mubr.f32.mxu0 0.0
      %856 = vmatmul.mubr.f32.gmra.mrb[0].mxu0 %v679
      %v857 = vpop.f32.mrb[0].mxu0
      %v858 = vadd.f32 %v502, %v857
      %v859 = vpop.f32.mrb[0].mxu0
      %860 = vmatprep.mubr.f32.mxu0 0.0
      %861 = vmatmul.mubr.f32.gmra.mrb[0].mxu0 %v682
      %v862 = vpop.f32.mrb[0].mxu0
      %v863 = vadd.f32 %v507, %v862
      %v864 = vpop.f32.mrb[0].mxu0
      %865 = vmatprep.mubr.f32.mxu0 0.0
      %866 = vmatmul.mubr.f32.gmra.mrb[0].mxu0 %v685
      %v867 = vpop.f32.mrb[0].mxu0
      %v868 = vadd.f32 %v512, %v867
      %v869 = vpop.f32.mrb[0].mxu0
      %870 = vmatprep.mubr.f32.mxu0 0.0
      %871 = vmatmul.mubr.f32.gmra.mrb[0].mxu0 %v688
      %v872 = vpop.f32.mrb[0].mxu0
      %v873 = vadd.f32 %v517, %v872
      %v874 = vpop.f32.mrb[0].mxu0
      %875 = vmatprep.mubr.f32.mxu0 0.0
      %876 = vmatmul.mubr.f32.gmra.mrb[0].mxu0 %v691
      %v877 = vpop.f32.mrb[0].mxu0
      %v878 = vadd.f32 %v522, %v877
      %v879 = vpop.f32.mrb[0].mxu0
      %880 = vmatprep.mubr.f32.mxu0 0.0
      %881 = vmatmul.mubr.f32.gmra.mrb[0].mxu0 %v694
      %v882 = vpop.f32.mrb[0].mxu0
      %v883 = vadd.f32 %v527, %v882
      %v884 = vpop.f32.mrb[0].mxu0
      %885 = vmatprep.mubr.f32.mxu0 0.0
      %886 = vmatmul.mubr.f32.gmra.mrb[0].mxu0 %v697
      %v887 = vpop.f32.mrb[0].mxu0
      %v888 = vadd.f32 %v532, %v887
      %v889 = vpop.f32.mrb[0].mxu0
      %890 = vmatprep.mubr.f32.mxu0 0.0
      %891 = vmatmul.mubr.f32.gmra.mrb[0].mxu0 %v700
      %v892 = vpop.f32.mrb[0].mxu0
      %v893 = vadd.f32 %v537, %v892
      %v894 = vpop.f32.mrb[0].mxu0
      %895 = vmatprep.mubr.f32.mxu0 0.0
      %896 = vmatmul.mubr.f32.gmra.mrb[0].mxu0 %v703
      %v897 = vpop.f32.mrb[0].mxu0
      %v898 = vadd.f32 %v542, %v897
      %v899 = vpop.f32.mrb[0].mxu0
      %900 = vmatprep.mubr.f32.mxu0 0.0
      %901 = vmatmul.mubr.f32.gmra.mrb[0].mxu0 %v706
      %v902 = vpop.f32.mrb[0].mxu0
      %v903 = vadd.f32 %v547, %v902
      %v904 = vpop.f32.mrb[0].mxu0
      %905 = vmatprep.mubr.f32.mxu0 0.0
      %906 = vmatmul.mubr.f32.gmra.mrb[0].mxu0 %v709
      %v907 = vpop.f32.mrb[0].mxu0
      %v908 = vadd.f32 %v552, %v907
      %v909 = vpop.f32.mrb[0].mxu0
      %910 = vmatprep.mubr.f32.mxu0 0.0
      %911 = vmatmul.mubr.f32.gmra.mrb[0].mxu0 %v712
      %v912 = vpop.f32.mrb[0].mxu0
      %v913 = vadd.f32 %v557, %v912
      %v914 = vpop.f32.mrb[0].mxu0
      %915 = vmatprep.mubr.f32.mxu0 0.0
      %916 = vmatmul.mubr.f32.gmra.mrb[0].mxu0 %v715
      %v917 = vpop.f32.mrb[0].mxu0
      %v918 = vadd.f32 %v562, %v917
      %v919 = vpop.f32.mrb[0].mxu0
      %920 = vmatprep.mubr.f32.mxu0 0.0
      %921 = vmatmul.mubr.f32.gmra.mrb[0].mxu0 %v718
      %v922 = vpop.f32.mrb[0].mxu0
      %v923 = vadd.f32 %v567, %v922
      %v924 = vpop.f32.mrb[0].mxu0
      %925 = vmatprep.mubr.f32.mxu0 0.0
      %926 = vmatmul.mubr.f32.gmra.mrb[0].mxu0 %v721
      %v927 = vpop.f32.mrb[0].mxu0
      %v928 = vadd.f32 %v572, %v927
      %v929 = vpop.f32.mrb[0].mxu0
      %930 = vmatprep.mubr.f32.mxu0 0.0
      %931 = vmatmul.mubr.f32.gmra.mrb[0].mxu0 %v724
      %v932 = vpop.f32.mrb[0].mxu0
      %v933 = vadd.f32 %v577, %v932
      %v934 = vpop.f32.mrb[0].mxu0
      %935 = vmatprep.mubr.f32.mxu0 0.0
      %936 = vmatmul.mubr.f32.gmra.mrb[0].mxu0 %v727
      %v937 = vpop.f32.mrb[0].mxu0
      %v938 = vadd.f32 %v582, %v937
      %v939 = vpop.f32.mrb[0].mxu0
      %940 = vmatprep.mubr.f32.mxu0 0.0
      %941 = vmatmul.mubr.f32.gmra.mrb[0].mxu0 %v730
      %v942 = vpop.f32.mrb[0].mxu0
      %v943 = vadd.f32 %v587, %v942
      %v944 = vpop.f32.mrb[0].mxu0
      %945 = vmatprep.mubr.f32.mxu0 0.0
      %946 = vmatmul.mubr.f32.gmra.mrb[0].mxu0 %v733
      %v947 = vpop.f32.mrb[0].mxu0
      %v948 = vadd.f32 %v592, %v947
      %v949 = vpop.f32.mrb[0].mxu0
      %950 = vmatprep.mubr.f32.mxu0 0.0
      %951 = vmatmul.mubr.f32.gmra.mrb[0].mxu0 %v736
      %v952 = vpop.f32.mrb[0].mxu0
      %v953 = vadd.f32 %v597, %v952
      %v954 = vpop.f32.mrb[0].mxu0
      %955 = vmatprep.mubr.f32.mxu0 0.0
      %956 = vmatmul.mubr.f32.gmra.mrb[0].mxu0 %v739
      %v957 = vpop.f32.mrb[0].mxu0
      %v958 = vadd.f32 %v602, %v957
      %v959 = vpop.f32.mrb[0].mxu0
      %960 = vmatprep.mubr.f32.mxu0 0.0
      %961 = vmatmul.mubr.f32.gmra.mrb[0].mxu0 %v742
      %v962 = vpop.f32.mrb[0].mxu0
      %v963 = vadd.f32 %v607, %v962
      %v964 = vpop.f32.mrb[0].mxu0
      %965 = vmatprep.mubr.f32.mxu0 0.0
      %966 = vmatmul.mubr.f32.gmra.mrb[0].mxu0 %v745
      %v967 = vpop.f32.mrb[0].mxu0
      %v968 = vadd.f32 %v612, %v967
      %v969 = vpop.f32.mrb[0].mxu0
      %970 = vmatprep.mubr.f32.mxu0 0.0
      %971 = vmatmul.mubr.f32.gmra.mrb[0].mxu0 %v748
      %v972 = vpop.f32.mrb[0].mxu0
      %v973 = vadd.f32 %v617, %v972
      %v974 = vpop.f32.mrb[0].mxu0
      %975 = vmatprep.mubr.f32.mxu0 0.0
      %976 = vmatmul.mubr.f32.gmra.mrb[0].mxu0 %v751
      %v977 = vpop.f32.mrb[0].mxu0
      %v978 = vadd.f32 %v622, %v977
      %v979 = vpop.f32.mrb[0].mxu0
      %980 = vmatprep.mubr.f32.mxu0 0.0
      %981 = vmatmul.mubr.f32.gmra.mrb[0].mxu0 %v754
      %v982 = vpop.f32.mrb[0].mxu0
      %v983 = vadd.f32 %v627, %v982
      %v984 = vpop.f32.mrb[0].mxu0
      %985 = vmatprep.mubr.f32.mxu0 0.0
      %986 = vmatmul.mubr.f32.gmra.mrb[0].mxu0 %v757
      %v987 = vpop.f32.mrb[0].mxu0
      %v988 = vadd.f32 %v632, %v987
      %v989 = vpop.f32.mrb[0].mxu0
      %990 = vmatprep.mubr.f32.mxu0 0.0
      %991 = vmatmul.mubr.f32.gmra.mrb[0].mxu0 %v760
      %v992 = vpop.f32.mrb[0].mxu0
      %v993 = vadd.f32 %v637, %v992
      %v994 = vpop.f32.mrb[0].mxu0
      %995 = vmatprep.mubr.f32.mxu0 0.0
      %996 = vmatmul.mubr.f32.gmra.mrb[0].mxu0 %v763
      %v997 = vpop.f32.mrb[0].mxu0
      %v998 = vadd.f32 %v642, %v997
      %v999 = vpop.f32.mrb[0].mxu0
      %1000 = vmatprep.mubr.f32.mxu0 0.0
      %1001 = vmatmul.mubr.f32.gmra.mrb[0].mxu0 %v766
      %v1002 = vpop.f32.mrb[0].mxu0
      %v1003 = vadd.f32 %v647, %v1002
      %v1004 = vpop.f32.mrb[0].mxu0
      %1005 = vmatprep.mubr.f32.mxu0 0.0
      %1006 = vmatmul.mubr.f32.gmra.mrb[0].mxu0 %v769
      %v1007 = vpop.f32.mrb[0].mxu0
      %v1008 = vadd.f32 %v652, %v1007
      %v1009 = vpop.f32.mrb[0].mxu0
      %1010 = vmatprep.mubr.f32.mxu0 0.0
      %1011 = vmatmul.mubr.f32.gmra.mrb[0].mxu0 %v772
      %v1012 = vpop.f32.mrb[0].mxu0
      %v1013 = vadd.f32 %v657, %v1012
      %v1014 = vpop.f32.mrb[0].mxu0
      %1015 = vmatprep.mubr.f32.mxu0 0.0
      %1016 = vmatmul.mubr.f32.gmra.mrb[0].mxu0 %v775
      %v1017 = vpop.f32.mrb[0].mxu0
      %v1018 = vadd.f32 %v662, %v1017
      %v1019 = vpop.f32.mrb[0].mxu0
      %1020 = vmatprep.mubr.f32.mxu0 0.0
      %1021 = vmatmul.mubr.f32.gmra.mrb[0].mxu0 %v778
      %v1022 = vpop.f32.mrb[0].mxu0
      %v1023 = vadd.f32 %v667, %v1022
      %v1024 = vpop.f32.mrb[0].mxu0
      %1025 = vmatprep.mubr.f32.mxu0 0.0
      %1026 = vmatmul.mubr.f32.gmra.mrb[0].mxu0 %v781
      %v1027 = vpop.f32.mrb[0].mxu0
      %v1028 = vadd.f32 %v672, %v1027
      %v1029 = vpop.f32.mrb[0].mxu0
      %1030 = vdwg.mxu0
      %v1031 = vld [vmem:[%s230 + $0x2] sm:$0xff]
      %v1032 = vld [vmem:[%s230 + $0xa] sm:$0xff]
      %v1033 = vld [vmem:[%s230 + $0x12] sm:$0xff]
      %v1034 = vld [vmem:[%s230 + $0x1a] sm:$0xff]
      %v1035 = vld [vmem:[%s230 + $0x22] sm:$0xff]
      %v1036 = vld [vmem:[%s230 + $0x2a] sm:$0xff]
      %v1037 = vld [vmem:[%s230 + $0x32] sm:$0xff]
      %v1038 = vld [vmem:[%s230 + $0x3a] sm:$0xff]
      %v1039 = vld [vmem:[%s230 + $0x42] sm:$0xff]
      %v1040 = vld [vmem:[%s230 + $0x4a] sm:$0xff]
      %v1041 = vld [vmem:[%s230 + $0x52] sm:$0xff]
      %v1042 = vld [vmem:[%s230 + $0x5a] sm:$0xff]
      %v1043 = vld [vmem:[%s230 + $0x62] sm:$0xff]
      %v1044 = vld [vmem:[%s230 + $0x6a] sm:$0xff]
      %v1045 = vld [vmem:[%s230 + $0x72] sm:$0xff]
      %v1046 = vld [vmem:[%s230 + $0x7a] sm:$0xff]
      %v1047 = vld [vmem:[%s230 + $0x82] sm:$0xff]
      %v1048 = vld [vmem:[%s230 + $0x8a] sm:$0xff]
      %v1049 = vld [vmem:[%s230 + $0x92] sm:$0xff]
      %v1050 = vld [vmem:[%s230 + $0x9a] sm:$0xff]
      %v1051 = vld [vmem:[%s230 + $0xa2] sm:$0xff]
      %v1052 = vld [vmem:[%s230 + $0xaa] sm:$0xff]
      %v1053 = vld [vmem:[%s230 + $0xb2] sm:$0xff]
      %v1054 = vld [vmem:[%s230 + $0xba] sm:$0xff]
      %v1055 = vld [vmem:[%s230 + $0xc2] sm:$0xff]
      %v1056 = vld [vmem:[%s230 + $0xca] sm:$0xff]
      %v1057 = vld [vmem:[%s230 + $0xd2] sm:$0xff]
      %v1058 = vld [vmem:[%s230 + $0xda] sm:$0xff]
      %v1059 = vld [vmem:[%s230 + $0xe2] sm:$0xff]
      %v1060 = vld [vmem:[%s230 + $0xea] sm:$0xff]
      %v1061 = vld [vmem:[%s230 + $0xf2] sm:$0xff]
      %v1062 = vld [vmem:[%s230 + $0xfa] sm:$0xff]
      %v1063 = vld [vmem:[%s230 + $0x102] sm:$0xff]
      %v1064 = vld [vmem:[%s230 + $0x10a] sm:$0xff]
      %v1065 = vld [vmem:[%s230 + $0x112] sm:$0xff]
      %v1066 = vld [vmem:[%s230 + $0x11a] sm:$0xff]
      %s1067 = scalar_lea.vmem %s1, 8
      %v1068 = vld [vmem:[%s1067] sm:$0xf]
      %v1070 = vsel %vm317, %v1031, 0
      %v1073 = vsel %vm317, %v1032, 0
      %v1076 = vsel %vm317, %v1033, 0
      %v1079 = vsel %vm317, %v1034, 0
      %v1082 = vsel %vm317, %v1035, 0
      %v1085 = vsel %vm317, %v1036, 0
      %v1088 = vsel %vm317, %v1037, 0
      %v1091 = vsel %vm317, %v1038, 0
      %v1094 = vsel %vm317, %v1039, 0
      %v1097 = vsel %vm317, %v1040, 0
      %v1100 = vsel %vm317, %v1041, 0
      %v1103 = vsel %vm317, %v1042, 0
      %v1106 = vsel %vm317, %v1043, 0
      %v1109 = vsel %vm317, %v1044, 0
      %v1112 = vsel %vm317, %v1045, 0
      %v1115 = vsel %vm317, %v1046, 0
      %v1118 = vsel %vm317, %v1047, 0
      %v1121 = vsel %vm317, %v1048, 0
      %v1124 = vsel %vm317, %v1049, 0
      %v1127 = vsel %vm317, %v1050, 0
      %v1130 = vsel %vm317, %v1051, 0
      %v1133 = vsel %vm317, %v1052, 0
      %v1136 = vsel %vm317, %v1053, 0
      %v1139 = vsel %vm317, %v1054, 0
      %v1142 = vsel %vm317, %v1055, 0
      %v1145 = vsel %vm317, %v1056, 0
      %v1148 = vsel %vm317, %v1057, 0
      %v1151 = vsel %vm317, %v1058, 0
      %v1154 = vsel %vm317, %v1059, 0
      %v1157 = vsel %vm317, %v1060, 0
      %v1160 = vsel %vm317, %v1061, 0
      %v1163 = vsel %vm317, %v1062, 0
      %v1166 = vsel %vm317, %v1063, 0
      %v1169 = vsel %vm317, %v1064, 0
      %v1172 = vsel %vm317, %v1065, 0
      %v1175 = vsel %vm317, %v1066, 0
      %v1178 = vsel %vm426, %v1068, 0
      %1180 = vmatprep.subr.mxu0 0.0
      %1181 = vmatpush1.msra.mxu0 %v1178
      %1182 = vmatprep.subr.mxu0 0.0
      %1183 = vmatpush1.msra.mxu0 0.0
      %1184 = vmatprep.subr.mxu0 0.0
      %1185 = vmatpush1.msra.mxu0 0.0
      %1186 = vmatprep.subr.mxu0 0.0
      %1187 = vmatpush1.msra.mxu0 0.0
      %1188 = vmatprep.subr.mxu0 0.0
      %1189 = vmatpush1.msra.mxu0 0.0
      %1190 = vmatprep.subr.mxu0 0.0
      %1191 = vmatpush1.msra.mxu0 0.0
      %1192 = vmatprep.subr.mxu0 0.0
      %1193 = vmatpush1.msra.mxu0 0.0
      %1194 = vmatprep.subr.mxu0 0.0
      %1195 = vmatpush1.msra.mxu0 0.0
      %1196 = vmatprep.subr.mxu0 0.0
      %1197 = vmatpush1.msra.mxu0 0.0
      %1198 = vmatprep.subr.mxu0 0.0
      %1199 = vmatpush1.msra.mxu0 0.0
      %1200 = vmatprep.subr.mxu0 0.0
      %1201 = vmatpush1.msra.mxu0 0.0
      %1202 = vmatprep.subr.mxu0 0.0
      %1203 = vmatpush1.msra.mxu0 0.0
      %1204 = vmatprep.subr.mxu0 0.0
      %1205 = vmatpush1.msra.mxu0 0.0
      %1206 = vmatprep.subr.mxu0 0.0
      %1207 = vmatpush1.msra.mxu0 0.0
      %1208 = vmatprep.subr.mxu0 0.0
      %1209 = vmatpush1.msra.mxu0 0.0
      %1210 = vmatprep.subr.mxu0 0.0
      %1211 = vmatpush1.msra.mxu0 0.0
      %1212 = vmatprep.subr.mxu0 0.0
      %1213 = vmatpush1.msra.mxu0 0.0
      %1214 = vmatprep.subr.mxu0 0.0
      %1215 = vmatpush1.msra.mxu0 0.0
      %1216 = vmatprep.subr.mxu0 0.0
      %1217 = vmatpush1.msra.mxu0 0.0
      %1218 = vmatprep.subr.mxu0 0.0
      %1219 = vmatpush1.msra.mxu0 0.0
      %1220 = vmatprep.subr.mxu0 0.0
      %1221 = vmatpush1.msra.mxu0 0.0
      %1222 = vmatprep.subr.mxu0 0.0
      %1223 = vmatpush1.msra.mxu0 0.0
      %1224 = vmatprep.subr.mxu0 0.0
      %1225 = vmatpush1.msra.mxu0 0.0
      %1226 = vmatprep.subr.mxu0 0.0
      %1227 = vmatpush1.msra.mxu0 0.0
      %1228 = vmatprep.subr.mxu0 0.0
      %1229 = vmatpush1.msra.mxu0 0.0
      %1230 = vmatprep.subr.mxu0 0.0
      %1231 = vmatpush1.msra.mxu0 0.0
      %1232 = vmatprep.subr.mxu0 0.0
      %1233 = vmatpush1.msra.mxu0 0.0
      %1234 = vmatprep.subr.mxu0 0.0
      %1235 = vmatpush1.msra.mxu0 0.0
      %1236 = vmatprep.subr.mxu0 0.0
      %1237 = vmatpush1.msra.mxu0 0.0
      %1238 = vmatprep.subr.mxu0 0.0
      %1239 = vmatpush1.msra.mxu0 0.0
      %1240 = vmatprep.subr.mxu0 0.0
      %1241 = vmatpush1.msra.mxu0 0.0
      %1242 = vmatprep.subr.mxu0 0.0
      %1243 = vmatpush1.msra.mxu0 0.0
      %1244 = vmatprep.mubr.f32.mxu0 0.0
      %1245 = vmatmul.mubr.f32.gmra.mrb[0].mxu0 %v1070
      %v1246 = vpop.f32.mrb[0].mxu0
      %v1247 = vadd.f32 0.0, %v1246
      %v1248 = vpop.f32.mrb[0].mxu0
      %1249 = vmatprep.mubr.f32.mxu0 0.0
      %1250 = vmatmul.mubr.f32.gmra.mrb[0].mxu0 %v1073
      %v1251 = vpop.f32.mrb[0].mxu0
      %v1252 = vadd.f32 0.0, %v1251
      %v1253 = vpop.f32.mrb[0].mxu0
      %1254 = vmatprep.mubr.f32.mxu0 0.0
      %1255 = vmatmul.mubr.f32.gmra.mrb[0].mxu0 %v1076
      %v1256 = vpop.f32.mrb[0].mxu0
      %v1257 = vadd.f32 0.0, %v1256
      %v1258 = vpop.f32.mrb[0].mxu0
      %1259 = vmatprep.mubr.f32.mxu0 0.0
      %1260 = vmatmul.mubr.f32.gmra.mrb[0].mxu0 %v1079
      %v1261 = vpop.f32.mrb[0].mxu0
      %v1262 = vadd.f32 0.0, %v1261
      %v1263 = vpop.f32.mrb[0].mxu0
      %1264 = vmatprep.mubr.f32.mxu0 0.0
      %1265 = vmatmul.mubr.f32.gmra.mrb[0].mxu0 %v1082
      %v1266 = vpop.f32.mrb[0].mxu0
      %v1267 = vadd.f32 0.0, %v1266
      %v1268 = vpop.f32.mrb[0].mxu0
      %1269 = vmatprep.mubr.f32.mxu0 0.0
      %1270 = vmatmul.mubr.f32.gmra.mrb[0].mxu0 %v1085
      %v1271 = vpop.f32.mrb[0].mxu0
      %v1272 = vadd.f32 0.0, %v1271
      %v1273 = vpop.f32.mrb[0].mxu0
      %1274 = vmatprep.mubr.f32.mxu0 0.0
      %1275 = vmatmul.mubr.f32.gmra.mrb[0].mxu0 %v1088
      %v1276 = vpop.f32.mrb[0].mxu0
      %v1277 = vadd.f32 0.0, %v1276
      %v1278 = vpop.f32.mrb[0].mxu0
      %1279 = vmatprep.mubr.f32.mxu0 0.0
      %1280 = vmatmul.mubr.f32.gmra.mrb[0].mxu0 %v1091
      %v1281 = vpop.f32.mrb[0].mxu0
      %v1282 = vadd.f32 0.0, %v1281
      %v1283 = vpop.f32.mrb[0].mxu0
      %1284 = vmatprep.mubr.f32.mxu0 0.0
      %1285 = vmatmul.mubr.f32.gmra.mrb[0].mxu0 %v1094
      %v1286 = vpop.f32.mrb[0].mxu0
      %v1287 = vadd.f32 0.0, %v1286
      %v1288 = vpop.f32.mrb[0].mxu0
      %1289 = vmatprep.mubr.f32.mxu0 0.0
      %1290 = vmatmul.mubr.f32.gmra.mrb[0].mxu0 %v1097
      %v1291 = vpop.f32.mrb[0].mxu0
      %v1292 = vadd.f32 0.0, %v1291
      %v1293 = vpop.f32.mrb[0].mxu0
      %1294 = vmatprep.mubr.f32.mxu0 0.0
      %1295 = vmatmul.mubr.f32.gmra.mrb[0].mxu0 %v1100
      %v1296 = vpop.f32.mrb[0].mxu0
      %v1297 = vadd.f32 0.0, %v1296
      %v1298 = vpop.f32.mrb[0].mxu0
      %1299 = vmatprep.mubr.f32.mxu0 0.0
      %1300 = vmatmul.mubr.f32.gmra.mrb[0].mxu0 %v1103
      %v1301 = vpop.f32.mrb[0].mxu0
      %v1302 = vadd.f32 0.0, %v1301
      %v1303 = vpop.f32.mrb[0].mxu0
      %1304 = vmatprep.mubr.f32.mxu0 0.0
      %1305 = vmatmul.mubr.f32.gmra.mrb[0].mxu0 %v1106
      %v1306 = vpop.f32.mrb[0].mxu0
      %v1307 = vadd.f32 0.0, %v1306
      %v1308 = vpop.f32.mrb[0].mxu0
      %1309 = vmatprep.mubr.f32.mxu0 0.0
      %1310 = vmatmul.mubr.f32.gmra.mrb[0].mxu0 %v1109
      %v1311 = vpop.f32.mrb[0].mxu0
      %v1312 = vadd.f32 0.0, %v1311
      %v1313 = vpop.f32.mrb[0].mxu0
      %1314 = vmatprep.mubr.f32.mxu0 0.0
      %1315 = vmatmul.mubr.f32.gmra.mrb[0].mxu0 %v1112
      %v1316 = vpop.f32.mrb[0].mxu0
      %v1317 = vadd.f32 0.0, %v1316
      %v1318 = vpop.f32.mrb[0].mxu0
      %1319 = vmatprep.mubr.f32.mxu0 0.0
      %1320 = vmatmul.mubr.f32.gmra.mrb[0].mxu0 %v1115
      %v1321 = vpop.f32.mrb[0].mxu0
      %v1322 = vadd.f32 0.0, %v1321
      %v1323 = vpop.f32.mrb[0].mxu0
      %1324 = vmatprep.mubr.f32.mxu0 0.0
      %1325 = vmatmul.mubr.f32.gmra.mrb[0].mxu0 %v1118
      %v1326 = vpop.f32.mrb[0].mxu0
      %v1327 = vadd.f32 0.0, %v1326
      %v1328 = vpop.f32.mrb[0].mxu0
      %1329 = vmatprep.mubr.f32.mxu0 0.0
      %1330 = vmatmul.mubr.f32.gmra.mrb[0].mxu0 %v1121
      %v1331 = vpop.f32.mrb[0].mxu0
      %v1332 = vadd.f32 0.0, %v1331
      %v1333 = vpop.f32.mrb[0].mxu0
      %1334 = vmatprep.mubr.f32.mxu0 0.0
      %1335 = vmatmul.mubr.f32.gmra.mrb[0].mxu0 %v1124
      %v1336 = vpop.f32.mrb[0].mxu0
      %v1337 = vadd.f32 0.0, %v1336
      %v1338 = vpop.f32.mrb[0].mxu0
      %1339 = vmatprep.mubr.f32.mxu0 0.0
      %1340 = vmatmul.mubr.f32.gmra.mrb[0].mxu0 %v1127
      %v1341 = vpop.f32.mrb[0].mxu0
      %v1342 = vadd.f32 0.0, %v1341
      %v1343 = vpop.f32.mrb[0].mxu0
      %1344 = vmatprep.mubr.f32.mxu0 0.0
      %1345 = vmatmul.mubr.f32.gmra.mrb[0].mxu0 %v1130
      %v1346 = vpop.f32.mrb[0].mxu0
      %v1347 = vadd.f32 0.0, %v1346
      %v1348 = vpop.f32.mrb[0].mxu0
      %1349 = vmatprep.mubr.f32.mxu0 0.0
      %1350 = vmatmul.mubr.f32.gmra.mrb[0].mxu0 %v1133
      %v1351 = vpop.f32.mrb[0].mxu0
      %v1352 = vadd.f32 0.0, %v1351
      %v1353 = vpop.f32.mrb[0].mxu0
      %1354 = vmatprep.mubr.f32.mxu0 0.0
      %1355 = vmatmul.mubr.f32.gmra.mrb[0].mxu0 %v1136
      %v1356 = vpop.f32.mrb[0].mxu0
      %v1357 = vadd.f32 0.0, %v1356
      %v1358 = vpop.f32.mrb[0].mxu0
      %1359 = vmatprep.mubr.f32.mxu0 0.0
      %1360 = vmatmul.mubr.f32.gmra.mrb[0].mxu0 %v1139
      %v1361 = vpop.f32.mrb[0].mxu0
      %v1362 = vadd.f32 0.0, %v1361
      %v1363 = vpop.f32.mrb[0].mxu0
      %1364 = vmatprep.mubr.f32.mxu0 0.0
      %1365 = vmatmul.mubr.f32.gmra.mrb[0].mxu0 %v1142
      %v1366 = vpop.f32.mrb[0].mxu0
      %v1367 = vadd.f32 0.0, %v1366
      %v1368 = vpop.f32.mrb[0].mxu0
      %1369 = vmatprep.mubr.f32.mxu0 0.0
      %1370 = vmatmul.mubr.f32.gmra.mrb[0].mxu0 %v1145
      %v1371 = vpop.f32.mrb[0].mxu0
      %v1372 = vadd.f32 0.0, %v1371
      %v1373 = vpop.f32.mrb[0].mxu0
      %1374 = vmatprep.mubr.f32.mxu0 0.0
      %1375 = vmatmul.mubr.f32.gmra.mrb[0].mxu0 %v1148
      %v1376 = vpop.f32.mrb[0].mxu0
      %v1377 = vadd.f32 0.0, %v1376
      %v1378 = vpop.f32.mrb[0].mxu0
      %1379 = vmatprep.mubr.f32.mxu0 0.0
      %1380 = vmatmul.mubr.f32.gmra.mrb[0].mxu0 %v1151
      %v1381 = vpop.f32.mrb[0].mxu0
      %v1382 = vadd.f32 0.0, %v1381
      %v1383 = vpop.f32.mrb[0].mxu0
      %1384 = vmatprep.mubr.f32.mxu0 0.0
      %1385 = vmatmul.mubr.f32.gmra.mrb[0].mxu0 %v1154
      %v1386 = vpop.f32.mrb[0].mxu0
      %v1387 = vadd.f32 0.0, %v1386
      %v1388 = vpop.f32.mrb[0].mxu0
      %1389 = vmatprep.mubr.f32.mxu0 0.0
      %1390 = vmatmul.mubr.f32.gmra.mrb[0].mxu0 %v1157
      %v1391 = vpop.f32.mrb[0].mxu0
      %v1392 = vadd.f32 0.0, %v1391
      %v1393 = vpop.f32.mrb[0].mxu0
      %1394 = vmatprep.mubr.f32.mxu0 0.0
      %1395 = vmatmul.mubr.f32.gmra.mrb[0].mxu0 %v1160
      %v1396 = vpop.f32.mrb[0].mxu0
      %v1397 = vadd.f32 0.0, %v1396
      %v1398 = vpop.f32.mrb[0].mxu0
      %1399 = vmatprep.mubr.f32.mxu0 0.0
      %1400 = vmatmul.mubr.f32.gmra.mrb[0].mxu0 %v1163
      %v1401 = vpop.f32.mrb[0].mxu0
      %v1402 = vadd.f32 0.0, %v1401
      %v1403 = vpop.f32.mrb[0].mxu0
      %1404 = vmatprep.mubr.f32.mxu0 0.0
      %1405 = vmatmul.mubr.f32.gmra.mrb[0].mxu0 %v1166
      %v1406 = vpop.f32.mrb[0].mxu0
      %v1407 = vadd.f32 0.0, %v1406
      %v1408 = vpop.f32.mrb[0].mxu0
      %1409 = vmatprep.mubr.f32.mxu0 0.0
      %1410 = vmatmul.mubr.f32.gmra.mrb[0].mxu0 %v1169
      %v1411 = vpop.f32.mrb[0].mxu0
      %v1412 = vadd.f32 0.0, %v1411
      %v1413 = vpop.f32.mrb[0].mxu0
      %1414 = vmatprep.mubr.f32.mxu0 0.0
      %1415 = vmatmul.mubr.f32.gmra.mrb[0].mxu0 %v1172
      %v1416 = vpop.f32.mrb[0].mxu0
      %v1417 = vadd.f32 0.0, %v1416
      %v1418 = vpop.f32.mrb[0].mxu0
      %1419 = vmatprep.mubr.f32.mxu0 0.0
      %1420 = vmatmul.mubr.f32.gmra.mrb[0].mxu0 %v1175
      %v1421 = vpop.f32.mrb[0].mxu0
      %v1422 = vadd.f32 0.0, %v1421
      %v1423 = vpop.f32.mrb[0].mxu0
      %1424 = vdwg.mxu0
      %v1425 = vadd.f32 %v853, %v1247
      %v1426 = vadd.f32 %v858, %v1252
      %v1427 = vadd.f32 %v863, %v1257
      %v1428 = vadd.f32 %v868, %v1262
      %v1429 = vadd.f32 %v873, %v1267
      %v1430 = vadd.f32 %v878, %v1272
      %v1431 = vadd.f32 %v883, %v1277
      %v1432 = vadd.f32 %v888, %v1282
      %v1433 = vadd.f32 %v893, %v1287
      %v1434 = vadd.f32 %v898, %v1292
      %v1435 = vadd.f32 %v903, %v1297
      %v1436 = vadd.f32 %v908, %v1302
      %v1437 = vadd.f32 %v913, %v1307
      %v1438 = vadd.f32 %v918, %v1312
      %v1439 = vadd.f32 %v923, %v1317
      %v1440 = vadd.f32 %v928, %v1322
      %v1441 = vadd.f32 %v933, %v1327
      %v1442 = vadd.f32 %v938, %v1332
      %v1443 = vadd.f32 %v943, %v1337
      %v1444 = vadd.f32 %v948, %v1342
      %v1445 = vadd.f32 %v953, %v1347
      %v1446 = vadd.f32 %v958, %v1352
      %v1447 = vadd.f32 %v963, %v1357
      %v1448 = vadd.f32 %v968, %v1362
      %v1449 = vadd.f32 %v973, %v1367
      %v1450 = vadd.f32 %v978, %v1372
      %v1451 = vadd.f32 %v983, %v1377
      %v1452 = vadd.f32 %v988, %v1382
      %v1453 = vadd.f32 %v993, %v1387
      %v1454 = vadd.f32 %v998, %v1392
      %v1455 = vadd.f32 %v1003, %v1397
      %v1456 = vadd.f32 %v1008, %v1402
      %v1457 = vadd.f32 %v1013, %v1407
      %v1458 = vadd.f32 %v1018, %v1412
      %v1459 = vadd.f32 %v1023, %v1417
      %v1460 = vadd.f32 %v1028, %v1422
      %v1461 = vld [vmem:[%s230 + $0x12] sm:$0xff]
      %v1462 = vld [vmem:[%s230 + $0x1a] sm:$0xff]
      %v1463 = vld [vmem:[%s230 + $0x22] sm:$0xff]
      %v1464 = vld [vmem:[%s230 + $0x2a] sm:$0xff]
      %v1465 = vld [vmem:[%s230 + $0x32] sm:$0xff]
      %v1466 = vld [vmem:[%s230 + $0x3a] sm:$0xff]
      %v1467 = vld [vmem:[%s230 + $0x42] sm:$0xff]
      %v1468 = vld [vmem:[%s230 + $0x4a] sm:$0xff]
      %v1469 = vld [vmem:[%s230 + $0x52] sm:$0xff]
      %v1470 = vld [vmem:[%s230 + $0x5a] sm:$0xff]
      %v1471 = vld [vmem:[%s230 + $0x62] sm:$0xff]
      %v1472 = vld [vmem:[%s230 + $0x6a] sm:$0xff]
      %v1473 = vld [vmem:[%s230 + $0x72] sm:$0xff]
      %v1474 = vld [vmem:[%s230 + $0x7a] sm:$0xff]
      %v1475 = vld [vmem:[%s230 + $0x82] sm:$0xff]
      %v1476 = vld [vmem:[%s230 + $0x8a] sm:$0xff]
      %v1477 = vld [vmem:[%s230 + $0x92] sm:$0xff]
      %v1478 = vld [vmem:[%s230 + $0x9a] sm:$0xff]
      %v1479 = vld [vmem:[%s230 + $0xa2] sm:$0xff]
      %v1480 = vld [vmem:[%s230 + $0xaa] sm:$0xff]
      %v1481 = vld [vmem:[%s230 + $0xb2] sm:$0xff]
      %v1482 = vld [vmem:[%s230 + $0xba] sm:$0xff]
      %v1483 = vld [vmem:[%s230 + $0xc2] sm:$0xff]
      %v1484 = vld [vmem:[%s230 + $0xca] sm:$0xff]
      %v1485 = vld [vmem:[%s230 + $0xd2] sm:$0xff]
      %v1486 = vld [vmem:[%s230 + $0xda] sm:$0xff]
      %v1487 = vld [vmem:[%s230 + $0xe2] sm:$0xff]
      %v1488 = vld [vmem:[%s230 + $0xea] sm:$0xff]
      %v1489 = vld [vmem:[%s230 + $0xf2] sm:$0xff]
      %v1490 = vld [vmem:[%s230 + $0xfa] sm:$0xff]
      %v1491 = vld [vmem:[%s230 + $0x102] sm:$0xff]
      %v1492 = vld [vmem:[%s230 + $0x10a] sm:$0xff]
      %v1493 = vld [vmem:[%s230 + $0x112] sm:$0xff]
      %v1494 = vld [vmem:[%s230 + $0x11a] sm:$0xff]
      %v1495 = vld [vmem:[%s230 + $0x122] sm:$0xff]
      %v1496 = vld [vmem:[%s230 + $0x12a] sm:$0xff]
      %s1497 = scalar_lea.vmem %s1, 12
      %v1498 = vld [vmem:[%s1497] sm:$0xf]
      %v1500 = vsel %vm317, %v1461, 0
      %v1503 = vsel %vm317, %v1462, 0
      %v1506 = vsel %vm317, %v1463, 0
      %v1509 = vsel %vm317, %v1464, 0
      %v1512 = vsel %vm317, %v1465, 0
      %v1515 = vsel %vm317, %v1466, 0
      %v1518 = vsel %vm317, %v1467, 0
      %v1521 = vsel %vm317, %v1468, 0
      %v1524 = vsel %vm317, %v1469, 0
      %v1527 = vsel %vm317, %v1470, 0
      %v1530 = vsel %vm317, %v1471, 0
      %v1533 = vsel %vm317, %v1472, 0
      %v1536 = vsel %vm317, %v1473, 0
      %v1539 = vsel %vm317, %v1474, 0
      %v1542 = vsel %vm317, %v1475, 0
      %v1545 = vsel %vm317, %v1476, 0
      %v1548 = vsel %vm317, %v1477, 0
      %v1551 = vsel %vm317, %v1478, 0
      %v1554 = vsel %vm317, %v1479, 0
      %v1557 = vsel %vm317, %v1480, 0
      %v1560 = vsel %vm317, %v1481, 0
      %v1563 = vsel %vm317, %v1482, 0
      %v1566 = vsel %vm317, %v1483, 0
      %v1569 = vsel %vm317, %v1484, 0
      %v1572 = vsel %vm317, %v1485, 0
      %v1575 = vsel %vm317, %v1486, 0
      %v1578 = vsel %vm317, %v1487, 0
      %v1581 = vsel %vm317, %v1488, 0
      %v1584 = vsel %vm317, %v1489, 0
      %v1587 = vsel %vm317, %v1490, 0
      %v1590 = vsel %vm317, %v1491, 0
      %v1593 = vsel %vm317, %v1492, 0
      %v1596 = vsel %vm317, %v1493, 0
      %v1599 = vsel %vm317, %v1494, 0
      %v1602 = vsel %vm317, %v1495, 0
      %v1605 = vsel %vm317, %v1496, 0
      %v1608 = vsel %vm426, %v1498, 0
      %1610 = vmatprep.subr.mxu0 0.0
      %1611 = vmatpush1.msra.mxu0 %v1608
      %1612 = vmatprep.subr.mxu0 0.0
      %1613 = vmatpush1.msra.mxu0 0.0
      %1614 = vmatprep.subr.mxu0 0.0
      %1615 = vmatpush1.msra.mxu0 0.0
      %1616 = vmatprep.subr.mxu0 0.0
      %1617 = vmatpush1.msra.mxu0 0.0
      %1618 = vmatprep.subr.mxu0 0.0
      %1619 = vmatpush1.msra.mxu0 0.0
      %1620 = vmatprep.subr.mxu0 0.0
      %1621 = vmatpush1.msra.mxu0 0.0
      %1622 = vmatprep.subr.mxu0 0.0
      %1623 = vmatpush1.msra.mxu0 0.0
      %1624 = vmatprep.subr.mxu0 0.0
      %1625 = vmatpush1.msra.mxu0 0.0
      %1626 = vmatprep.subr.mxu0 0.0
      %1627 = vmatpush1.msra.mxu0 0.0
      %1628 = vmatprep.subr.mxu0 0.0
      %1629 = vmatpush1.msra.mxu0 0.0
      %1630 = vmatprep.subr.mxu0 0.0
      %1631 = vmatpush1.msra.mxu0 0.0
      %1632 = vmatprep.subr.mxu0 0.0
      %1633 = vmatpush1.msra.mxu0 0.0
      %1634 = vmatprep.subr.mxu0 0.0
      %1635 = vmatpush1.msra.mxu0 0.0
      %1636 = vmatprep.subr.mxu0 0.0
      %1637 = vmatpush1.msra.mxu0 0.0
      %1638 = vmatprep.subr.mxu0 0.0
      %1639 = vmatpush1.msra.mxu0 0.0
      %1640 = vmatprep.subr.mxu0 0.0
      %1641 = vmatpush1.msra.mxu0 0.0
      %1642 = vmatprep.subr.mxu0 0.0
      %1643 = vmatpush1.msra.mxu0 0.0
      %1644 = vmatprep.subr.mxu0 0.0
      %1645 = vmatpush1.msra.mxu0 0.0
      %1646 = vmatprep.subr.mxu0 0.0
      %1647 = vmatpush1.msra.mxu0 0.0
      %1648 = vmatprep.subr.mxu0 0.0
      %1649 = vmatpush1.msra.mxu0 0.0
      %1650 = vmatprep.subr.mxu0 0.0
      %1651 = vmatpush1.msra.mxu0 0.0
      %1652 = vmatprep.subr.mxu0 0.0
      %1653 = vmatpush1.msra.mxu0 0.0
      %1654 = vmatprep.subr.mxu0 0.0
      %1655 = vmatpush1.msra.mxu0 0.0
      %1656 = vmatprep.subr.mxu0 0.0
      %1657 = vmatpush1.msra.mxu0 0.0
      %1658 = vmatprep.subr.mxu0 0.0
      %1659 = vmatpush1.msra.mxu0 0.0
      %1660 = vmatprep.subr.mxu0 0.0
      %1661 = vmatpush1.msra.mxu0 0.0
      %1662 = vmatprep.subr.mxu0 0.0
      %1663 = vmatpush1.msra.mxu0 0.0
      %1664 = vmatprep.subr.mxu0 0.0
      %1665 = vmatpush1.msra.mxu0 0.0
      %1666 = vmatprep.subr.mxu0 0.0
      %1667 = vmatpush1.msra.mxu0 0.0
      %1668 = vmatprep.subr.mxu0 0.0
      %1669 = vmatpush1.msra.mxu0 0.0
      %1670 = vmatprep.subr.mxu0 0.0
      %1671 = vmatpush1.msra.mxu0 0.0
      %1672 = vmatprep.subr.mxu0 0.0
      %1673 = vmatpush1.msra.mxu0 0.0
      %1674 = vmatprep.mubr.f32.mxu0 0.0
      %1675 = vmatmul.mubr.f32.gmra.mrb[0].mxu0 %v1500
      %v1676 = vpop.f32.mrb[0].mxu0
      %v1677 = vadd.f32 0.0, %v1676
      %v1678 = vpop.f32.mrb[0].mxu0
      %1679 = vmatprep.mubr.f32.mxu0 0.0
      %1680 = vmatmul.mubr.f32.gmra.mrb[0].mxu0 %v1503
      %v1681 = vpop.f32.mrb[0].mxu0
      %v1682 = vadd.f32 0.0, %v1681
      %v1683 = vpop.f32.mrb[0].mxu0
      %1684 = vmatprep.mubr.f32.mxu0 0.0
      %1685 = vmatmul.mubr.f32.gmra.mrb[0].mxu0 %v1506
      %v1686 = vpop.f32.mrb[0].mxu0
      %v1687 = vadd.f32 0.0, %v1686
      %v1688 = vpop.f32.mrb[0].mxu0
      %1689 = vmatprep.mubr.f32.mxu0 0.0
      %1690 = vmatmul.mubr.f32.gmra.mrb[0].mxu0 %v1509
      %v1691 = vpop.f32.mrb[0].mxu0
      %v1692 = vadd.f32 0.0, %v1691
      %v1693 = vpop.f32.mrb[0].mxu0
      %1694 = vmatprep.mubr.f32.mxu0 0.0
      %1695 = vmatmul.mubr.f32.gmra.mrb[0].mxu0 %v1512
      %v1696 = vpop.f32.mrb[0].mxu0
      %v1697 = vadd.f32 0.0, %v1696
      %v1698 = vpop.f32.mrb[0].mxu0
      %1699 = vmatprep.mubr.f32.mxu0 0.0
      %1700 = vmatmul.mubr.f32.gmra.mrb[0].mxu0 %v1515
      %v1701 = vpop.f32.mrb[0].mxu0
      %v1702 = vadd.f32 0.0, %v1701
      %v1703 = vpop.f32.mrb[0].mxu0
      %1704 = vmatprep.mubr.f32.mxu0 0.0
      %1705 = vmatmul.mubr.f32.gmra.mrb[0].mxu0 %v1518
      %v1706 = vpop.f32.mrb[0].mxu0
      %v1707 = vadd.f32 0.0, %v1706
      %v1708 = vpop.f32.mrb[0].mxu0
      %1709 = vmatprep.mubr.f32.mxu0 0.0
      %1710 = vmatmul.mubr.f32.gmra.mrb[0].mxu0 %v1521
      %v1711 = vpop.f32.mrb[0].mxu0
      %v1712 = vadd.f32 0.0, %v1711
      %v1713 = vpop.f32.mrb[0].mxu0
      %1714 = vmatprep.mubr.f32.mxu0 0.0
      %1715 = vmatmul.mubr.f32.gmra.mrb[0].mxu0 %v1524
      %v1716 = vpop.f32.mrb[0].mxu0
      %v1717 = vadd.f32 0.0, %v1716
      %v1718 = vpop.f32.mrb[0].mxu0
      %1719 = vmatprep.mubr.f32.mxu0 0.0
      %1720 = vmatmul.mubr.f32.gmra.mrb[0].mxu0 %v1527
      %v1721 = vpop.f32.mrb[0].mxu0
      %v1722 = vadd.f32 0.0, %v1721
      %v1723 = vpop.f32.mrb[0].mxu0
      %1724 = vmatprep.mubr.f32.mxu0 0.0
      %1725 = vmatmul.mubr.f32.gmra.mrb[0].mxu0 %v1530
      %v1726 = vpop.f32.mrb[0].mxu0
      %v1727 = vadd.f32 0.0, %v1726
      %v1728 = vpop.f32.mrb[0].mxu0
      %1729 = vmatprep.mubr.f32.mxu0 0.0
      %1730 = vmatmul.mubr.f32.gmra.mrb[0].mxu0 %v1533
      %v1731 = vpop.f32.mrb[0].mxu0
      %v1732 = vadd.f32 0.0, %v1731
      %v1733 = vpop.f32.mrb[0].mxu0
      %1734 = vmatprep.mubr.f32.mxu0 0.0
      %1735 = vmatmul.mubr.f32.gmra.mrb[0].mxu0 %v1536
      %v1736 = vpop.f32.mrb[0].mxu0
      %v1737 = vadd.f32 0.0, %v1736
      %v1738 = vpop.f32.mrb[0].mxu0
      %1739 = vmatprep.mubr.f32.mxu0 0.0
      %1740 = vmatmul.mubr.f32.gmra.mrb[0].mxu0 %v1539
      %v1741 = vpop.f32.mrb[0].mxu0
      %v1742 = vadd.f32 0.0, %v1741
      %v1743 = vpop.f32.mrb[0].mxu0
      %1744 = vmatprep.mubr.f32.mxu0 0.0
      %1745 = vmatmul.mubr.f32.gmra.mrb[0].mxu0 %v1542
      %v1746 = vpop.f32.mrb[0].mxu0
      %v1747 = vadd.f32 0.0, %v1746
      %v1748 = vpop.f32.mrb[0].mxu0
      %1749 = vmatprep.mubr.f32.mxu0 0.0
      %1750 = vmatmul.mubr.f32.gmra.mrb[0].mxu0 %v1545
      %v1751 = vpop.f32.mrb[0].mxu0
      %v1752 = vadd.f32 0.0, %v1751
      %v1753 = vpop.f32.mrb[0].mxu0
      %1754 = vmatprep.mubr.f32.mxu0 0.0
      %1755 = vmatmul.mubr.f32.gmra.mrb[0].mxu0 %v1548
      %v1756 = vpop.f32.mrb[0].mxu0
      %v1757 = vadd.f32 0.0, %v1756
      %v1758 = vpop.f32.mrb[0].mxu0
      %1759 = vmatprep.mubr.f32.mxu0 0.0
      %1760 = vmatmul.mubr.f32.gmra.mrb[0].mxu0 %v1551
      %v1761 = vpop.f32.mrb[0].mxu0
      %v1762 = vadd.f32 0.0, %v1761
      %v1763 = vpop.f32.mrb[0].mxu0
      %1764 = vmatprep.mubr.f32.mxu0 0.0
      %1765 = vmatmul.mubr.f32.gmra.mrb[0].mxu0 %v1554
      %v1766 = vpop.f32.mrb[0].mxu0
      %v1767 = vadd.f32 0.0, %v1766
      %v1768 = vpop.f32.mrb[0].mxu0
      %1769 = vmatprep.mubr.f32.mxu0 0.0
      %1770 = vmatmul.mubr.f32.gmra.mrb[0].mxu0 %v1557
      %v1771 = vpop.f32.mrb[0].mxu0
      %v1772 = vadd.f32 0.0, %v1771
      %v1773 = vpop.f32.mrb[0].mxu0
      %1774 = vmatprep.mubr.f32.mxu0 0.0
      %1775 = vmatmul.mubr.f32.gmra.mrb[0].mxu0 %v1560
      %v1776 = vpop.f32.mrb[0].mxu0
      %v1777 = vadd.f32 0.0, %v1776
      %v1778 = vpop.f32.mrb[0].mxu0
      %1779 = vmatprep.mubr.f32.mxu0 0.0
      %1780 = vmatmul.mubr.f32.gmra.mrb[0].mxu0 %v1563
      %v1781 = vpop.f32.mrb[0].mxu0
      %v1782 = vadd.f32 0.0, %v1781
      %v1783 = vpop.f32.mrb[0].mxu0
      %1784 = vmatprep.mubr.f32.mxu0 0.0
      %1785 = vmatmul.mubr.f32.gmra.mrb[0].mxu0 %v1566
      %v1786 = vpop.f32.mrb[0].mxu0
      %v1787 = vadd.f32 0.0, %v1786
      %v1788 = vpop.f32.mrb[0].mxu0
      %1789 = vmatprep.mubr.f32.mxu0 0.0
      %1790 = vmatmul.mubr.f32.gmra.mrb[0].mxu0 %v1569
      %v1791 = vpop.f32.mrb[0].mxu0
      %v1792 = vadd.f32 0.0, %v1791
      %v1793 = vpop.f32.mrb[0].mxu0
      %1794 = vmatprep.mubr.f32.mxu0 0.0
      %1795 = vmatmul.mubr.f32.gmra.mrb[0].mxu0 %v1572
      %v1796 = vpop.f32.mrb[0].mxu0
      %v1797 = vadd.f32 0.0, %v1796
      %v1798 = vpop.f32.mrb[0].mxu0
      %1799 = vmatprep.mubr.f32.mxu0 0.0
      %1800 = vmatmul.mubr.f32.gmra.mrb[0].mxu0 %v1575
      %v1801 = vpop.f32.mrb[0].mxu0
      %v1802 = vadd.f32 0.0, %v1801
      %v1803 = vpop.f32.mrb[0].mxu0
      %1804 = vmatprep.mubr.f32.mxu0 0.0
      %1805 = vmatmul.mubr.f32.gmra.mrb[0].mxu0 %v1578
      %v1806 = vpop.f32.mrb[0].mxu0
      %v1807 = vadd.f32 0.0, %v1806
      %v1808 = vpop.f32.mrb[0].mxu0
      %1809 = vmatprep.mubr.f32.mxu0 0.0
      %1810 = vmatmul.mubr.f32.gmra.mrb[0].mxu0 %v1581
      %v1811 = vpop.f32.mrb[0].mxu0
      %v1812 = vadd.f32 0.0, %v1811
      %v1813 = vpop.f32.mrb[0].mxu0
      %1814 = vmatprep.mubr.f32.mxu0 0.0
      %1815 = vmatmul.mubr.f32.gmra.mrb[0].mxu0 %v1584
      %v1816 = vpop.f32.mrb[0].mxu0
      %v1817 = vadd.f32 0.0, %v1816
      %v1818 = vpop.f32.mrb[0].mxu0
      %1819 = vmatprep.mubr.f32.mxu0 0.0
      %1820 = vmatmul.mubr.f32.gmra.mrb[0].mxu0 %v1587
      %v1821 = vpop.f32.mrb[0].mxu0
      %v1822 = vadd.f32 0.0, %v1821
      %v1823 = vpop.f32.mrb[0].mxu0
      %1824 = vmatprep.mubr.f32.mxu0 0.0
      %1825 = vmatmul.mubr.f32.gmra.mrb[0].mxu0 %v1590
      %v1826 = vpop.f32.mrb[0].mxu0
      %v1827 = vadd.f32 0.0, %v1826
      %v1828 = vpop.f32.mrb[0].mxu0
      %1829 = vmatprep.mubr.f32.mxu0 0.0
      %1830 = vmatmul.mubr.f32.gmra.mrb[0].mxu0 %v1593
      %v1831 = vpop.f32.mrb[0].mxu0
      %v1832 = vadd.f32 0.0, %v1831
      %v1833 = vpop.f32.mrb[0].mxu0
      %1834 = vmatprep.mubr.f32.mxu0 0.0
      %1835 = vmatmul.mubr.f32.gmra.mrb[0].mxu0 %v1596
      %v1836 = vpop.f32.mrb[0].mxu0
      %v1837 = vadd.f32 0.0, %v1836
      %v1838 = vpop.f32.mrb[0].mxu0
      %1839 = vmatprep.mubr.f32.mxu0 0.0
      %1840 = vmatmul.mubr.f32.gmra.mrb[0].mxu0 %v1599
      %v1841 = vpop.f32.mrb[0].mxu0
      %v1842 = vadd.f32 0.0, %v1841
      %v1843 = vpop.f32.mrb[0].mxu0
      %1844 = vmatprep.mubr.f32.mxu0 0.0
      %1845 = vmatmul.mubr.f32.gmra.mrb[0].mxu0 %v1602
      %v1846 = vpop.f32.mrb[0].mxu0
      %v1847 = vadd.f32 0.0, %v1846
      %v1848 = vpop.f32.mrb[0].mxu0
      %1849 = vmatprep.mubr.f32.mxu0 0.0
      %1850 = vmatmul.mubr.f32.gmra.mrb[0].mxu0 %v1605
      %v1851 = vpop.f32.mrb[0].mxu0
      %v1852 = vadd.f32 0.0, %v1851
      %v1853 = vpop.f32.mrb[0].mxu0
      %1854 = vdwg.mxu0
      %v1855 = vadd.f32 %v1425, %v1677
      %v1856 = vadd.f32 %v1426, %v1682
      %v1857 = vadd.f32 %v1427, %v1687
      %v1858 = vadd.f32 %v1428, %v1692
      %v1859 = vadd.f32 %v1429, %v1697
      %v1860 = vadd.f32 %v1430, %v1702
      %v1861 = vadd.f32 %v1431, %v1707
      %v1862 = vadd.f32 %v1432, %v1712
      %v1863 = vadd.f32 %v1433, %v1717
      %v1864 = vadd.f32 %v1434, %v1722
      %v1865 = vadd.f32 %v1435, %v1727
      %v1866 = vadd.f32 %v1436, %v1732
      %v1867 = vadd.f32 %v1437, %v1737
      %v1868 = vadd.f32 %v1438, %v1742
      %v1869 = vadd.f32 %v1439, %v1747
      %v1870 = vadd.f32 %v1440, %v1752
      %v1871 = vadd.f32 %v1441, %v1757
      %v1872 = vadd.f32 %v1442, %v1762
      %v1873 = vadd.f32 %v1443, %v1767
      %v1874 = vadd.f32 %v1444, %v1772
      %v1875 = vadd.f32 %v1445, %v1777
      %v1876 = vadd.f32 %v1446, %v1782
      %v1877 = vadd.f32 %v1447, %v1787
      %v1878 = vadd.f32 %v1448, %v1792
      %v1879 = vadd.f32 %v1449, %v1797
      %v1880 = vadd.f32 %v1450, %v1802
      %v1881 = vadd.f32 %v1451, %v1807
      %v1882 = vadd.f32 %v1452, %v1812
      %v1883 = vadd.f32 %v1453, %v1817
      %v1884 = vadd.f32 %v1454, %v1822
      %v1885 = vadd.f32 %v1455, %v1827
      %v1886 = vadd.f32 %v1456, %v1832
      %v1887 = vadd.f32 %v1457, %v1837
      %v1888 = vadd.f32 %v1458, %v1842
      %v1889 = vadd.f32 %v1459, %v1847
      %v1890 = vadd.f32 %v1460, %v1852
      %v1891 = vld [vmem:[%s230 + $0x13] sm:$0xff]
      %v1892 = vld [vmem:[%s230 + $0x1b] sm:$0xff]
      %v1893 = vld [vmem:[%s230 + $0x23] sm:$0xff]
      %v1894 = vld [vmem:[%s230 + $0x2b] sm:$0xff]
      %v1895 = vld [vmem:[%s230 + $0x33] sm:$0xff]
      %v1896 = vld [vmem:[%s230 + $0x3b] sm:$0xff]
      %v1897 = vld [vmem:[%s230 + $0x43] sm:$0xff]
      %v1898 = vld [vmem:[%s230 + $0x4b] sm:$0xff]
      %v1899 = vld [vmem:[%s230 + $0x53] sm:$0xff]
      %v1900 = vld [vmem:[%s230 + $0x5b] sm:$0xff]
      %v1901 = vld [vmem:[%s230 + $0x63] sm:$0xff]
      %v1902 = vld [vmem:[%s230 + $0x6b] sm:$0xff]
      %v1903 = vld [vmem:[%s230 + $0x73] sm:$0xff]
      %v1904 = vld [vmem:[%s230 + $0x7b] sm:$0xff]
      %v1905 = vld [vmem:[%s230 + $0x83] sm:$0xff]
      %v1906 = vld [vmem:[%s230 + $0x8b] sm:$0xff]
      %v1907 = vld [vmem:[%s230 + $0x93] sm:$0xff]
      %v1908 = vld [vmem:[%s230 + $0x9b] sm:$0xff]
      %v1909 = vld [vmem:[%s230 + $0xa3] sm:$0xff]
      %v1910 = vld [vmem:[%s230 + $0xab] sm:$0xff]
      %v1911 = vld [vmem:[%s230 + $0xb3] sm:$0xff]
      %v1912 = vld [vmem:[%s230 + $0xbb] sm:$0xff]
      %v1913 = vld [vmem:[%s230 + $0xc3] sm:$0xff]
      %v1914 = vld [vmem:[%s230 + $0xcb] sm:$0xff]
      %v1915 = vld [vmem:[%s230 + $0xd3] sm:$0xff]
      %v1916 = vld [vmem:[%s230 + $0xdb] sm:$0xff]
      %v1917 = vld [vmem:[%s230 + $0xe3] sm:$0xff]
      %v1918 = vld [vmem:[%s230 + $0xeb] sm:$0xff]
      %v1919 = vld [vmem:[%s230 + $0xf3] sm:$0xff]
      %v1920 = vld [vmem:[%s230 + $0xfb] sm:$0xff]
      %v1921 = vld [vmem:[%s230 + $0x103] sm:$0xff]
      %v1922 = vld [vmem:[%s230 + $0x10b] sm:$0xff]
      %v1923 = vld [vmem:[%s230 + $0x113] sm:$0xff]
      %v1924 = vld [vmem:[%s230 + $0x11b] sm:$0xff]
      %v1925 = vld [vmem:[%s230 + $0x123] sm:$0xff]
      %v1926 = vld [vmem:[%s230 + $0x12b] sm:$0xff]
      %s1927 = scalar_lea.vmem %s1, 16
      %v1928 = vld [vmem:[%s1927] sm:$0xf]
      %v1930 = vsel %vm317, %v1891, 0
      %v1933 = vsel %vm317, %v1892, 0
      %v1936 = vsel %vm317, %v1893, 0
      %v1939 = vsel %vm317, %v1894, 0
      %v1942 = vsel %vm317, %v1895, 0
      %v1945 = vsel %vm317, %v1896, 0
      %v1948 = vsel %vm317, %v1897, 0
      %v1951 = vsel %vm317, %v1898, 0
      %v1954 = vsel %vm317, %v1899, 0
      %v1957 = vsel %vm317, %v1900, 0
      %v1960 = vsel %vm317, %v1901, 0
      %v1963 = vsel %vm317, %v1902, 0
      %v1966 = vsel %vm317, %v1903, 0
      %v1969 = vsel %vm317, %v1904, 0
      %v1972 = vsel %vm317, %v1905, 0
      %v1975 = vsel %vm317, %v1906, 0
      %v1978 = vsel %vm317, %v1907, 0
      %v1981 = vsel %vm317, %v1908, 0
      %v1984 = vsel %vm317, %v1909, 0
      %v1987 = vsel %vm317, %v1910, 0
      %v1990 = vsel %vm317, %v1911, 0
      %v1993 = vsel %vm317, %v1912, 0
      %v1996 = vsel %vm317, %v1913, 0
      %v1999 = vsel %vm317, %v1914, 0
      %v2002 = vsel %vm317, %v1915, 0
      %v2005 = vsel %vm317, %v1916, 0
      %v2008 = vsel %vm317, %v1917, 0
      %v2011 = vsel %vm317, %v1918, 0
      %v2014 = vsel %vm317, %v1919, 0
      %v2017 = vsel %vm317, %v1920, 0
      %v2020 = vsel %vm317, %v1921, 0
      %v2023 = vsel %vm317, %v1922, 0
      %v2026 = vsel %vm317, %v1923, 0
      %v2029 = vsel %vm317, %v1924, 0
      %v2032 = vsel %vm317, %v1925, 0
      %v2035 = vsel %vm317, %v1926, 0
      %v2038 = vsel %vm426, %v1928, 0
      %2040 = vmatprep.subr.mxu0 0.0
      %2041 = vmatpush1.msra.mxu0 %v2038
      %2042 = vmatprep.subr.mxu0 0.0
      %2043 = vmatpush1.msra.mxu0 0.0
      %2044 = vmatprep.subr.mxu0 0.0
      %2045 = vmatpush1.msra.mxu0 0.0
      %2046 = vmatprep.subr.mxu0 0.0
      %2047 = vmatpush1.msra.mxu0 0.0
      %2048 = vmatprep.subr.mxu0 0.0
      %2049 = vmatpush1.msra.mxu0 0.0
      %2050 = vmatprep.subr.mxu0 0.0
      %2051 = vmatpush1.msra.mxu0 0.0
      %2052 = vmatprep.subr.mxu0 0.0
      %2053 = vmatpush1.msra.mxu0 0.0
      %2054 = vmatprep.subr.mxu0 0.0
      %2055 = vmatpush1.msra.mxu0 0.0
      %2056 = vmatprep.subr.mxu0 0.0
      %2057 = vmatpush1.msra.mxu0 0.0
      %2058 = vmatprep.subr.mxu0 0.0
      %2059 = vmatpush1.msra.mxu0 0.0
      %2060 = vmatprep.subr.mxu0 0.0
      %2061 = vmatpush1.msra.mxu0 0.0
      %2062 = vmatprep.subr.mxu0 0.0
      %2063 = vmatpush1.msra.mxu0 0.0
      %2064 = vmatprep.subr.mxu0 0.0
      %2065 = vmatpush1.msra.mxu0 0.0
      %2066 = vmatprep.subr.mxu0 0.0
      %2067 = vmatpush1.msra.mxu0 0.0
      %2068 = vmatprep.subr.mxu0 0.0
      %2069 = vmatpush1.msra.mxu0 0.0
      %2070 = vmatprep.subr.mxu0 0.0
      %2071 = vmatpush1.msra.mxu0 0.0
      %2072 = vmatprep.subr.mxu0 0.0
      %2073 = vmatpush1.msra.mxu0 0.0
      %2074 = vmatprep.subr.mxu0 0.0
      %2075 = vmatpush1.msra.mxu0 0.0
      %2076 = vmatprep.subr.mxu0 0.0
      %2077 = vmatpush1.msra.mxu0 0.0
      %2078 = vmatprep.subr.mxu0 0.0
      %2079 = vmatpush1.msra.mxu0 0.0
      %2080 = vmatprep.subr.mxu0 0.0
      %2081 = vmatpush1.msra.mxu0 0.0
      %2082 = vmatprep.subr.mxu0 0.0
      %2083 = vmatpush1.msra.mxu0 0.0
      %2084 = vmatprep.subr.mxu0 0.0
      %2085 = vmatpush1.msra.mxu0 0.0
      %2086 = vmatprep.subr.mxu0 0.0
      %2087 = vmatpush1.msra.mxu0 0.0
      %2088 = vmatprep.subr.mxu0 0.0
      %2089 = vmatpush1.msra.mxu0 0.0
      %2090 = vmatprep.subr.mxu0 0.0
      %2091 = vmatpush1.msra.mxu0 0.0
      %2092 = vmatprep.subr.mxu0 0.0
      %2093 = vmatpush1.msra.mxu0 0.0
      %2094 = vmatprep.subr.mxu0 0.0
      %2095 = vmatpush1.msra.mxu0 0.0
      %2096 = vmatprep.subr.mxu0 0.0
      %2097 = vmatpush1.msra.mxu0 0.0
      %2098 = vmatprep.subr.mxu0 0.0
      %2099 = vmatpush1.msra.mxu0 0.0
      %2100 = vmatprep.subr.mxu0 0.0
      %2101 = vmatpush1.msra.mxu0 0.0
      %2102 = vmatprep.subr.mxu0 0.0
      %2103 = vmatpush1.msra.mxu0 0.0
      %2104 = vmatprep.mubr.f32.mxu0 0.0
      %2105 = vmatmul.mubr.f32.gmra.mrb[0].mxu0 %v1930
      %v2106 = vpop.f32.mrb[0].mxu0
      %v2107 = vadd.f32 0.0, %v2106
      %v2108 = vpop.f32.mrb[0].mxu0
      %2109 = vmatprep.mubr.f32.mxu0 0.0
      %2110 = vmatmul.mubr.f32.gmra.mrb[0].mxu0 %v1933
      %v2111 = vpop.f32.mrb[0].mxu0
      %v2112 = vadd.f32 0.0, %v2111
      %v2113 = vpop.f32.mrb[0].mxu0
      %2114 = vmatprep.mubr.f32.mxu0 0.0
      %2115 = vmatmul.mubr.f32.gmra.mrb[0].mxu0 %v1936
      %v2116 = vpop.f32.mrb[0].mxu0
      %v2117 = vadd.f32 0.0, %v2116
      %v2118 = vpop.f32.mrb[0].mxu0
      %2119 = vmatprep.mubr.f32.mxu0 0.0
      %2120 = vmatmul.mubr.f32.gmra.mrb[0].mxu0 %v1939
      %v2121 = vpop.f32.mrb[0].mxu0
      %v2122 = vadd.f32 0.0, %v2121
      %v2123 = vpop.f32.mrb[0].mxu0
      %2124 = vmatprep.mubr.f32.mxu0 0.0
      %2125 = vmatmul.mubr.f32.gmra.mrb[0].mxu0 %v1942
      %v2126 = vpop.f32.mrb[0].mxu0
      %v2127 = vadd.f32 0.0, %v2126
      %v2128 = vpop.f32.mrb[0].mxu0
      %2129 = vmatprep.mubr.f32.mxu0 0.0
      %2130 = vmatmul.mubr.f32.gmra.mrb[0].mxu0 %v1945
      %v2131 = vpop.f32.mrb[0].mxu0
      %v2132 = vadd.f32 0.0, %v2131
      %v2133 = vpop.f32.mrb[0].mxu0
      %2134 = vmatprep.mubr.f32.mxu0 0.0
      %2135 = vmatmul.mubr.f32.gmra.mrb[0].mxu0 %v1948
      %v2136 = vpop.f32.mrb[0].mxu0
      %v2137 = vadd.f32 0.0, %v2136
      %v2138 = vpop.f32.mrb[0].mxu0
      %2139 = vmatprep.mubr.f32.mxu0 0.0
      %2140 = vmatmul.mubr.f32.gmra.mrb[0].mxu0 %v1951
      %v2141 = vpop.f32.mrb[0].mxu0
      %v2142 = vadd.f32 0.0, %v2141
      %v2143 = vpop.f32.mrb[0].mxu0
      %2144 = vmatprep.mubr.f32.mxu0 0.0
      %2145 = vmatmul.mubr.f32.gmra.mrb[0].mxu0 %v1954
      %v2146 = vpop.f32.mrb[0].mxu0
      %v2147 = vadd.f32 0.0, %v2146
      %v2148 = vpop.f32.mrb[0].mxu0
      %2149 = vmatprep.mubr.f32.mxu0 0.0
      %2150 = vmatmul.mubr.f32.gmra.mrb[0].mxu0 %v1957
      %v2151 = vpop.f32.mrb[0].mxu0
      %v2152 = vadd.f32 0.0, %v2151
      %v2153 = vpop.f32.mrb[0].mxu0
      %2154 = vmatprep.mubr.f32.mxu0 0.0
      %2155 = vmatmul.mubr.f32.gmra.mrb[0].mxu0 %v1960
      %v2156 = vpop.f32.mrb[0].mxu0
      %v2157 = vadd.f32 0.0, %v2156
      %v2158 = vpop.f32.mrb[0].mxu0
      %2159 = vmatprep.mubr.f32.mxu0 0.0
      %2160 = vmatmul.mubr.f32.gmra.mrb[0].mxu0 %v1963
      %v2161 = vpop.f32.mrb[0].mxu0
      %v2162 = vadd.f32 0.0, %v2161
      %v2163 = vpop.f32.mrb[0].mxu0
      %2164 = vmatprep.mubr.f32.mxu0 0.0
      %2165 = vmatmul.mubr.f32.gmra.mrb[0].mxu0 %v1966
      %v2166 = vpop.f32.mrb[0].mxu0
      %v2167 = vadd.f32 0.0, %v2166
      %v2168 = vpop.f32.mrb[0].mxu0
      %2169 = vmatprep.mubr.f32.mxu0 0.0
      %2170 = vmatmul.mubr.f32.gmra.mrb[0].mxu0 %v1969
      %v2171 = vpop.f32.mrb[0].mxu0
      %v2172 = vadd.f32 0.0, %v2171
      %v2173 = vpop.f32.mrb[0].mxu0
      %2174 = vmatprep.mubr.f32.mxu0 0.0
      %2175 = vmatmul.mubr.f32.gmra.mrb[0].mxu0 %v1972
      %v2176 = vpop.f32.mrb[0].mxu0
      %v2177 = vadd.f32 0.0, %v2176
      %v2178 = vpop.f32.mrb[0].mxu0
      %2179 = vmatprep.mubr.f32.mxu0 0.0
      %2180 = vmatmul.mubr.f32.gmra.mrb[0].mxu0 %v1975
      %v2181 = vpop.f32.mrb[0].mxu0
      %v2182 = vadd.f32 0.0, %v2181
      %v2183 = vpop.f32.mrb[0].mxu0
      %2184 = vmatprep.mubr.f32.mxu0 0.0
      %2185 = vmatmul.mubr.f32.gmra.mrb[0].mxu0 %v1978
      %v2186 = vpop.f32.mrb[0].mxu0
      %v2187 = vadd.f32 0.0, %v2186
      %v2188 = vpop.f32.mrb[0].mxu0
      %2189 = vmatprep.mubr.f32.mxu0 0.0
      %2190 = vmatmul.mubr.f32.gmra.mrb[0].mxu0 %v1981
      %v2191 = vpop.f32.mrb[0].mxu0
      %v2192 = vadd.f32 0.0, %v2191
      %v2193 = vpop.f32.mrb[0].mxu0
      %2194 = vmatprep.mubr.f32.mxu0 0.0
      %2195 = vmatmul.mubr.f32.gmra.mrb[0].mxu0 %v1984
      %v2196 = vpop.f32.mrb[0].mxu0
      %v2197 = vadd.f32 0.0, %v2196
      %v2198 = vpop.f32.mrb[0].mxu0
      %2199 = vmatprep.mubr.f32.mxu0 0.0
      %2200 = vmatmul.mubr.f32.gmra.mrb[0].mxu0 %v1987
      %v2201 = vpop.f32.mrb[0].mxu0
      %v2202 = vadd.f32 0.0, %v2201
      %v2203 = vpop.f32.mrb[0].mxu0
      %2204 = vmatprep.mubr.f32.mxu0 0.0
      %2205 = vmatmul.mubr.f32.gmra.mrb[0].mxu0 %v1990
      %v2206 = vpop.f32.mrb[0].mxu0
      %v2207 = vadd.f32 0.0, %v2206
      %v2208 = vpop.f32.mrb[0].mxu0
      %2209 = vmatprep.mubr.f32.mxu0 0.0
      %2210 = vmatmul.mubr.f32.gmra.mrb[0].mxu0 %v1993
      %v2211 = vpop.f32.mrb[0].mxu0
      %v2212 = vadd.f32 0.0, %v2211
      %v2213 = vpop.f32.mrb[0].mxu0
      %2214 = vmatprep.mubr.f32.mxu0 0.0
      %2215 = vmatmul.mubr.f32.gmra.mrb[0].mxu0 %v1996
      %v2216 = vpop.f32.mrb[0].mxu0
      %v2217 = vadd.f32 0.0, %v2216
      %v2218 = vpop.f32.mrb[0].mxu0
      %2219 = vmatprep.mubr.f32.mxu0 0.0
      %2220 = vmatmul.mubr.f32.gmra.mrb[0].mxu0 %v1999
      %v2221 = vpop.f32.mrb[0].mxu0
      %v2222 = vadd.f32 0.0, %v2221
      %v2223 = vpop.f32.mrb[0].mxu0
      %2224 = vmatprep.mubr.f32.mxu0 0.0
      %2225 = vmatmul.mubr.f32.gmra.mrb[0].mxu0 %v2002
      %v2226 = vpop.f32.mrb[0].mxu0
      %v2227 = vadd.f32 0.0, %v2226
      %v2228 = vpop.f32.mrb[0].mxu0
      %2229 = vmatprep.mubr.f32.mxu0 0.0
      %2230 = vmatmul.mubr.f32.gmra.mrb[0].mxu0 %v2005
      %v2231 = vpop.f32.mrb[0].mxu0
      %v2232 = vadd.f32 0.0, %v2231
      %v2233 = vpop.f32.mrb[0].mxu0
      %2234 = vmatprep.mubr.f32.mxu0 0.0
      %2235 = vmatmul.mubr.f32.gmra.mrb[0].mxu0 %v2008
      %v2236 = vpop.f32.mrb[0].mxu0
      %v2237 = vadd.f32 0.0, %v2236
      %v2238 = vpop.f32.mrb[0].mxu0
      %2239 = vmatprep.mubr.f32.mxu0 0.0
      %2240 = vmatmul.mubr.f32.gmra.mrb[0].mxu0 %v2011
      %v2241 = vpop.f32.mrb[0].mxu0
      %v2242 = vadd.f32 0.0, %v2241
      %v2243 = vpop.f32.mrb[0].mxu0
      %2244 = vmatprep.mubr.f32.mxu0 0.0
      %2245 = vmatmul.mubr.f32.gmra.mrb[0].mxu0 %v2014
      %v2246 = vpop.f32.mrb[0].mxu0
      %v2247 = vadd.f32 0.0, %v2246
      %v2248 = vpop.f32.mrb[0].mxu0
      %2249 = vmatprep.mubr.f32.mxu0 0.0
      %2250 = vmatmul.mubr.f32.gmra.mrb[0].mxu0 %v2017
      %v2251 = vpop.f32.mrb[0].mxu0
      %v2252 = vadd.f32 0.0, %v2251
      %v2253 = vpop.f32.mrb[0].mxu0
      %2254 = vmatprep.mubr.f32.mxu0 0.0
      %2255 = vmatmul.mubr.f32.gmra.mrb[0].mxu0 %v2020
      %v2256 = vpop.f32.mrb[0].mxu0
      %v2257 = vadd.f32 0.0, %v2256
      %v2258 = vpop.f32.mrb[0].mxu0
      %2259 = vmatprep.mubr.f32.mxu0 0.0
      %2260 = vmatmul.mubr.f32.gmra.mrb[0].mxu0 %v2023
      %v2261 = vpop.f32.mrb[0].mxu0
      %v2262 = vadd.f32 0.0, %v2261
      %v2263 = vpop.f32.mrb[0].mxu0
      %2264 = vmatprep.mubr.f32.mxu0 0.0
      %2265 = vmatmul.mubr.f32.gmra.mrb[0].mxu0 %v2026
      %v2266 = vpop.f32.mrb[0].mxu0
      %v2267 = vadd.f32 0.0, %v2266
      %v2268 = vpop.f32.mrb[0].mxu0
      %2269 = vmatprep.mubr.f32.mxu0 0.0
      %2270 = vmatmul.mubr.f32.gmra.mrb[0].mxu0 %v2029
      %v2271 = vpop.f32.mrb[0].mxu0
      %v2272 = vadd.f32 0.0, %v2271
      %v2273 = vpop.f32.mrb[0].mxu0
      %2274 = vmatprep.mubr.f32.mxu0 0.0
      %2275 = vmatmul.mubr.f32.gmra.mrb[0].mxu0 %v2032
      %v2276 = vpop.f32.mrb[0].mxu0
      %v2277 = vadd.f32 0.0, %v2276
      %v2278 = vpop.f32.mrb[0].mxu0
      %2279 = vmatprep.mubr.f32.mxu0 0.0
      %2280 = vmatmul.mubr.f32.gmra.mrb[0].mxu0 %v2035
      %v2281 = vpop.f32.mrb[0].mxu0
      %v2282 = vadd.f32 0.0, %v2281
      %v2283 = vpop.f32.mrb[0].mxu0
      %2284 = vdwg.mxu0
      %v2285 = vadd.f32 %v1855, %v2107
      %v2286 = vadd.f32 %v1856, %v2112
      %v2287 = vadd.f32 %v1857, %v2117
      %v2288 = vadd.f32 %v1858, %v2122
      %v2289 = vadd.f32 %v1859, %v2127
      %v2290 = vadd.f32 %v1860, %v2132
      %v2291 = vadd.f32 %v1861, %v2137
      %v2292 = vadd.f32 %v1862, %v2142
      %v2293 = vadd.f32 %v1863, %v2147
      %v2294 = vadd.f32 %v1864, %v2152
      %v2295 = vadd.f32 %v1865, %v2157
      %v2296 = vadd.f32 %v1866, %v2162
      %v2297 = vadd.f32 %v1867, %v2167
      %v2298 = vadd.f32 %v1868, %v2172
      %v2299 = vadd.f32 %v1869, %v2177
      %v2300 = vadd.f32 %v1870, %v2182
      %v2301 = vadd.f32 %v1871, %v2187
      %v2302 = vadd.f32 %v1872, %v2192
      %v2303 = vadd.f32 %v1873, %v2197
      %v2304 = vadd.f32 %v1874, %v2202
      %v2305 = vadd.f32 %v1875, %v2207
      %v2306 = vadd.f32 %v1876, %v2212
      %v2307 = vadd.f32 %v1877, %v2217
      %v2308 = vadd.f32 %v1878, %v2222
      %v2309 = vadd.f32 %v1879, %v2227
      %v2310 = vadd.f32 %v1880, %v2232
      %v2311 = vadd.f32 %v1881, %v2237
      %v2312 = vadd.f32 %v1882, %v2242
      %v2313 = vadd.f32 %v1883, %v2247
      %v2314 = vadd.f32 %v1884, %v2252
      %v2315 = vadd.f32 %v1885, %v2257
      %v2316 = vadd.f32 %v1886, %v2262
      %v2317 = vadd.f32 %v1887, %v2267
      %v2318 = vadd.f32 %v1888, %v2272
      %v2319 = vadd.f32 %v1889, %v2277
      %v2320 = vadd.f32 %v1890, %v2282
      %v2321 = vld [vmem:[%s230 + $0x14] sm:$0xff]
      %v2322 = vld [vmem:[%s230 + $0x1c] sm:$0xff]
      %v2323 = vld [vmem:[%s230 + $0x24] sm:$0xff]
      %v2324 = vld [vmem:[%s230 + $0x2c] sm:$0xff]
      %v2325 = vld [vmem:[%s230 + $0x34] sm:$0xff]
      %v2326 = vld [vmem:[%s230 + $0x3c] sm:$0xff]
      %v2327 = vld [vmem:[%s230 + $0x44] sm:$0xff]
      %v2328 = vld [vmem:[%s230 + $0x4c] sm:$0xff]
      %v2329 = vld [vmem:[%s230 + $0x54] sm:$0xff]
      %v2330 = vld [vmem:[%s230 + $0x5c] sm:$0xff]
      %v2331 = vld [vmem:[%s230 + $0x64] sm:$0xff]
      %v2332 = vld [vmem:[%s230 + $0x6c] sm:$0xff]
      %v2333 = vld [vmem:[%s230 + $0x74] sm:$0xff]
      %v2334 = vld [vmem:[%s230 + $0x7c] sm:$0xff]
      %v2335 = vld [vmem:[%s230 + $0x84] sm:$0xff]
      %v2336 = vld [vmem:[%s230 + $0x8c] sm:$0xff]
      %v2337 = vld [vmem:[%s230 + $0x94] sm:$0xff]
      %v2338 = vld [vmem:[%s230 + $0x9c] sm:$0xff]
      %v2339 = vld [vmem:[%s230 + $0xa4] sm:$0xff]
      %v2340 = vld [vmem:[%s230 + $0xac] sm:$0xff]
      %v2341 = vld [vmem:[%s230 + $0xb4] sm:$0xff]
      %v2342 = vld [vmem:[%s230 + $0xbc] sm:$0xff]
      %v2343 = vld [vmem:[%s230 + $0xc4] sm:$0xff]
      %v2344 = vld [vmem:[%s230 + $0xcc] sm:$0xff]
      %v2345 = vld [vmem:[%s230 + $0xd4] sm:$0xff]
      %v2346 = vld [vmem:[%s230 + $0xdc] sm:$0xff]
      %v2347 = vld [vmem:[%s230 + $0xe4] sm:$0xff]
      %v2348 = vld [vmem:[%s230 + $0xec] sm:$0xff]
      %v2349 = vld [vmem:[%s230 + $0xf4] sm:$0xff]
      %v2350 = vld [vmem:[%s230 + $0xfc] sm:$0xff]
      %v2351 = vld [vmem:[%s230 + $0x104] sm:$0xff]
      %v2352 = vld [vmem:[%s230 + $0x10c] sm:$0xff]
      %v2353 = vld [vmem:[%s230 + $0x114] sm:$0xff]
      %v2354 = vld [vmem:[%s230 + $0x11c] sm:$0xff]
      %v2355 = vld [vmem:[%s230 + $0x124] sm:$0xff]
      %v2356 = vld [vmem:[%s230 + $0x12c] sm:$0xff]
      %s2357 = scalar_lea.vmem %s1, 20
      %v2358 = vld [vmem:[%s2357] sm:$0xf]
      %v2360 = vsel %vm317, %v2321, 0
      %v2363 = vsel %vm317, %v2322, 0
      %v2366 = vsel %vm317, %v2323, 0
      %v2369 = vsel %vm317, %v2324, 0
      %v2372 = vsel %vm317, %v2325, 0
      %v2375 = vsel %vm317, %v2326, 0
      %v2378 = vsel %vm317, %v2327, 0
      %v2381 = vsel %vm317, %v2328, 0
      %v2384 = vsel %vm317, %v2329, 0
      %v2387 = vsel %vm317, %v2330, 0
      %v2390 = vsel %vm317, %v2331, 0
      %v2393 = vsel %vm317, %v2332, 0
      %v2396 = vsel %vm317, %v2333, 0
      %v2399 = vsel %vm317, %v2334, 0
      %v2402 = vsel %vm317, %v2335, 0
      %v2405 = vsel %vm317, %v2336, 0
      %v2408 = vsel %vm317, %v2337, 0
      %v2411 = vsel %vm317, %v2338, 0
      %v2414 = vsel %vm317, %v2339, 0
      %v2417 = vsel %vm317, %v2340, 0
      %v2420 = vsel %vm317, %v2341, 0
      %v2423 = vsel %vm317, %v2342, 0
      %v2426 = vsel %vm317, %v2343, 0
      %v2429 = vsel %vm317, %v2344, 0
      %v2432 = vsel %vm317, %v2345, 0
      %v2435 = vsel %vm317, %v2346, 0
      %v2438 = vsel %vm317, %v2347, 0
      %v2441 = vsel %vm317, %v2348, 0
      %v2444 = vsel %vm317, %v2349, 0
      %v2447 = vsel %vm317, %v2350, 0
      %v2450 = vsel %vm317, %v2351, 0
      %v2453 = vsel %vm317, %v2352, 0
      %v2456 = vsel %vm317, %v2353, 0
      %v2459 = vsel %vm317, %v2354, 0
      %v2462 = vsel %vm317, %v2355, 0
      %v2465 = vsel %vm317, %v2356, 0
      %v2468 = vsel %vm426, %v2358, 0
      %2470 = vmatprep.subr.mxu0 0.0
      %2471 = vmatpush1.msra.mxu0 %v2468
      %2472 = vmatprep.subr.mxu0 0.0
      %2473 = vmatpush1.msra.mxu0 0.0
      %2474 = vmatprep.subr.mxu0 0.0
      %2475 = vmatpush1.msra.mxu0 0.0
      %2476 = vmatprep.subr.mxu0 0.0
      %2477 = vmatpush1.msra.mxu0 0.0
      %2478 = vmatprep.subr.mxu0 0.0
      %2479 = vmatpush1.msra.mxu0 0.0
      %2480 = vmatprep.subr.mxu0 0.0
      %2481 = vmatpush1.msra.mxu0 0.0
      %2482 = vmatprep.subr.mxu0 0.0
      %2483 = vmatpush1.msra.mxu0 0.0
      %2484 = vmatprep.subr.mxu0 0.0
      %2485 = vmatpush1.msra.mxu0 0.0
      %2486 = vmatprep.subr.mxu0 0.0
      %2487 = vmatpush1.msra.mxu0 0.0
      %2488 = vmatprep.subr.mxu0 0.0
      %2489 = vmatpush1.msra.mxu0 0.0
      %2490 = vmatprep.subr.mxu0 0.0
      %2491 = vmatpush1.msra.mxu0 0.0
      %2492 = vmatprep.subr.mxu0 0.0
      %2493 = vmatpush1.msra.mxu0 0.0
      %2494 = vmatprep.subr.mxu0 0.0
      %2495 = vmatpush1.msra.mxu0 0.0
      %2496 = vmatprep.subr.mxu0 0.0
      %2497 = vmatpush1.msra.mxu0 0.0
      %2498 = vmatprep.subr.mxu0 0.0
      %2499 = vmatpush1.msra.mxu0 0.0
      %2500 = vmatprep.subr.mxu0 0.0
      %2501 = vmatpush1.msra.mxu0 0.0
      %2502 = vmatprep.subr.mxu0 0.0
      %2503 = vmatpush1.msra.mxu0 0.0
      %2504 = vmatprep.subr.mxu0 0.0
      %2505 = vmatpush1.msra.mxu0 0.0
      %2506 = vmatprep.subr.mxu0 0.0
      %2507 = vmatpush1.msra.mxu0 0.0
      %2508 = vmatprep.subr.mxu0 0.0
      %2509 = vmatpush1.msra.mxu0 0.0
      %2510 = vmatprep.subr.mxu0 0.0
      %2511 = vmatpush1.msra.mxu0 0.0
      %2512 = vmatprep.subr.mxu0 0.0
      %2513 = vmatpush1.msra.mxu0 0.0
      %2514 = vmatprep.subr.mxu0 0.0
      %2515 = vmatpush1.msra.mxu0 0.0
      %2516 = vmatprep.subr.mxu0 0.0
      %2517 = vmatpush1.msra.mxu0 0.0
      %2518 = vmatprep.subr.mxu0 0.0
      %2519 = vmatpush1.msra.mxu0 0.0
      %2520 = vmatprep.subr.mxu0 0.0
      %2521 = vmatpush1.msra.mxu0 0.0
      %2522 = vmatprep.subr.mxu0 0.0
      %2523 = vmatpush1.msra.mxu0 0.0
      %2524 = vmatprep.subr.mxu0 0.0
      %2525 = vmatpush1.msra.mxu0 0.0
      %2526 = vmatprep.subr.mxu0 0.0
      %2527 = vmatpush1.msra.mxu0 0.0
      %2528 = vmatprep.subr.mxu0 0.0
      %2529 = vmatpush1.msra.mxu0 0.0
      %2530 = vmatprep.subr.mxu0 0.0
      %2531 = vmatpush1.msra.mxu0 0.0
      %2532 = vmatprep.subr.mxu0 0.0
      %2533 = vmatpush1.msra.mxu0 0.0
      %2534 = vmatprep.mubr.f32.mxu0 0.0
      %2535 = vmatmul.mubr.f32.gmra.mrb[0].mxu0 %v2360
      %v2536 = vpop.f32.mrb[0].mxu0
      %v2537 = vadd.f32 0.0, %v2536
      %v2538 = vpop.f32.mrb[0].mxu0
      %2539 = vmatprep.mubr.f32.mxu0 0.0
      %2540 = vmatmul.mubr.f32.gmra.mrb[0].mxu0 %v2363
      %v2541 = vpop.f32.mrb[0].mxu0
      %v2542 = vadd.f32 0.0, %v2541
      %v2543 = vpop.f32.mrb[0].mxu0
      %2544 = vmatprep.mubr.f32.mxu0 0.0
      %2545 = vmatmul.mubr.f32.gmra.mrb[0].mxu0 %v2366
      %v2546 = vpop.f32.mrb[0].mxu0
      %v2547 = vadd.f32 0.0, %v2546
      %v2548 = vpop.f32.mrb[0].mxu0
      %2549 = vmatprep.mubr.f32.mxu0 0.0
      %2550 = vmatmul.mubr.f32.gmra.mrb[0].mxu0 %v2369
      %v2551 = vpop.f32.mrb[0].mxu0
      %v2552 = vadd.f32 0.0, %v2551
      %v2553 = vpop.f32.mrb[0].mxu0
      %2554 = vmatprep.mubr.f32.mxu0 0.0
      %2555 = vmatmul.mubr.f32.gmra.mrb[0].mxu0 %v2372
      %v2556 = vpop.f32.mrb[0].mxu0
      %v2557 = vadd.f32 0.0, %v2556
      %v2558 = vpop.f32.mrb[0].mxu0
      %2559 = vmatprep.mubr.f32.mxu0 0.0
      %2560 = vmatmul.mubr.f32.gmra.mrb[0].mxu0 %v2375
      %v2561 = vpop.f32.mrb[0].mxu0
      %v2562 = vadd.f32 0.0, %v2561
      %v2563 = vpop.f32.mrb[0].mxu0
      %2564 = vmatprep.mubr.f32.mxu0 0.0
      %2565 = vmatmul.mubr.f32.gmra.mrb[0].mxu0 %v2378
      %v2566 = vpop.f32.mrb[0].mxu0
      %v2567 = vadd.f32 0.0, %v2566
      %v2568 = vpop.f32.mrb[0].mxu0
      %2569 = vmatprep.mubr.f32.mxu0 0.0
      %2570 = vmatmul.mubr.f32.gmra.mrb[0].mxu0 %v2381
      %v2571 = vpop.f32.mrb[0].mxu0
      %v2572 = vadd.f32 0.0, %v2571
      %v2573 = vpop.f32.mrb[0].mxu0
      %2574 = vmatprep.mubr.f32.mxu0 0.0
      %2575 = vmatmul.mubr.f32.gmra.mrb[0].mxu0 %v2384
      %v2576 = vpop.f32.mrb[0].mxu0
      %v2577 = vadd.f32 0.0, %v2576
      %v2578 = vpop.f32.mrb[0].mxu0
      %2579 = vmatprep.mubr.f32.mxu0 0.0
      %2580 = vmatmul.mubr.f32.gmra.mrb[0].mxu0 %v2387
      %v2581 = vpop.f32.mrb[0].mxu0
      %v2582 = vadd.f32 0.0, %v2581
      %v2583 = vpop.f32.mrb[0].mxu0
      %2584 = vmatprep.mubr.f32.mxu0 0.0
      %2585 = vmatmul.mubr.f32.gmra.mrb[0].mxu0 %v2390
      %v2586 = vpop.f32.mrb[0].mxu0
      %v2587 = vadd.f32 0.0, %v2586
      %v2588 = vpop.f32.mrb[0].mxu0
      %2589 = vmatprep.mubr.f32.mxu0 0.0
      %2590 = vmatmul.mubr.f32.gmra.mrb[0].mxu0 %v2393
      %v2591 = vpop.f32.mrb[0].mxu0
      %v2592 = vadd.f32 0.0, %v2591
      %v2593 = vpop.f32.mrb[0].mxu0
      %2594 = vmatprep.mubr.f32.mxu0 0.0
      %2595 = vmatmul.mubr.f32.gmra.mrb[0].mxu0 %v2396
      %v2596 = vpop.f32.mrb[0].mxu0
      %v2597 = vadd.f32 0.0, %v2596
      %v2598 = vpop.f32.mrb[0].mxu0
      %2599 = vmatprep.mubr.f32.mxu0 0.0
      %2600 = vmatmul.mubr.f32.gmra.mrb[0].mxu0 %v2399
      %v2601 = vpop.f32.mrb[0].mxu0
      %v2602 = vadd.f32 0.0, %v2601
      %v2603 = vpop.f32.mrb[0].mxu0
      %2604 = vmatprep.mubr.f32.mxu0 0.0
      %2605 = vmatmul.mubr.f32.gmra.mrb[0].mxu0 %v2402
      %v2606 = vpop.f32.mrb[0].mxu0
      %v2607 = vadd.f32 0.0, %v2606
      %v2608 = vpop.f32.mrb[0].mxu0
      %2609 = vmatprep.mubr.f32.mxu0 0.0
      %2610 = vmatmul.mubr.f32.gmra.mrb[0].mxu0 %v2405
      %v2611 = vpop.f32.mrb[0].mxu0
      %v2612 = vadd.f32 0.0, %v2611
      %v2613 = vpop.f32.mrb[0].mxu0
      %2614 = vmatprep.mubr.f32.mxu0 0.0
      %2615 = vmatmul.mubr.f32.gmra.mrb[0].mxu0 %v2408
      %v2616 = vpop.f32.mrb[0].mxu0
      %v2617 = vadd.f32 0.0, %v2616
      %v2618 = vpop.f32.mrb[0].mxu0
      %2619 = vmatprep.mubr.f32.mxu0 0.0
      %2620 = vmatmul.mubr.f32.gmra.mrb[0].mxu0 %v2411
      %v2621 = vpop.f32.mrb[0].mxu0
      %v2622 = vadd.f32 0.0, %v2621
      %v2623 = vpop.f32.mrb[0].mxu0
      %2624 = vmatprep.mubr.f32.mxu0 0.0
      %2625 = vmatmul.mubr.f32.gmra.mrb[0].mxu0 %v2414
      %v2626 = vpop.f32.mrb[0].mxu0
      %v2627 = vadd.f32 0.0, %v2626
      %v2628 = vpop.f32.mrb[0].mxu0
      %2629 = vmatprep.mubr.f32.mxu0 0.0
      %2630 = vmatmul.mubr.f32.gmra.mrb[0].mxu0 %v2417
      %v2631 = vpop.f32.mrb[0].mxu0
      %v2632 = vadd.f32 0.0, %v2631
      %v2633 = vpop.f32.mrb[0].mxu0
      %2634 = vmatprep.mubr.f32.mxu0 0.0
      %2635 = vmatmul.mubr.f32.gmra.mrb[0].mxu0 %v2420
      %v2636 = vpop.f32.mrb[0].mxu0
      %v2637 = vadd.f32 0.0, %v2636
      %v2638 = vpop.f32.mrb[0].mxu0
      %2639 = vmatprep.mubr.f32.mxu0 0.0
      %2640 = vmatmul.mubr.f32.gmra.mrb[0].mxu0 %v2423
      %v2641 = vpop.f32.mrb[0].mxu0
      %v2642 = vadd.f32 0.0, %v2641
      %v2643 = vpop.f32.mrb[0].mxu0
      %2644 = vmatprep.mubr.f32.mxu0 0.0
      %2645 = vmatmul.mubr.f32.gmra.mrb[0].mxu0 %v2426
      %v2646 = vpop.f32.mrb[0].mxu0
      %v2647 = vadd.f32 0.0, %v2646
      %v2648 = vpop.f32.mrb[0].mxu0
      %2649 = vmatprep.mubr.f32.mxu0 0.0
      %2650 = vmatmul.mubr.f32.gmra.mrb[0].mxu0 %v2429
      %v2651 = vpop.f32.mrb[0].mxu0
      %v2652 = vadd.f32 0.0, %v2651
      %v2653 = vpop.f32.mrb[0].mxu0
      %2654 = vmatprep.mubr.f32.mxu0 0.0
      %2655 = vmatmul.mubr.f32.gmra.mrb[0].mxu0 %v2432
      %v2656 = vpop.f32.mrb[0].mxu0
      %v2657 = vadd.f32 0.0, %v2656
      %v2658 = vpop.f32.mrb[0].mxu0
      %2659 = vmatprep.mubr.f32.mxu0 0.0
      %2660 = vmatmul.mubr.f32.gmra.mrb[0].mxu0 %v2435
      %v2661 = vpop.f32.mrb[0].mxu0
      %v2662 = vadd.f32 0.0, %v2661
      %v2663 = vpop.f32.mrb[0].mxu0
      %2664 = vmatprep.mubr.f32.mxu0 0.0
      %2665 = vmatmul.mubr.f32.gmra.mrb[0].mxu0 %v2438
      %v2666 = vpop.f32.mrb[0].mxu0
      %v2667 = vadd.f32 0.0, %v2666
      %v2668 = vpop.f32.mrb[0].mxu0
      %2669 = vmatprep.mubr.f32.mxu0 0.0
      %2670 = vmatmul.mubr.f32.gmra.mrb[0].mxu0 %v2441
      %v2671 = vpop.f32.mrb[0].mxu0
      %v2672 = vadd.f32 0.0, %v2671
      %v2673 = vpop.f32.mrb[0].mxu0
      %2674 = vmatprep.mubr.f32.mxu0 0.0
      %2675 = vmatmul.mubr.f32.gmra.mrb[0].mxu0 %v2444
      %v2676 = vpop.f32.mrb[0].mxu0
      %v2677 = vadd.f32 0.0, %v2676
      %v2678 = vpop.f32.mrb[0].mxu0
      %2679 = vmatprep.mubr.f32.mxu0 0.0
      %2680 = vmatmul.mubr.f32.gmra.mrb[0].mxu0 %v2447
      %v2681 = vpop.f32.mrb[0].mxu0
      %v2682 = vadd.f32 0.0, %v2681
      %v2683 = vpop.f32.mrb[0].mxu0
      %2684 = vmatprep.mubr.f32.mxu0 0.0
      %2685 = vmatmul.mubr.f32.gmra.mrb[0].mxu0 %v2450
      %v2686 = vpop.f32.mrb[0].mxu0
      %v2687 = vadd.f32 0.0, %v2686
      %v2688 = vpop.f32.mrb[0].mxu0
      %2689 = vmatprep.mubr.f32.mxu0 0.0
      %2690 = vmatmul.mubr.f32.gmra.mrb[0].mxu0 %v2453
      %v2691 = vpop.f32.mrb[0].mxu0
      %v2692 = vadd.f32 0.0, %v2691
      %v2693 = vpop.f32.mrb[0].mxu0
      %2694 = vmatprep.mubr.f32.mxu0 0.0
      %2695 = vmatmul.mubr.f32.gmra.mrb[0].mxu0 %v2456
      %v2696 = vpop.f32.mrb[0].mxu0
      %v2697 = vadd.f32 0.0, %v2696
      %v2698 = vpop.f32.mrb[0].mxu0
      %2699 = vmatprep.mubr.f32.mxu0 0.0
      %2700 = vmatmul.mubr.f32.gmra.mrb[0].mxu0 %v2459
      %v2701 = vpop.f32.mrb[0].mxu0
      %v2702 = vadd.f32 0.0, %v2701
      %v2703 = vpop.f32.mrb[0].mxu0
      %2704 = vmatprep.mubr.f32.mxu0 0.0
      %2705 = vmatmul.mubr.f32.gmra.mrb[0].mxu0 %v2462
      %v2706 = vpop.f32.mrb[0].mxu0
      %v2707 = vadd.f32 0.0, %v2706
      %v2708 = vpop.f32.mrb[0].mxu0
      %2709 = vmatprep.mubr.f32.mxu0 0.0
      %2710 = vmatmul.mubr.f32.gmra.mrb[0].mxu0 %v2465
      %v2711 = vpop.f32.mrb[0].mxu0
      %v2712 = vadd.f32 0.0, %v2711
      %v2713 = vpop.f32.mrb[0].mxu0
      %2714 = vdwg.mxu0
      %v2715 = vadd.f32 %v2285, %v2537
      %v2716 = vadd.f32 %v2286, %v2542
      %v2717 = vadd.f32 %v2287, %v2547
      %v2718 = vadd.f32 %v2288, %v2552
      %v2719 = vadd.f32 %v2289, %v2557
      %v2720 = vadd.f32 %v2290, %v2562
      %v2721 = vadd.f32 %v2291, %v2567
      %v2722 = vadd.f32 %v2292, %v2572
      %v2723 = vadd.f32 %v2293, %v2577
      %v2724 = vadd.f32 %v2294, %v2582
      %v2725 = vadd.f32 %v2295, %v2587
      %v2726 = vadd.f32 %v2296, %v2592
      %v2727 = vadd.f32 %v2297, %v2597
      %v2728 = vadd.f32 %v2298, %v2602
      %v2729 = vadd.f32 %v2299, %v2607
      %v2730 = vadd.f32 %v2300, %v2612
      %v2731 = vadd.f32 %v2301, %v2617
      %v2732 = vadd.f32 %v2302, %v2622
      %v2733 = vadd.f32 %v2303, %v2627
      %v2734 = vadd.f32 %v2304, %v2632
      %v2735 = vadd.f32 %v2305, %v2637
      %v2736 = vadd.f32 %v2306, %v2642
      %v2737 = vadd.f32 %v2307, %v2647
      %v2738 = vadd.f32 %v2308, %v2652
      %v2739 = vadd.f32 %v2309, %v2657
      %v2740 = vadd.f32 %v2310, %v2662
      %v2741 = vadd.f32 %v2311, %v2667
      %v2742 = vadd.f32 %v2312, %v2672
      %v2743 = vadd.f32 %v2313, %v2677
      %v2744 = vadd.f32 %v2314, %v2682
      %v2745 = vadd.f32 %v2315, %v2687
      %v2746 = vadd.f32 %v2316, %v2692
      %v2747 = vadd.f32 %v2317, %v2697
      %v2748 = vadd.f32 %v2318, %v2702
      %v2749 = vadd.f32 %v2319, %v2707
      %v2750 = vadd.f32 %v2320, %v2712
      %v2751 = vld [vmem:[%s230 + $0x24] sm:$0xff]
      %v2752 = vld [vmem:[%s230 + $0x2c] sm:$0xff]
      %v2753 = vld [vmem:[%s230 + $0x34] sm:$0xff]
      %v2754 = vld [vmem:[%s230 + $0x3c] sm:$0xff]
      %v2755 = vld [vmem:[%s230 + $0x44] sm:$0xff]
      %v2756 = vld [vmem:[%s230 + $0x4c] sm:$0xff]
      %v2757 = vld [vmem:[%s230 + $0x54] sm:$0xff]
      %v2758 = vld [vmem:[%s230 + $0x5c] sm:$0xff]
      %v2759 = vld [vmem:[%s230 + $0x64] sm:$0xff]
      %v2760 = vld [vmem:[%s230 + $0x6c] sm:$0xff]
      %v2761 = vld [vmem:[%s230 + $0x74] sm:$0xff]
      %v2762 = vld [vmem:[%s230 + $0x7c] sm:$0xff]
      %v2763 = vld [vmem:[%s230 + $0x84] sm:$0xff]
      %v2764 = vld [vmem:[%s230 + $0x8c] sm:$0xff]
      %v2765 = vld [vmem:[%s230 + $0x94] sm:$0xff]
      %v2766 = vld [vmem:[%s230 + $0x9c] sm:$0xff]
      %v2767 = vld [vmem:[%s230 + $0xa4] sm:$0xff]
      %v2768 = vld [vmem:[%s230 + $0xac] sm:$0xff]
      %v2769 = vld [vmem:[%s230 + $0xb4] sm:$0xff]
      %v2770 = vld [vmem:[%s230 + $0xbc] sm:$0xff]
      %v2771 = vld [vmem:[%s230 + $0xc4] sm:$0xff]
      %v2772 = vld [vmem:[%s230 + $0xcc] sm:$0xff]
      %v2773 = vld [vmem:[%s230 + $0xd4] sm:$0xff]
      %v2774 = vld [vmem:[%s230 + $0xdc] sm:$0xff]
      %v2775 = vld [vmem:[%s230 + $0xe4] sm:$0xff]
      %v2776 = vld [vmem:[%s230 + $0xec] sm:$0xff]
      %v2777 = vld [vmem:[%s230 + $0xf4] sm:$0xff]
      %v2778 = vld [vmem:[%s230 + $0xfc] sm:$0xff]
      %v2779 = vld [vmem:[%s230 + $0x104] sm:$0xff]
      %v2780 = vld [vmem:[%s230 + $0x10c] sm:$0xff]
      %v2781 = vld [vmem:[%s230 + $0x114] sm:$0xff]
      %v2782 = vld [vmem:[%s230 + $0x11c] sm:$0xff]
      %v2783 = vld [vmem:[%s230 + $0x124] sm:$0xff]
      %v2784 = vld [vmem:[%s230 + $0x12c] sm:$0xff]
      %v2785 = vld [vmem:[%s230 + $0x134] sm:$0xff]
      %v2786 = vld [vmem:[%s230 + $0x13c] sm:$0xff]
      %s2787 = scalar_lea.vmem %s1, 24
      %v2788 = vld [vmem:[%s2787] sm:$0xf]
      %v2790 = vsel %vm317, %v2751, 0
      %v2793 = vsel %vm317, %v2752, 0
      %v2796 = vsel %vm317, %v2753, 0
      %v2799 = vsel %vm317, %v2754, 0
      %v2802 = vsel %vm317, %v2755, 0
      %v2805 = vsel %vm317, %v2756, 0
      %v2808 = vsel %vm317, %v2757, 0
      %v2811 = vsel %vm317, %v2758, 0
      %v2814 = vsel %vm317, %v2759, 0
      %v2817 = vsel %vm317, %v2760, 0
      %v2820 = vsel %vm317, %v2761, 0
      %v2823 = vsel %vm317, %v2762, 0
      %v2826 = vsel %vm317, %v2763, 0
      %v2829 = vsel %vm317, %v2764, 0
      %v2832 = vsel %vm317, %v2765, 0
      %v2835 = vsel %vm317, %v2766, 0
      %v2838 = vsel %vm317, %v2767, 0
      %v2841 = vsel %vm317, %v2768, 0
      %v2844 = vsel %vm317, %v2769, 0
      %v2847 = vsel %vm317, %v2770, 0
      %v2850 = vsel %vm317, %v2771, 0
      %v2853 = vsel %vm317, %v2772, 0
      %v2856 = vsel %vm317, %v2773, 0
      %v2859 = vsel %vm317, %v2774, 0
      %v2862 = vsel %vm317, %v2775, 0
      %v2865 = vsel %vm317, %v2776, 0
      %v2868 = vsel %vm317, %v2777, 0
      %v2871 = vsel %vm317, %v2778, 0
      %v2874 = vsel %vm317, %v2779, 0
      %v2877 = vsel %vm317, %v2780, 0
      %v2880 = vsel %vm317, %v2781, 0
      %v2883 = vsel %vm317, %v2782, 0
      %v2886 = vsel %vm317, %v2783, 0
      %v2889 = vsel %vm317, %v2784, 0
      %v2892 = vsel %vm317, %v2785, 0
      %v2895 = vsel %vm317, %v2786, 0
      %v2898 = vsel %vm426, %v2788, 0
      %2900 = vmatprep.subr.mxu0 0.0
      %2901 = vmatpush1.msra.mxu0 %v2898
      %2902 = vmatprep.subr.mxu0 0.0
      %2903 = vmatpush1.msra.mxu0 0.0
      %2904 = vmatprep.subr.mxu0 0.0
      %2905 = vmatpush1.msra.mxu0 0.0
      %2906 = vmatprep.subr.mxu0 0.0
      %2907 = vmatpush1.msra.mxu0 0.0
      %2908 = vmatprep.subr.mxu0 0.0
      %2909 = vmatpush1.msra.mxu0 0.0
      %2910 = vmatprep.subr.mxu0 0.0
      %2911 = vmatpush1.msra.mxu0 0.0
      %2912 = vmatprep.subr.mxu0 0.0
      %2913 = vmatpush1.msra.mxu0 0.0
      %2914 = vmatprep.subr.mxu0 0.0
      %2915 = vmatpush1.msra.mxu0 0.0
      %2916 = vmatprep.subr.mxu0 0.0
      %2917 = vmatpush1.msra.mxu0 0.0
      %2918 = vmatprep.subr.mxu0 0.0
      %2919 = vmatpush1.msra.mxu0 0.0
      %2920 = vmatprep.subr.mxu0 0.0
      %2921 = vmatpush1.msra.mxu0 0.0
      %2922 = vmatprep.subr.mxu0 0.0
      %2923 = vmatpush1.msra.mxu0 0.0
      %2924 = vmatprep.subr.mxu0 0.0
      %2925 = vmatpush1.msra.mxu0 0.0
      %2926 = vmatprep.subr.mxu0 0.0
      %2927 = vmatpush1.msra.mxu0 0.0
      %2928 = vmatprep.subr.mxu0 0.0
      %2929 = vmatpush1.msra.mxu0 0.0
      %2930 = vmatprep.subr.mxu0 0.0
      %2931 = vmatpush1.msra.mxu0 0.0
      %2932 = vmatprep.subr.mxu0 0.0
      %2933 = vmatpush1.msra.mxu0 0.0
      %2934 = vmatprep.subr.mxu0 0.0
      %2935 = vmatpush1.msra.mxu0 0.0
      %2936 = vmatprep.subr.mxu0 0.0
      %2937 = vmatpush1.msra.mxu0 0.0
      %2938 = vmatprep.subr.mxu0 0.0
      %2939 = vmatpush1.msra.mxu0 0.0
      %2940 = vmatprep.subr.mxu0 0.0
      %2941 = vmatpush1.msra.mxu0 0.0
      %2942 = vmatprep.subr.mxu0 0.0
      %2943 = vmatpush1.msra.mxu0 0.0
      %2944 = vmatprep.subr.mxu0 0.0
      %2945 = vmatpush1.msra.mxu0 0.0
      %2946 = vmatprep.subr.mxu0 0.0
      %2947 = vmatpush1.msra.mxu0 0.0
      %2948 = vmatprep.subr.mxu0 0.0
      %2949 = vmatpush1.msra.mxu0 0.0
      %2950 = vmatprep.subr.mxu0 0.0
      %2951 = vmatpush1.msra.mxu0 0.0
      %2952 = vmatprep.subr.mxu0 0.0
      %2953 = vmatpush1.msra.mxu0 0.0
      %2954 = vmatprep.subr.mxu0 0.0
      %2955 = vmatpush1.msra.mxu0 0.0
      %2956 = vmatprep.subr.mxu0 0.0
      %2957 = vmatpush1.msra.mxu0 0.0
      %2958 = vmatprep.subr.mxu0 0.0
      %2959 = vmatpush1.msra.mxu0 0.0
      %2960 = vmatprep.subr.mxu0 0.0
      %2961 = vmatpush1.msra.mxu0 0.0
      %2962 = vmatprep.subr.mxu0 0.0
      %2963 = vmatpush1.msra.mxu0 0.0
      %2964 = vmatprep.mubr.f32.mxu0 0.0
      %2965 = vmatmul.mubr.f32.gmra.mrb[0].mxu0 %v2790
      %v2966 = vpop.f32.mrb[0].mxu0
      %v2967 = vadd.f32 0.0, %v2966
      %v2968 = vpop.f32.mrb[0].mxu0
      %2969 = vmatprep.mubr.f32.mxu0 0.0
      %2970 = vmatmul.mubr.f32.gmra.mrb[0].mxu0 %v2793
      %v2971 = vpop.f32.mrb[0].mxu0
      %v2972 = vadd.f32 0.0, %v2971
      %v2973 = vpop.f32.mrb[0].mxu0
      %2974 = vmatprep.mubr.f32.mxu0 0.0
      %2975 = vmatmul.mubr.f32.gmra.mrb[0].mxu0 %v2796
      %v2976 = vpop.f32.mrb[0].mxu0
      %v2977 = vadd.f32 0.0, %v2976
      %v2978 = vpop.f32.mrb[0].mxu0
      %2979 = vmatprep.mubr.f32.mxu0 0.0
      %2980 = vmatmul.mubr.f32.gmra.mrb[0].mxu0 %v2799
      %v2981 = vpop.f32.mrb[0].mxu0
      %v2982 = vadd.f32 0.0, %v2981
      %v2983 = vpop.f32.mrb[0].mxu0
      %2984 = vmatprep.mubr.f32.mxu0 0.0
      %2985 = vmatmul.mubr.f32.gmra.mrb[0].mxu0 %v2802
      %v2986 = vpop.f32.mrb[0].mxu0
      %v2987 = vadd.f32 0.0, %v2986
      %v2988 = vpop.f32.mrb[0].mxu0
      %2989 = vmatprep.mubr.f32.mxu0 0.0
      %2990 = vmatmul.mubr.f32.gmra.mrb[0].mxu0 %v2805
      %v2991 = vpop.f32.mrb[0].mxu0
      %v2992 = vadd.f32 0.0, %v2991
      %v2993 = vpop.f32.mrb[0].mxu0
      %2994 = vmatprep.mubr.f32.mxu0 0.0
      %2995 = vmatmul.mubr.f32.gmra.mrb[0].mxu0 %v2808
      %v2996 = vpop.f32.mrb[0].mxu0
      %v2997 = vadd.f32 0.0, %v2996
      %v2998 = vpop.f32.mrb[0].mxu0
      %2999 = vmatprep.mubr.f32.mxu0 0.0
      %3000 = vmatmul.mubr.f32.gmra.mrb[0].mxu0 %v2811
      %v3001 = vpop.f32.mrb[0].mxu0
      %v3002 = vadd.f32 0.0, %v3001
      %v3003 = vpop.f32.mrb[0].mxu0
      %3004 = vmatprep.mubr.f32.mxu0 0.0
      %3005 = vmatmul.mubr.f32.gmra.mrb[0].mxu0 %v2814
      %v3006 = vpop.f32.mrb[0].mxu0
      %v3007 = vadd.f32 0.0, %v3006
      %v3008 = vpop.f32.mrb[0].mxu0
      %3009 = vmatprep.mubr.f32.mxu0 0.0
      %3010 = vmatmul.mubr.f32.gmra.mrb[0].mxu0 %v2817
      %v3011 = vpop.f32.mrb[0].mxu0
      %v3012 = vadd.f32 0.0, %v3011
      %v3013 = vpop.f32.mrb[0].mxu0
      %3014 = vmatprep.mubr.f32.mxu0 0.0
      %3015 = vmatmul.mubr.f32.gmra.mrb[0].mxu0 %v2820
      %v3016 = vpop.f32.mrb[0].mxu0
      %v3017 = vadd.f32 0.0, %v3016
      %v3018 = vpop.f32.mrb[0].mxu0
      %3019 = vmatprep.mubr.f32.mxu0 0.0
      %3020 = vmatmul.mubr.f32.gmra.mrb[0].mxu0 %v2823
      %v3021 = vpop.f32.mrb[0].mxu0
      %v3022 = vadd.f32 0.0, %v3021
      %v3023 = vpop.f32.mrb[0].mxu0
      %3024 = vmatprep.mubr.f32.mxu0 0.0
      %3025 = vmatmul.mubr.f32.gmra.mrb[0].mxu0 %v2826
      %v3026 = vpop.f32.mrb[0].mxu0
      %v3027 = vadd.f32 0.0, %v3026
      %v3028 = vpop.f32.mrb[0].mxu0
      %3029 = vmatprep.mubr.f32.mxu0 0.0
      %3030 = vmatmul.mubr.f32.gmra.mrb[0].mxu0 %v2829
      %v3031 = vpop.f32.mrb[0].mxu0
      %v3032 = vadd.f32 0.0, %v3031
      %v3033 = vpop.f32.mrb[0].mxu0
      %3034 = vmatprep.mubr.f32.mxu0 0.0
      %3035 = vmatmul.mubr.f32.gmra.mrb[0].mxu0 %v2832
      %v3036 = vpop.f32.mrb[0].mxu0
      %v3037 = vadd.f32 0.0, %v3036
      %v3038 = vpop.f32.mrb[0].mxu0
      %3039 = vmatprep.mubr.f32.mxu0 0.0
      %3040 = vmatmul.mubr.f32.gmra.mrb[0].mxu0 %v2835
      %v3041 = vpop.f32.mrb[0].mxu0
      %v3042 = vadd.f32 0.0, %v3041
      %v3043 = vpop.f32.mrb[0].mxu0
      %3044 = vmatprep.mubr.f32.mxu0 0.0
      %3045 = vmatmul.mubr.f32.gmra.mrb[0].mxu0 %v2838
      %v3046 = vpop.f32.mrb[0].mxu0
      %v3047 = vadd.f32 0.0, %v3046
      %v3048 = vpop.f32.mrb[0].mxu0
      %3049 = vmatprep.mubr.f32.mxu0 0.0
      %3050 = vmatmul.mubr.f32.gmra.mrb[0].mxu0 %v2841
      %v3051 = vpop.f32.mrb[0].mxu0
      %v3052 = vadd.f32 0.0, %v3051
      %v3053 = vpop.f32.mrb[0].mxu0
      %3054 = vmatprep.mubr.f32.mxu0 0.0
      %3055 = vmatmul.mubr.f32.gmra.mrb[0].mxu0 %v2844
      %v3056 = vpop.f32.mrb[0].mxu0
      %v3057 = vadd.f32 0.0, %v3056
      %v3058 = vpop.f32.mrb[0].mxu0
      %3059 = vmatprep.mubr.f32.mxu0 0.0
      %3060 = vmatmul.mubr.f32.gmra.mrb[0].mxu0 %v2847
      %v3061 = vpop.f32.mrb[0].mxu0
      %v3062 = vadd.f32 0.0, %v3061
      %v3063 = vpop.f32.mrb[0].mxu0
      %3064 = vmatprep.mubr.f32.mxu0 0.0
      %3065 = vmatmul.mubr.f32.gmra.mrb[0].mxu0 %v2850
      %v3066 = vpop.f32.mrb[0].mxu0
      %v3067 = vadd.f32 0.0, %v3066
      %v3068 = vpop.f32.mrb[0].mxu0
      %3069 = vmatprep.mubr.f32.mxu0 0.0
      %3070 = vmatmul.mubr.f32.gmra.mrb[0].mxu0 %v2853
      %v3071 = vpop.f32.mrb[0].mxu0
      %v3072 = vadd.f32 0.0, %v3071
      %v3073 = vpop.f32.mrb[0].mxu0
      %3074 = vmatprep.mubr.f32.mxu0 0.0
      %3075 = vmatmul.mubr.f32.gmra.mrb[0].mxu0 %v2856
      %v3076 = vpop.f32.mrb[0].mxu0
      %v3077 = vadd.f32 0.0, %v3076
      %v3078 = vpop.f32.mrb[0].mxu0
      %3079 = vmatprep.mubr.f32.mxu0 0.0
      %3080 = vmatmul.mubr.f32.gmra.mrb[0].mxu0 %v2859
      %v3081 = vpop.f32.mrb[0].mxu0
      %v3082 = vadd.f32 0.0, %v3081
      %v3083 = vpop.f32.mrb[0].mxu0
      %3084 = vmatprep.mubr.f32.mxu0 0.0
      %3085 = vmatmul.mubr.f32.gmra.mrb[0].mxu0 %v2862
      %v3086 = vpop.f32.mrb[0].mxu0
      %v3087 = vadd.f32 0.0, %v3086
      %v3088 = vpop.f32.mrb[0].mxu0
      %3089 = vmatprep.mubr.f32.mxu0 0.0
      %3090 = vmatmul.mubr.f32.gmra.mrb[0].mxu0 %v2865
      %v3091 = vpop.f32.mrb[0].mxu0
      %v3092 = vadd.f32 0.0, %v3091
      %v3093 = vpop.f32.mrb[0].mxu0
      %3094 = vmatprep.mubr.f32.mxu0 0.0
      %3095 = vmatmul.mubr.f32.gmra.mrb[0].mxu0 %v2868
      %v3096 = vpop.f32.mrb[0].mxu0
      %v3097 = vadd.f32 0.0, %v3096
      %v3098 = vpop.f32.mrb[0].mxu0
      %3099 = vmatprep.mubr.f32.mxu0 0.0
      %3100 = vmatmul.mubr.f32.gmra.mrb[0].mxu0 %v2871
      %v3101 = vpop.f32.mrb[0].mxu0
      %v3102 = vadd.f32 0.0, %v3101
      %v3103 = vpop.f32.mrb[0].mxu0
      %3104 = vmatprep.mubr.f32.mxu0 0.0
      %3105 = vmatmul.mubr.f32.gmra.mrb[0].mxu0 %v2874
      %v3106 = vpop.f32.mrb[0].mxu0
      %v3107 = vadd.f32 0.0, %v3106
      %v3108 = vpop.f32.mrb[0].mxu0
      %3109 = vmatprep.mubr.f32.mxu0 0.0
      %3110 = vmatmul.mubr.f32.gmra.mrb[0].mxu0 %v2877
      %v3111 = vpop.f32.mrb[0].mxu0
      %v3112 = vadd.f32 0.0, %v3111
      %v3113 = vpop.f32.mrb[0].mxu0
      %3114 = vmatprep.mubr.f32.mxu0 0.0
      %3115 = vmatmul.mubr.f32.gmra.mrb[0].mxu0 %v2880
      %v3116 = vpop.f32.mrb[0].mxu0
      %v3117 = vadd.f32 0.0, %v3116
      %v3118 = vpop.f32.mrb[0].mxu0
      %3119 = vmatprep.mubr.f32.mxu0 0.0
      %3120 = vmatmul.mubr.f32.gmra.mrb[0].mxu0 %v2883
      %v3121 = vpop.f32.mrb[0].mxu0
      %v3122 = vadd.f32 0.0, %v3121
      %v3123 = vpop.f32.mrb[0].mxu0
      %3124 = vmatprep.mubr.f32.mxu0 0.0
      %3125 = vmatmul.mubr.f32.gmra.mrb[0].mxu0 %v2886
      %v3126 = vpop.f32.mrb[0].mxu0
      %v3127 = vadd.f32 0.0, %v3126
      %v3128 = vpop.f32.mrb[0].mxu0
      %3129 = vmatprep.mubr.f32.mxu0 0.0
      %3130 = vmatmul.mubr.f32.gmra.mrb[0].mxu0 %v2889
      %v3131 = vpop.f32.mrb[0].mxu0
      %v3132 = vadd.f32 0.0, %v3131
      %v3133 = vpop.f32.mrb[0].mxu0
      %3134 = vmatprep.mubr.f32.mxu0 0.0
      %3135 = vmatmul.mubr.f32.gmra.mrb[0].mxu0 %v2892
      %v3136 = vpop.f32.mrb[0].mxu0
      %v3137 = vadd.f32 0.0, %v3136
      %v3138 = vpop.f32.mrb[0].mxu0
      %3139 = vmatprep.mubr.f32.mxu0 0.0
      %3140 = vmatmul.mubr.f32.gmra.mrb[0].mxu0 %v2895
      %v3141 = vpop.f32.mrb[0].mxu0
      %v3142 = vadd.f32 0.0, %v3141
      %v3143 = vpop.f32.mrb[0].mxu0
      %3144 = vdwg.mxu0
      %v3145 = vadd.f32 %v2715, %v2967
      %v3146 = vadd.f32 %v2716, %v2972
      %v3147 = vadd.f32 %v2717, %v2977
      %v3148 = vadd.f32 %v2718, %v2982
      %v3149 = vadd.f32 %v2719, %v2987
      %v3150 = vadd.f32 %v2720, %v2992
      %v3151 = vadd.f32 %v2721, %v2997
      %v3152 = vadd.f32 %v2722, %v3002
      %v3153 = vadd.f32 %v2723, %v3007
      %v3154 = vadd.f32 %v2724, %v3012
      %v3155 = vadd.f32 %v2725, %v3017
      %v3156 = vadd.f32 %v2726, %v3022
      %v3157 = vadd.f32 %v2727, %v3027
      %v3158 = vadd.f32 %v2728, %v3032
      %v3159 = vadd.f32 %v2729, %v3037
      %v3160 = vadd.f32 %v2730, %v3042
      %v3161 = vadd.f32 %v2731, %v3047
      %v3162 = vadd.f32 %v2732, %v3052
      %v3163 = vadd.f32 %v2733, %v3057
      %v3164 = vadd.f32 %v2734, %v3062
      %v3165 = vadd.f32 %v2735, %v3067
      %v3166 = vadd.f32 %v2736, %v3072
      %v3167 = vadd.f32 %v2737, %v3077
      %v3168 = vadd.f32 %v2738, %v3082
      %v3169 = vadd.f32 %v2739, %v3087
      %v3170 = vadd.f32 %v2740, %v3092
      %v3171 = vadd.f32 %v2741, %v3097
      %v3172 = vadd.f32 %v2742, %v3102
      %v3173 = vadd.f32 %v2743, %v3107
      %v3174 = vadd.f32 %v2744, %v3112
      %v3175 = vadd.f32 %v2745, %v3117
      %v3176 = vadd.f32 %v2746, %v3122
      %v3177 = vadd.f32 %v2747, %v3127
      %v3178 = vadd.f32 %v2748, %v3132
      %v3179 = vadd.f32 %v2749, %v3137
      %v3180 = vadd.f32 %v2750, %v3142
      %v3181 = vld [vmem:[%s230 + $0x25] sm:$0xff]
      %v3182 = vld [vmem:[%s230 + $0x2d] sm:$0xff]
      %v3183 = vld [vmem:[%s230 + $0x35] sm:$0xff]
      %v3184 = vld [vmem:[%s230 + $0x3d] sm:$0xff]
      %v3185 = vld [vmem:[%s230 + $0x45] sm:$0xff]
      %v3186 = vld [vmem:[%s230 + $0x4d] sm:$0xff]
      %v3187 = vld [vmem:[%s230 + $0x55] sm:$0xff]
      %v3188 = vld [vmem:[%s230 + $0x5d] sm:$0xff]
      %v3189 = vld [vmem:[%s230 + $0x65] sm:$0xff]
      %v3190 = vld [vmem:[%s230 + $0x6d] sm:$0xff]
      %v3191 = vld [vmem:[%s230 + $0x75] sm:$0xff]
      %v3192 = vld [vmem:[%s230 + $0x7d] sm:$0xff]
      %v3193 = vld [vmem:[%s230 + $0x85] sm:$0xff]
      %v3194 = vld [vmem:[%s230 + $0x8d] sm:$0xff]
      %v3195 = vld [vmem:[%s230 + $0x95] sm:$0xff]
      %v3196 = vld [vmem:[%s230 + $0x9d] sm:$0xff]
      %v3197 = vld [vmem:[%s230 + $0xa5] sm:$0xff]
      %v3198 = vld [vmem:[%s230 + $0xad] sm:$0xff]
      %v3199 = vld [vmem:[%s230 + $0xb5] sm:$0xff]
      %v3200 = vld [vmem:[%s230 + $0xbd] sm:$0xff]
      %v3201 = vld [vmem:[%s230 + $0xc5] sm:$0xff]
      %v3202 = vld [vmem:[%s230 + $0xcd] sm:$0xff]
      %v3203 = vld [vmem:[%s230 + $0xd5] sm:$0xff]
      %v3204 = vld [vmem:[%s230 + $0xdd] sm:$0xff]
      %v3205 = vld [vmem:[%s230 + $0xe5] sm:$0xff]
      %v3206 = vld [vmem:[%s230 + $0xed] sm:$0xff]
      %v3207 = vld [vmem:[%s230 + $0xf5] sm:$0xff]
      %v3208 = vld [vmem:[%s230 + $0xfd] sm:$0xff]
      %v3209 = vld [vmem:[%s230 + $0x105] sm:$0xff]
      %v3210 = vld [vmem:[%s230 + $0x10d] sm:$0xff]
      %v3211 = vld [vmem:[%s230 + $0x115] sm:$0xff]
      %v3212 = vld [vmem:[%s230 + $0x11d] sm:$0xff]
      %v3213 = vld [vmem:[%s230 + $0x125] sm:$0xff]
      %v3214 = vld [vmem:[%s230 + $0x12d] sm:$0xff]
      %v3215 = vld [vmem:[%s230 + $0x135] sm:$0xff]
      %v3216 = vld [vmem:[%s230 + $0x13d] sm:$0xff]
      %s3217 = scalar_lea.vmem %s1, 28
      %v3218 = vld [vmem:[%s3217] sm:$0xf]
      %v3220 = vsel %vm317, %v3181, 0
      %v3223 = vsel %vm317, %v3182, 0
      %v3226 = vsel %vm317, %v3183, 0
      %v3229 = vsel %vm317, %v3184, 0
      %v3232 = vsel %vm317, %v3185, 0
      %v3235 = vsel %vm317, %v3186, 0
      %v3238 = vsel %vm317, %v3187, 0
      %v3241 = vsel %vm317, %v3188, 0
      %v3244 = vsel %vm317, %v3189, 0
      %v3247 = vsel %vm317, %v3190, 0
      %v3250 = vsel %vm317, %v3191, 0
      %v3253 = vsel %vm317, %v3192, 0
      %v3256 = vsel %vm317, %v3193, 0
      %v3259 = vsel %vm317, %v3194, 0
      %v3262 = vsel %vm317, %v3195, 0
      %v3265 = vsel %vm317, %v3196, 0
      %v3268 = vsel %vm317, %v3197, 0
      %v3271 = vsel %vm317, %v3198, 0
      %v3274 = vsel %vm317, %v3199, 0
      %v3277 = vsel %vm317, %v3200, 0
      %v3280 = vsel %vm317, %v3201, 0
      %v3283 = vsel %vm317, %v3202, 0
      %v3286 = vsel %vm317, %v3203, 0
      %v3289 = vsel %vm317, %v3204, 0
      %v3292 = vsel %vm317, %v3205, 0
      %v3295 = vsel %vm317, %v3206, 0
      %v3298 = vsel %vm317, %v3207, 0
      %v3301 = vsel %vm317, %v3208, 0
      %v3304 = vsel %vm317, %v3209, 0
      %v3307 = vsel %vm317, %v3210, 0
      %v3310 = vsel %vm317, %v3211, 0
      %v3313 = vsel %vm317, %v3212, 0
      %v3316 = vsel %vm317, %v3213, 0
      %v3319 = vsel %vm317, %v3214, 0
      %v3322 = vsel %vm317, %v3215, 0
      %v3325 = vsel %vm317, %v3216, 0
      %v3328 = vsel %vm426, %v3218, 0
      %3330 = vmatprep.subr.mxu0 0.0
      %3331 = vmatpush1.msra.mxu0 %v3328
      %3332 = vmatprep.subr.mxu0 0.0
      %3333 = vmatpush1.msra.mxu0 0.0
      %3334 = vmatprep.subr.mxu0 0.0
      %3335 = vmatpush1.msra.mxu0 0.0
      %3336 = vmatprep.subr.mxu0 0.0
      %3337 = vmatpush1.msra.mxu0 0.0
      %3338 = vmatprep.subr.mxu0 0.0
      %3339 = vmatpush1.msra.mxu0 0.0
      %3340 = vmatprep.subr.mxu0 0.0
      %3341 = vmatpush1.msra.mxu0 0.0
      %3342 = vmatprep.subr.mxu0 0.0
      %3343 = vmatpush1.msra.mxu0 0.0
      %3344 = vmatprep.subr.mxu0 0.0
      %3345 = vmatpush1.msra.mxu0 0.0
      %3346 = vmatprep.subr.mxu0 0.0
      %3347 = vmatpush1.msra.mxu0 0.0
      %3348 = vmatprep.subr.mxu0 0.0
      %3349 = vmatpush1.msra.mxu0 0.0
      %3350 = vmatprep.subr.mxu0 0.0
      %3351 = vmatpush1.msra.mxu0 0.0
      %3352 = vmatprep.subr.mxu0 0.0
      %3353 = vmatpush1.msra.mxu0 0.0
      %3354 = vmatprep.subr.mxu0 0.0
      %3355 = vmatpush1.msra.mxu0 0.0
      %3356 = vmatprep.subr.mxu0 0.0
      %3357 = vmatpush1.msra.mxu0 0.0
      %3358 = vmatprep.subr.mxu0 0.0
      %3359 = vmatpush1.msra.mxu0 0.0
      %3360 = vmatprep.subr.mxu0 0.0
      %3361 = vmatpush1.msra.mxu0 0.0
      %3362 = vmatprep.subr.mxu0 0.0
      %3363 = vmatpush1.msra.mxu0 0.0
      %3364 = vmatprep.subr.mxu0 0.0
      %3365 = vmatpush1.msra.mxu0 0.0
      %3366 = vmatprep.subr.mxu0 0.0
      %3367 = vmatpush1.msra.mxu0 0.0
      %3368 = vmatprep.subr.mxu0 0.0
      %3369 = vmatpush1.msra.mxu0 0.0
      %3370 = vmatprep.subr.mxu0 0.0
      %3371 = vmatpush1.msra.mxu0 0.0
      %3372 = vmatprep.subr.mxu0 0.0
      %3373 = vmatpush1.msra.mxu0 0.0
      %3374 = vmatprep.subr.mxu0 0.0
      %3375 = vmatpush1.msra.mxu0 0.0
      %3376 = vmatprep.subr.mxu0 0.0
      %3377 = vmatpush1.msra.mxu0 0.0
      %3378 = vmatprep.subr.mxu0 0.0
      %3379 = vmatpush1.msra.mxu0 0.0
      %3380 = vmatprep.subr.mxu0 0.0
      %3381 = vmatpush1.msra.mxu0 0.0
      %3382 = vmatprep.subr.mxu0 0.0
      %3383 = vmatpush1.msra.mxu0 0.0
      %3384 = vmatprep.subr.mxu0 0.0
      %3385 = vmatpush1.msra.mxu0 0.0
      %3386 = vmatprep.subr.mxu0 0.0
      %3387 = vmatpush1.msra.mxu0 0.0
      %3388 = vmatprep.subr.mxu0 0.0
      %3389 = vmatpush1.msra.mxu0 0.0
      %3390 = vmatprep.subr.mxu0 0.0
      %3391 = vmatpush1.msra.mxu0 0.0
      %3392 = vmatprep.subr.mxu0 0.0
      %3393 = vmatpush1.msra.mxu0 0.0
      %3394 = vmatprep.mubr.f32.mxu0 0.0
      %3395 = vmatmul.mubr.f32.gmra.mrb[0].mxu0 %v3220
      %v3396 = vpop.f32.mrb[0].mxu0
      %v3397 = vadd.f32 0.0, %v3396
      %v3398 = vpop.f32.mrb[0].mxu0
      %3399 = vmatprep.mubr.f32.mxu0 0.0
      %3400 = vmatmul.mubr.f32.gmra.mrb[0].mxu0 %v3223
      %v3401 = vpop.f32.mrb[0].mxu0
      %v3402 = vadd.f32 0.0, %v3401
      %v3403 = vpop.f32.mrb[0].mxu0
      %3404 = vmatprep.mubr.f32.mxu0 0.0
      %3405 = vmatmul.mubr.f32.gmra.mrb[0].mxu0 %v3226
      %v3406 = vpop.f32.mrb[0].mxu0
      %v3407 = vadd.f32 0.0, %v3406
      %v3408 = vpop.f32.mrb[0].mxu0
      %3409 = vmatprep.mubr.f32.mxu0 0.0
      %3410 = vmatmul.mubr.f32.gmra.mrb[0].mxu0 %v3229
      %v3411 = vpop.f32.mrb[0].mxu0
      %v3412 = vadd.f32 0.0, %v3411
      %v3413 = vpop.f32.mrb[0].mxu0
      %3414 = vmatprep.mubr.f32.mxu0 0.0
      %3415 = vmatmul.mubr.f32.gmra.mrb[0].mxu0 %v3232
      %v3416 = vpop.f32.mrb[0].mxu0
      %v3417 = vadd.f32 0.0, %v3416
      %v3418 = vpop.f32.mrb[0].mxu0
      %3419 = vmatprep.mubr.f32.mxu0 0.0
      %3420 = vmatmul.mubr.f32.gmra.mrb[0].mxu0 %v3235
      %v3421 = vpop.f32.mrb[0].mxu0
      %v3422 = vadd.f32 0.0, %v3421
      %v3423 = vpop.f32.mrb[0].mxu0
      %3424 = vmatprep.mubr.f32.mxu0 0.0
      %3425 = vmatmul.mubr.f32.gmra.mrb[0].mxu0 %v3238
      %v3426 = vpop.f32.mrb[0].mxu0
      %v3427 = vadd.f32 0.0, %v3426
      %v3428 = vpop.f32.mrb[0].mxu0
      %3429 = vmatprep.mubr.f32.mxu0 0.0
      %3430 = vmatmul.mubr.f32.gmra.mrb[0].mxu0 %v3241
      %v3431 = vpop.f32.mrb[0].mxu0
      %v3432 = vadd.f32 0.0, %v3431
      %v3433 = vpop.f32.mrb[0].mxu0
      %3434 = vmatprep.mubr.f32.mxu0 0.0
      %3435 = vmatmul.mubr.f32.gmra.mrb[0].mxu0 %v3244
      %v3436 = vpop.f32.mrb[0].mxu0
      %v3437 = vadd.f32 0.0, %v3436
      %v3438 = vpop.f32.mrb[0].mxu0
      %3439 = vmatprep.mubr.f32.mxu0 0.0
      %3440 = vmatmul.mubr.f32.gmra.mrb[0].mxu0 %v3247
      %v3441 = vpop.f32.mrb[0].mxu0
      %v3442 = vadd.f32 0.0, %v3441
      %v3443 = vpop.f32.mrb[0].mxu0
      %3444 = vmatprep.mubr.f32.mxu0 0.0
      %3445 = vmatmul.mubr.f32.gmra.mrb[0].mxu0 %v3250
      %v3446 = vpop.f32.mrb[0].mxu0
      %v3447 = vadd.f32 0.0, %v3446
      %v3448 = vpop.f32.mrb[0].mxu0
      %3449 = vmatprep.mubr.f32.mxu0 0.0
      %3450 = vmatmul.mubr.f32.gmra.mrb[0].mxu0 %v3253
      %v3451 = vpop.f32.mrb[0].mxu0
      %v3452 = vadd.f32 0.0, %v3451
      %v3453 = vpop.f32.mrb[0].mxu0
      %3454 = vmatprep.mubr.f32.mxu0 0.0
      %3455 = vmatmul.mubr.f32.gmra.mrb[0].mxu0 %v3256
      %v3456 = vpop.f32.mrb[0].mxu0
      %v3457 = vadd.f32 0.0, %v3456
      %v3458 = vpop.f32.mrb[0].mxu0
      %3459 = vmatprep.mubr.f32.mxu0 0.0
      %3460 = vmatmul.mubr.f32.gmra.mrb[0].mxu0 %v3259
      %v3461 = vpop.f32.mrb[0].mxu0
      %v3462 = vadd.f32 0.0, %v3461
      %v3463 = vpop.f32.mrb[0].mxu0
      %3464 = vmatprep.mubr.f32.mxu0 0.0
      %3465 = vmatmul.mubr.f32.gmra.mrb[0].mxu0 %v3262
      %v3466 = vpop.f32.mrb[0].mxu0
      %v3467 = vadd.f32 0.0, %v3466
      %v3468 = vpop.f32.mrb[0].mxu0
      %3469 = vmatprep.mubr.f32.mxu0 0.0
      %3470 = vmatmul.mubr.f32.gmra.mrb[0].mxu0 %v3265
      %v3471 = vpop.f32.mrb[0].mxu0
      %v3472 = vadd.f32 0.0, %v3471
      %v3473 = vpop.f32.mrb[0].mxu0
      %3474 = vmatprep.mubr.f32.mxu0 0.0
      %3475 = vmatmul.mubr.f32.gmra.mrb[0].mxu0 %v3268
      %v3476 = vpop.f32.mrb[0].mxu0
      %v3477 = vadd.f32 0.0, %v3476
      %v3478 = vpop.f32.mrb[0].mxu0
      %3479 = vmatprep.mubr.f32.mxu0 0.0
      %3480 = vmatmul.mubr.f32.gmra.mrb[0].mxu0 %v3271
      %v3481 = vpop.f32.mrb[0].mxu0
      %v3482 = vadd.f32 0.0, %v3481
      %v3483 = vpop.f32.mrb[0].mxu0
      %3484 = vmatprep.mubr.f32.mxu0 0.0
      %3485 = vmatmul.mubr.f32.gmra.mrb[0].mxu0 %v3274
      %v3486 = vpop.f32.mrb[0].mxu0
      %v3487 = vadd.f32 0.0, %v3486
      %v3488 = vpop.f32.mrb[0].mxu0
      %3489 = vmatprep.mubr.f32.mxu0 0.0
      %3490 = vmatmul.mubr.f32.gmra.mrb[0].mxu0 %v3277
      %v3491 = vpop.f32.mrb[0].mxu0
      %v3492 = vadd.f32 0.0, %v3491
      %v3493 = vpop.f32.mrb[0].mxu0
      %3494 = vmatprep.mubr.f32.mxu0 0.0
      %3495 = vmatmul.mubr.f32.gmra.mrb[0].mxu0 %v3280
      %v3496 = vpop.f32.mrb[0].mxu0
      %v3497 = vadd.f32 0.0, %v3496
      %v3498 = vpop.f32.mrb[0].mxu0
      %3499 = vmatprep.mubr.f32.mxu0 0.0
      %3500 = vmatmul.mubr.f32.gmra.mrb[0].mxu0 %v3283
      %v3501 = vpop.f32.mrb[0].mxu0
      %v3502 = vadd.f32 0.0, %v3501
      %v3503 = vpop.f32.mrb[0].mxu0
      %3504 = vmatprep.mubr.f32.mxu0 0.0
      %3505 = vmatmul.mubr.f32.gmra.mrb[0].mxu0 %v3286
      %v3506 = vpop.f32.mrb[0].mxu0
      %v3507 = vadd.f32 0.0, %v3506
      %v3508 = vpop.f32.mrb[0].mxu0
      %3509 = vmatprep.mubr.f32.mxu0 0.0
      %3510 = vmatmul.mubr.f32.gmra.mrb[0].mxu0 %v3289
      %v3511 = vpop.f32.mrb[0].mxu0
      %v3512 = vadd.f32 0.0, %v3511
      %v3513 = vpop.f32.mrb[0].mxu0
      %3514 = vmatprep.mubr.f32.mxu0 0.0
      %3515 = vmatmul.mubr.f32.gmra.mrb[0].mxu0 %v3292
      %v3516 = vpop.f32.mrb[0].mxu0
      %v3517 = vadd.f32 0.0, %v3516
      %v3518 = vpop.f32.mrb[0].mxu0
      %3519 = vmatprep.mubr.f32.mxu0 0.0
      %3520 = vmatmul.mubr.f32.gmra.mrb[0].mxu0 %v3295
      %v3521 = vpop.f32.mrb[0].mxu0
      %v3522 = vadd.f32 0.0, %v3521
      %v3523 = vpop.f32.mrb[0].mxu0
      %3524 = vmatprep.mubr.f32.mxu0 0.0
      %3525 = vmatmul.mubr.f32.gmra.mrb[0].mxu0 %v3298
      %v3526 = vpop.f32.mrb[0].mxu0
      %v3527 = vadd.f32 0.0, %v3526
      %v3528 = vpop.f32.mrb[0].mxu0
      %3529 = vmatprep.mubr.f32.mxu0 0.0
      %3530 = vmatmul.mubr.f32.gmra.mrb[0].mxu0 %v3301
      %v3531 = vpop.f32.mrb[0].mxu0
      %v3532 = vadd.f32 0.0, %v3531
      %v3533 = vpop.f32.mrb[0].mxu0
      %3534 = vmatprep.mubr.f32.mxu0 0.0
      %3535 = vmatmul.mubr.f32.gmra.mrb[0].mxu0 %v3304
      %v3536 = vpop.f32.mrb[0].mxu0
      %v3537 = vadd.f32 0.0, %v3536
      %v3538 = vpop.f32.mrb[0].mxu0
      %3539 = vmatprep.mubr.f32.mxu0 0.0
      %3540 = vmatmul.mubr.f32.gmra.mrb[0].mxu0 %v3307
      %v3541 = vpop.f32.mrb[0].mxu0
      %v3542 = vadd.f32 0.0, %v3541
      %v3543 = vpop.f32.mrb[0].mxu0
      %3544 = vmatprep.mubr.f32.mxu0 0.0
      %3545 = vmatmul.mubr.f32.gmra.mrb[0].mxu0 %v3310
      %v3546 = vpop.f32.mrb[0].mxu0
      %v3547 = vadd.f32 0.0, %v3546
      %v3548 = vpop.f32.mrb[0].mxu0
      %3549 = vmatprep.mubr.f32.mxu0 0.0
      %3550 = vmatmul.mubr.f32.gmra.mrb[0].mxu0 %v3313
      %v3551 = vpop.f32.mrb[0].mxu0
      %v3552 = vadd.f32 0.0, %v3551
      %v3553 = vpop.f32.mrb[0].mxu0
      %3554 = vmatprep.mubr.f32.mxu0 0.0
      %3555 = vmatmul.mubr.f32.gmra.mrb[0].mxu0 %v3316
      %v3556 = vpop.f32.mrb[0].mxu0
      %v3557 = vadd.f32 0.0, %v3556
      %v3558 = vpop.f32.mrb[0].mxu0
      %3559 = vmatprep.mubr.f32.mxu0 0.0
      %3560 = vmatmul.mubr.f32.gmra.mrb[0].mxu0 %v3319
      %v3561 = vpop.f32.mrb[0].mxu0
      %v3562 = vadd.f32 0.0, %v3561
      %v3563 = vpop.f32.mrb[0].mxu0
      %3564 = vmatprep.mubr.f32.mxu0 0.0
      %3565 = vmatmul.mubr.f32.gmra.mrb[0].mxu0 %v3322
      %v3566 = vpop.f32.mrb[0].mxu0
      %v3567 = vadd.f32 0.0, %v3566
      %v3568 = vpop.f32.mrb[0].mxu0
      %3569 = vmatprep.mubr.f32.mxu0 0.0
      %3570 = vmatmul.mubr.f32.gmra.mrb[0].mxu0 %v3325
      %v3571 = vpop.f32.mrb[0].mxu0
      %v3572 = vadd.f32 0.0, %v3571
      %v3573 = vpop.f32.mrb[0].mxu0
      %3574 = vdwg.mxu0
      %v3575 = vadd.f32 %v3145, %v3397
      %v3576 = vadd.f32 %v3146, %v3402
      %v3577 = vadd.f32 %v3147, %v3407
      %v3578 = vadd.f32 %v3148, %v3412
      %v3579 = vadd.f32 %v3149, %v3417
      %v3580 = vadd.f32 %v3150, %v3422
      %v3581 = vadd.f32 %v3151, %v3427
      %v3582 = vadd.f32 %v3152, %v3432
      %v3583 = vadd.f32 %v3153, %v3437
      %v3584 = vadd.f32 %v3154, %v3442
      %v3585 = vadd.f32 %v3155, %v3447
      %v3586 = vadd.f32 %v3156, %v3452
      %v3587 = vadd.f32 %v3157, %v3457
      %v3588 = vadd.f32 %v3158, %v3462
      %v3589 = vadd.f32 %v3159, %v3467
      %v3590 = vadd.f32 %v3160, %v3472
      %v3591 = vadd.f32 %v3161, %v3477
      %v3592 = vadd.f32 %v3162, %v3482
      %v3593 = vadd.f32 %v3163, %v3487
      %v3594 = vadd.f32 %v3164, %v3492
      %v3595 = vadd.f32 %v3165, %v3497
      %v3596 = vadd.f32 %v3166, %v3502
      %v3597 = vadd.f32 %v3167, %v3507
      %v3598 = vadd.f32 %v3168, %v3512
      %v3599 = vadd.f32 %v3169, %v3517
      %v3600 = vadd.f32 %v3170, %v3522
      %v3601 = vadd.f32 %v3171, %v3527
      %v3602 = vadd.f32 %v3172, %v3532
      %v3603 = vadd.f32 %v3173, %v3537
      %v3604 = vadd.f32 %v3174, %v3542
      %v3605 = vadd.f32 %v3175, %v3547
      %v3606 = vadd.f32 %v3176, %v3552
      %v3607 = vadd.f32 %v3177, %v3557
      %v3608 = vadd.f32 %v3178, %v3562
      %v3609 = vadd.f32 %v3179, %v3567
      %v3610 = vadd.f32 %v3180, %v3572
      %v3611 = vld [vmem:[%s230 + $0x26] sm:$0xff]
      %v3612 = vld [vmem:[%s230 + $0x2e] sm:$0xff]
      %v3613 = vld [vmem:[%s230 + $0x36] sm:$0xff]
      %v3614 = vld [vmem:[%s230 + $0x3e] sm:$0xff]
      %v3615 = vld [vmem:[%s230 + $0x46] sm:$0xff]
      %v3616 = vld [vmem:[%s230 + $0x4e] sm:$0xff]
      %v3617 = vld [vmem:[%s230 + $0x56] sm:$0xff]
      %v3618 = vld [vmem:[%s230 + $0x5e] sm:$0xff]
      %v3619 = vld [vmem:[%s230 + $0x66] sm:$0xff]
      %v3620 = vld [vmem:[%s230 + $0x6e] sm:$0xff]
      %v3621 = vld [vmem:[%s230 + $0x76] sm:$0xff]
      %v3622 = vld [vmem:[%s230 + $0x7e] sm:$0xff]
      %v3623 = vld [vmem:[%s230 + $0x86] sm:$0xff]
      %v3624 = vld [vmem:[%s230 + $0x8e] sm:$0xff]
      %v3625 = vld [vmem:[%s230 + $0x96] sm:$0xff]
      %v3626 = vld [vmem:[%s230 + $0x9e] sm:$0xff]
      %v3627 = vld [vmem:[%s230 + $0xa6] sm:$0xff]
      %v3628 = vld [vmem:[%s230 + $0xae] sm:$0xff]
      %v3629 = vld [vmem:[%s230 + $0xb6] sm:$0xff]
      %v3630 = vld [vmem:[%s230 + $0xbe] sm:$0xff]
      %v3631 = vld [vmem:[%s230 + $0xc6] sm:$0xff]
      %v3632 = vld [vmem:[%s230 + $0xce] sm:$0xff]
      %v3633 = vld [vmem:[%s230 + $0xd6] sm:$0xff]
      %v3634 = vld [vmem:[%s230 + $0xde] sm:$0xff]
      %v3635 = vld [vmem:[%s230 + $0xe6] sm:$0xff]
      %v3636 = vld [vmem:[%s230 + $0xee] sm:$0xff]
      %v3637 = vld [vmem:[%s230 + $0xf6] sm:$0xff]
      %v3638 = vld [vmem:[%s230 + $0xfe] sm:$0xff]
      %v3639 = vld [vmem:[%s230 + $0x106] sm:$0xff]
      %v3640 = vld [vmem:[%s230 + $0x10e] sm:$0xff]
      %v3641 = vld [vmem:[%s230 + $0x116] sm:$0xff]
      %v3642 = vld [vmem:[%s230 + $0x11e] sm:$0xff]
      %v3643 = vld [vmem:[%s230 + $0x126] sm:$0xff]
      %v3644 = vld [vmem:[%s230 + $0x12e] sm:$0xff]
      %v3645 = vld [vmem:[%s230 + $0x136] sm:$0xff]
      %v3646 = vld [vmem:[%s230 + $0x13e] sm:$0xff]
      %s3647 = scalar_lea.vmem %s1, 32
      %v3648 = vld [vmem:[%s3647] sm:$0xf]
      %v3650 = vsel %vm317, %v3611, 0
      %v3653 = vsel %vm317, %v3612, 0
      %v3656 = vsel %vm317, %v3613, 0
      %v3659 = vsel %vm317, %v3614, 0
      %v3662 = vsel %vm317, %v3615, 0
      %v3665 = vsel %vm317, %v3616, 0
      %v3668 = vsel %vm317, %v3617, 0
      %v3671 = vsel %vm317, %v3618, 0
      %v3674 = vsel %vm317, %v3619, 0
      %v3677 = vsel %vm317, %v3620, 0
      %v3680 = vsel %vm317, %v3621, 0
      %v3683 = vsel %vm317, %v3622, 0
      %v3686 = vsel %vm317, %v3623, 0
      %v3689 = vsel %vm317, %v3624, 0
      %v3692 = vsel %vm317, %v3625, 0
      %v3695 = vsel %vm317, %v3626, 0
      %v3698 = vsel %vm317, %v3627, 0
      %v3701 = vsel %vm317, %v3628, 0
      %v3704 = vsel %vm317, %v3629, 0
      %v3707 = vsel %vm317, %v3630, 0
      %v3710 = vsel %vm317, %v3631, 0
      %v3713 = vsel %vm317, %v3632, 0
      %v3716 = vsel %vm317, %v3633, 0
      %v3719 = vsel %vm317, %v3634, 0
      %v3722 = vsel %vm317, %v3635, 0
      %v3725 = vsel %vm317, %v3636, 0
      %v3728 = vsel %vm317, %v3637, 0
      %v3731 = vsel %vm317, %v3638, 0
      %v3734 = vsel %vm317, %v3639, 0
      %v3737 = vsel %vm317, %v3640, 0
      %v3740 = vsel %vm317, %v3641, 0
      %v3743 = vsel %vm317, %v3642, 0
      %v3746 = vsel %vm317, %v3643, 0
      %v3749 = vsel %vm317, %v3644, 0
      %v3752 = vsel %vm317, %v3645, 0
      %v3755 = vsel %vm317, %v3646, 0
      %v3758 = vsel %vm426, %v3648, 0
      %3760 = vmatprep.subr.mxu0 0.0
      %3761 = vmatpush1.msra.mxu0 %v3758
      %3762 = vmatprep.subr.mxu0 0.0
      %3763 = vmatpush1.msra.mxu0 0.0
      %3764 = vmatprep.subr.mxu0 0.0
      %3765 = vmatpush1.msra.mxu0 0.0
      %3766 = vmatprep.subr.mxu0 0.0
      %3767 = vmatpush1.msra.mxu0 0.0
      %3768 = vmatprep.subr.mxu0 0.0
      %3769 = vmatpush1.msra.mxu0 0.0
      %3770 = vmatprep.subr.mxu0 0.0
      %3771 = vmatpush1.msra.mxu0 0.0
      %3772 = vmatprep.subr.mxu0 0.0
      %3773 = vmatpush1.msra.mxu0 0.0
      %3774 = vmatprep.subr.mxu0 0.0
      %3775 = vmatpush1.msra.mxu0 0.0
      %3776 = vmatprep.subr.mxu0 0.0
      %3777 = vmatpush1.msra.mxu0 0.0
      %3778 = vmatprep.subr.mxu0 0.0
      %3779 = vmatpush1.msra.mxu0 0.0
      %3780 = vmatprep.subr.mxu0 0.0
      %3781 = vmatpush1.msra.mxu0 0.0
      %3782 = vmatprep.subr.mxu0 0.0
      %3783 = vmatpush1.msra.mxu0 0.0
      %3784 = vmatprep.subr.mxu0 0.0
      %3785 = vmatpush1.msra.mxu0 0.0
      %3786 = vmatprep.subr.mxu0 0.0
      %3787 = vmatpush1.msra.mxu0 0.0
      %3788 = vmatprep.subr.mxu0 0.0
      %3789 = vmatpush1.msra.mxu0 0.0
      %3790 = vmatprep.subr.mxu0 0.0
      %3791 = vmatpush1.msra.mxu0 0.0
      %3792 = vmatprep.subr.mxu0 0.0
      %3793 = vmatpush1.msra.mxu0 0.0
      %3794 = vmatprep.subr.mxu0 0.0
      %3795 = vmatpush1.msra.mxu0 0.0
      %3796 = vmatprep.subr.mxu0 0.0
      %3797 = vmatpush1.msra.mxu0 0.0
      %3798 = vmatprep.subr.mxu0 0.0
      %3799 = vmatpush1.msra.mxu0 0.0
      %3800 = vmatprep.subr.mxu0 0.0
      %3801 = vmatpush1.msra.mxu0 0.0
      %3802 = vmatprep.subr.mxu0 0.0
      %3803 = vmatpush1.msra.mxu0 0.0
      %3804 = vmatprep.subr.mxu0 0.0
      %3805 = vmatpush1.msra.mxu0 0.0
      %3806 = vmatprep.subr.mxu0 0.0
      %3807 = vmatpush1.msra.mxu0 0.0
      %3808 = vmatprep.subr.mxu0 0.0
      %3809 = vmatpush1.msra.mxu0 0.0
      %3810 = vmatprep.subr.mxu0 0.0
      %3811 = vmatpush1.msra.mxu0 0.0
      %3812 = vmatprep.subr.mxu0 0.0
      %3813 = vmatpush1.msra.mxu0 0.0
      %3814 = vmatprep.subr.mxu0 0.0
      %3815 = vmatpush1.msra.mxu0 0.0
      %3816 = vmatprep.subr.mxu0 0.0
      %3817 = vmatpush1.msra.mxu0 0.0
      %3818 = vmatprep.subr.mxu0 0.0
      %3819 = vmatpush1.msra.mxu0 0.0
      %3820 = vmatprep.subr.mxu0 0.0
      %3821 = vmatpush1.msra.mxu0 0.0
      %3822 = vmatprep.subr.mxu0 0.0
      %3823 = vmatpush1.msra.mxu0 0.0
      %3824 = vmatprep.mubr.f32.mxu0 0.0
      %3825 = vmatmul.mubr.f32.gmra.mrb[0].mxu0 %v3650
      %v3826 = vpop.f32.mrb[0].mxu0
      %v3827 = vadd.f32 0.0, %v3826
      %v3828 = vpop.f32.mrb[0].mxu0
      %3829 = vmatprep.mubr.f32.mxu0 0.0
      %3830 = vmatmul.mubr.f32.gmra.mrb[0].mxu0 %v3653
      %v3831 = vpop.f32.mrb[0].mxu0
      %v3832 = vadd.f32 0.0, %v3831
      %v3833 = vpop.f32.mrb[0].mxu0
      %3834 = vmatprep.mubr.f32.mxu0 0.0
      %3835 = vmatmul.mubr.f32.gmra.mrb[0].mxu0 %v3656
      %v3836 = vpop.f32.mrb[0].mxu0
      %v3837 = vadd.f32 0.0, %v3836
      %v3838 = vpop.f32.mrb[0].mxu0
      %3839 = vmatprep.mubr.f32.mxu0 0.0
      %3840 = vmatmul.mubr.f32.gmra.mrb[0].mxu0 %v3659
      %v3841 = vpop.f32.mrb[0].mxu0
      %v3842 = vadd.f32 0.0, %v3841
      %v3843 = vpop.f32.mrb[0].mxu0
      %3844 = vmatprep.mubr.f32.mxu0 0.0
      %3845 = vmatmul.mubr.f32.gmra.mrb[0].mxu0 %v3662
      %v3846 = vpop.f32.mrb[0].mxu0
      %v3847 = vadd.f32 0.0, %v3846
      %v3848 = vpop.f32.mrb[0].mxu0
      %3849 = vmatprep.mubr.f32.mxu0 0.0
      %3850 = vmatmul.mubr.f32.gmra.mrb[0].mxu0 %v3665
      %v3851 = vpop.f32.mrb[0].mxu0
      %v3852 = vadd.f32 0.0, %v3851
      %v3853 = vpop.f32.mrb[0].mxu0
      %3854 = vmatprep.mubr.f32.mxu0 0.0
      %3855 = vmatmul.mubr.f32.gmra.mrb[0].mxu0 %v3668
      %v3856 = vpop.f32.mrb[0].mxu0
      %v3857 = vadd.f32 0.0, %v3856
      %v3858 = vpop.f32.mrb[0].mxu0
      %3859 = vmatprep.mubr.f32.mxu0 0.0
      %3860 = vmatmul.mubr.f32.gmra.mrb[0].mxu0 %v3671
      %v3861 = vpop.f32.mrb[0].mxu0
      %v3862 = vadd.f32 0.0, %v3861
      %v3863 = vpop.f32.mrb[0].mxu0
      %3864 = vmatprep.mubr.f32.mxu0 0.0
      %3865 = vmatmul.mubr.f32.gmra.mrb[0].mxu0 %v3674
      %v3866 = vpop.f32.mrb[0].mxu0
      %v3867 = vadd.f32 0.0, %v3866
      %v3868 = vpop.f32.mrb[0].mxu0
      %3869 = vmatprep.mubr.f32.mxu0 0.0
      %3870 = vmatmul.mubr.f32.gmra.mrb[0].mxu0 %v3677
      %v3871 = vpop.f32.mrb[0].mxu0
      %v3872 = vadd.f32 0.0, %v3871
      %v3873 = vpop.f32.mrb[0].mxu0
      %3874 = vmatprep.mubr.f32.mxu0 0.0
      %3875 = vmatmul.mubr.f32.gmra.mrb[0].mxu0 %v3680
      %v3876 = vpop.f32.mrb[0].mxu0
      %v3877 = vadd.f32 0.0, %v3876
      %v3878 = vpop.f32.mrb[0].mxu0
      %3879 = vmatprep.mubr.f32.mxu0 0.0
      %3880 = vmatmul.mubr.f32.gmra.mrb[0].mxu0 %v3683
      %v3881 = vpop.f32.mrb[0].mxu0
      %v3882 = vadd.f32 0.0, %v3881
      %v3883 = vpop.f32.mrb[0].mxu0
      %3884 = vmatprep.mubr.f32.mxu0 0.0
      %3885 = vmatmul.mubr.f32.gmra.mrb[0].mxu0 %v3686
      %v3886 = vpop.f32.mrb[0].mxu0
      %v3887 = vadd.f32 0.0, %v3886
      %v3888 = vpop.f32.mrb[0].mxu0
      %3889 = vmatprep.mubr.f32.mxu0 0.0
      %3890 = vmatmul.mubr.f32.gmra.mrb[0].mxu0 %v3689
      %v3891 = vpop.f32.mrb[0].mxu0
      %v3892 = vadd.f32 0.0, %v3891
      %v3893 = vpop.f32.mrb[0].mxu0
      %3894 = vmatprep.mubr.f32.mxu0 0.0
      %3895 = vmatmul.mubr.f32.gmra.mrb[0].mxu0 %v3692
      %v3896 = vpop.f32.mrb[0].mxu0
      %v3897 = vadd.f32 0.0, %v3896
      %v3898 = vpop.f32.mrb[0].mxu0
      %3899 = vmatprep.mubr.f32.mxu0 0.0
      %3900 = vmatmul.mubr.f32.gmra.mrb[0].mxu0 %v3695
      %v3901 = vpop.f32.mrb[0].mxu0
      %v3902 = vadd.f32 0.0, %v3901
      %v3903 = vpop.f32.mrb[0].mxu0
      %3904 = vmatprep.mubr.f32.mxu0 0.0
      %3905 = vmatmul.mubr.f32.gmra.mrb[0].mxu0 %v3698
      %v3906 = vpop.f32.mrb[0].mxu0
      %v3907 = vadd.f32 0.0, %v3906
      %v3908 = vpop.f32.mrb[0].mxu0
      %3909 = vmatprep.mubr.f32.mxu0 0.0
      %3910 = vmatmul.mubr.f32.gmra.mrb[0].mxu0 %v3701
      %v3911 = vpop.f32.mrb[0].mxu0
      %v3912 = vadd.f32 0.0, %v3911
      %v3913 = vpop.f32.mrb[0].mxu0
      %3914 = vmatprep.mubr.f32.mxu0 0.0
      %3915 = vmatmul.mubr.f32.gmra.mrb[0].mxu0 %v3704
      %v3916 = vpop.f32.mrb[0].mxu0
      %v3917 = vadd.f32 0.0, %v3916
      %v3918 = vpop.f32.mrb[0].mxu0
      %3919 = vmatprep.mubr.f32.mxu0 0.0
      %3920 = vmatmul.mubr.f32.gmra.mrb[0].mxu0 %v3707
      %v3921 = vpop.f32.mrb[0].mxu0
      %v3922 = vadd.f32 0.0, %v3921
      %v3923 = vpop.f32.mrb[0].mxu0
      %3924 = vmatprep.mubr.f32.mxu0 0.0
      %3925 = vmatmul.mubr.f32.gmra.mrb[0].mxu0 %v3710
      %v3926 = vpop.f32.mrb[0].mxu0
      %v3927 = vadd.f32 0.0, %v3926
      %v3928 = vpop.f32.mrb[0].mxu0
      %3929 = vmatprep.mubr.f32.mxu0 0.0
      %3930 = vmatmul.mubr.f32.gmra.mrb[0].mxu0 %v3713
      %v3931 = vpop.f32.mrb[0].mxu0
      %v3932 = vadd.f32 0.0, %v3931
      %v3933 = vpop.f32.mrb[0].mxu0
      %3934 = vmatprep.mubr.f32.mxu0 0.0
      %3935 = vmatmul.mubr.f32.gmra.mrb[0].mxu0 %v3716
      %v3936 = vpop.f32.mrb[0].mxu0
      %v3937 = vadd.f32 0.0, %v3936
      %v3938 = vpop.f32.mrb[0].mxu0
      %3939 = vmatprep.mubr.f32.mxu0 0.0
      %3940 = vmatmul.mubr.f32.gmra.mrb[0].mxu0 %v3719
      %v3941 = vpop.f32.mrb[0].mxu0
      %v3942 = vadd.f32 0.0, %v3941
      %v3943 = vpop.f32.mrb[0].mxu0
      %3944 = vmatprep.mubr.f32.mxu0 0.0
      %3945 = vmatmul.mubr.f32.gmra.mrb[0].mxu0 %v3722
      %v3946 = vpop.f32.mrb[0].mxu0
      %v3947 = vadd.f32 0.0, %v3946
      %v3948 = vpop.f32.mrb[0].mxu0
      %3949 = vmatprep.mubr.f32.mxu0 0.0
      %3950 = vmatmul.mubr.f32.gmra.mrb[0].mxu0 %v3725
      %v3951 = vpop.f32.mrb[0].mxu0
      %v3952 = vadd.f32 0.0, %v3951
      %v3953 = vpop.f32.mrb[0].mxu0
      %3954 = vmatprep.mubr.f32.mxu0 0.0
      %3955 = vmatmul.mubr.f32.gmra.mrb[0].mxu0 %v3728
      %v3956 = vpop.f32.mrb[0].mxu0
      %v3957 = vadd.f32 0.0, %v3956
      %v3958 = vpop.f32.mrb[0].mxu0
      %3959 = vmatprep.mubr.f32.mxu0 0.0
      %3960 = vmatmul.mubr.f32.gmra.mrb[0].mxu0 %v3731
      %v3961 = vpop.f32.mrb[0].mxu0
      %v3962 = vadd.f32 0.0, %v3961
      %v3963 = vpop.f32.mrb[0].mxu0
      %3964 = vmatprep.mubr.f32.mxu0 0.0
      %3965 = vmatmul.mubr.f32.gmra.mrb[0].mxu0 %v3734
      %v3966 = vpop.f32.mrb[0].mxu0
      %v3967 = vadd.f32 0.0, %v3966
      %v3968 = vpop.f32.mrb[0].mxu0
      %3969 = vmatprep.mubr.f32.mxu0 0.0
      %3970 = vmatmul.mubr.f32.gmra.mrb[0].mxu0 %v3737
      %v3971 = vpop.f32.mrb[0].mxu0
      %v3972 = vadd.f32 0.0, %v3971
      %v3973 = vpop.f32.mrb[0].mxu0
      %3974 = vmatprep.mubr.f32.mxu0 0.0
      %3975 = vmatmul.mubr.f32.gmra.mrb[0].mxu0 %v3740
      %v3976 = vpop.f32.mrb[0].mxu0
      %v3977 = vadd.f32 0.0, %v3976
      %v3978 = vpop.f32.mrb[0].mxu0
      %3979 = vmatprep.mubr.f32.mxu0 0.0
      %3980 = vmatmul.mubr.f32.gmra.mrb[0].mxu0 %v3743
      %v3981 = vpop.f32.mrb[0].mxu0
      %v3982 = vadd.f32 0.0, %v3981
      %v3983 = vpop.f32.mrb[0].mxu0
      %3984 = vmatprep.mubr.f32.mxu0 0.0
      %3985 = vmatmul.mubr.f32.gmra.mrb[0].mxu0 %v3746
      %v3986 = vpop.f32.mrb[0].mxu0
      %v3987 = vadd.f32 0.0, %v3986
      %v3988 = vpop.f32.mrb[0].mxu0
      %3989 = vmatprep.mubr.f32.mxu0 0.0
      %3990 = vmatmul.mubr.f32.gmra.mrb[0].mxu0 %v3749
      %v3991 = vpop.f32.mrb[0].mxu0
      %v3992 = vadd.f32 0.0, %v3991
      %v3993 = vpop.f32.mrb[0].mxu0
      %3994 = vmatprep.mubr.f32.mxu0 0.0
      %3995 = vmatmul.mubr.f32.gmra.mrb[0].mxu0 %v3752
      %v3996 = vpop.f32.mrb[0].mxu0
      %v3997 = vadd.f32 0.0, %v3996
      %v3998 = vpop.f32.mrb[0].mxu0
      %3999 = vmatprep.mubr.f32.mxu0 0.0
      %4000 = vmatmul.mubr.f32.gmra.mrb[0].mxu0 %v3755
      %v4001 = vpop.f32.mrb[0].mxu0
      %v4002 = vadd.f32 0.0, %v4001
      %v4003 = vpop.f32.mrb[0].mxu0
      %4004 = vdwg.mxu0
      %v4005 = vadd.f32 %v3575, %v3827
      %v4006 = vadd.f32 %v3576, %v3832
      %v4007 = vadd.f32 %v3577, %v3837
      %v4008 = vadd.f32 %v3578, %v3842
      %v4009 = vadd.f32 %v3579, %v3847
      %v4010 = vadd.f32 %v3580, %v3852
      %v4011 = vadd.f32 %v3581, %v3857
      %v4012 = vadd.f32 %v3582, %v3862
      %v4013 = vadd.f32 %v3583, %v3867
      %v4014 = vadd.f32 %v3584, %v3872
      %v4015 = vadd.f32 %v3585, %v3877
      %v4016 = vadd.f32 %v3586, %v3882
      %v4017 = vadd.f32 %v3587, %v3887
      %v4018 = vadd.f32 %v3588, %v3892
      %v4019 = vadd.f32 %v3589, %v3897
      %v4020 = vadd.f32 %v3590, %v3902
      %v4021 = vadd.f32 %v3591, %v3907
      %v4022 = vadd.f32 %v3592, %v3912
      %v4023 = vadd.f32 %v3593, %v3917
      %v4024 = vadd.f32 %v3594, %v3922
      %v4025 = vadd.f32 %v3595, %v3927
      %v4026 = vadd.f32 %v3596, %v3932
      %v4027 = vadd.f32 %v3597, %v3937
      %v4028 = vadd.f32 %v3598, %v3942
      %v4029 = vadd.f32 %v3599, %v3947
      %v4030 = vadd.f32 %v3600, %v3952
      %v4031 = vadd.f32 %v3601, %v3957
      %v4032 = vadd.f32 %v3602, %v3962
      %v4033 = vadd.f32 %v3603, %v3967
      %v4034 = vadd.f32 %v3604, %v3972
      %v4035 = vadd.f32 %v3605, %v3977
      %v4036 = vadd.f32 %v3606, %v3982
      %v4037 = vadd.f32 %v3607, %v3987
      %v4038 = vadd.f32 %v3608, %v3992
      %v4039 = vadd.f32 %v3609, %v3997
      %v4040 = vadd.f32 %v3610, %v4002
      %v4041 = vld [vmem:[%s2] sm:$0x1]
      %v4043 = vlaneseq
      %v4044 = vshrl.u32 %v4043, 7
      %v4045 = vsub.s32 0, %v4044
      %v4046 = vrot.slane %v4041, %v4045
      %v4048 = vadd.f32 %v4005, %v4046
      %v4049 = vadd.f32 %v4006, %v4046
      %v4050 = vadd.f32 %v4007, %v4046
      %v4051 = vadd.f32 %v4008, %v4046
      %v4052 = vadd.f32 %v4009, %v4046
      %v4053 = vadd.f32 %v4010, %v4046
      %v4054 = vadd.f32 %v4011, %v4046
      %v4055 = vadd.f32 %v4012, %v4046
      %v4056 = vadd.f32 %v4013, %v4046
      %v4057 = vadd.f32 %v4014, %v4046
      %v4058 = vadd.f32 %v4015, %v4046
      %v4059 = vadd.f32 %v4016, %v4046
      %v4060 = vadd.f32 %v4017, %v4046
      %v4061 = vadd.f32 %v4018, %v4046
      %v4062 = vadd.f32 %v4019, %v4046
      %v4063 = vadd.f32 %v4020, %v4046
      %v4064 = vadd.f32 %v4021, %v4046
      %v4065 = vadd.f32 %v4022, %v4046
      %v4066 = vadd.f32 %v4023, %v4046
      %v4067 = vadd.f32 %v4024, %v4046
      %v4068 = vadd.f32 %v4025, %v4046
      %v4069 = vadd.f32 %v4026, %v4046
      %v4070 = vadd.f32 %v4027, %v4046
      %v4071 = vadd.f32 %v4028, %v4046
      %v4072 = vadd.f32 %v4029, %v4046
      %v4073 = vadd.f32 %v4030, %v4046
      %v4074 = vadd.f32 %v4031, %v4046
      %v4075 = vadd.f32 %v4032, %v4046
      %v4076 = vadd.f32 %v4033, %v4046
      %v4077 = vadd.f32 %v4034, %v4046
      %v4078 = vadd.f32 %v4035, %v4046
      %v4079 = vadd.f32 %v4036, %v4046
      %v4080 = vadd.f32 %v4037, %v4046
      %v4081 = vadd.f32 %v4038, %v4046
      %v4082 = vadd.f32 %v4039, %v4046
      %v4083 = vadd.f32 %v4040, %v4046
      %4084 = vst.msk [vmem:[%s235] sm:$0xff] %vm317, %v4048
      %4085 = vst.msk [vmem:[%s235 + $0x8] sm:$0xff] %vm317, %v4049
      %4086 = vst.msk [vmem:[%s235 + $0x10] sm:$0xff] %vm317, %v4050
      %4087 = vst.msk [vmem:[%s235 + $0x18] sm:$0xff] %vm317, %v4051
      %4088 = vst.msk [vmem:[%s235 + $0x20] sm:$0xff] %vm317, %v4052
      %4089 = vst.msk [vmem:[%s235 + $0x28] sm:$0xff] %vm317, %v4053
      %4090 = vst.msk [vmem:[%s235 + $0x30] sm:$0xff] %vm317, %v4054
      %4091 = vst.msk [vmem:[%s235 + $0x38] sm:$0xff] %vm317, %v4055
      %4092 = vst.msk [vmem:[%s235 + $0x40] sm:$0xff] %vm317, %v4056
      %4093 = vst.msk [vmem:[%s235 + $0x48] sm:$0xff] %vm317, %v4057
      %4094 = vst.msk [vmem:[%s235 + $0x50] sm:$0xff] %vm317, %v4058
      %4095 = vst.msk [vmem:[%s235 + $0x58] sm:$0xff] %vm317, %v4059
      %4096 = vst.msk [vmem:[%s235 + $0x60] sm:$0xff] %vm317, %v4060
      %4097 = vst.msk [vmem:[%s235 + $0x68] sm:$0xff] %vm317, %v4061
      %4098 = vst.msk [vmem:[%s235 + $0x70] sm:$0xff] %vm317, %v4062
      %4099 = vst.msk [vmem:[%s235 + $0x78] sm:$0xff] %vm317, %v4063
      %4100 = vst.msk [vmem:[%s235 + $0x80] sm:$0xff] %vm317, %v4064
      %4101 = vst.msk [vmem:[%s235 + $0x88] sm:$0xff] %vm317, %v4065
      %4102 = vst.msk [vmem:[%s235 + $0x90] sm:$0xff] %vm317, %v4066
      %4103 = vst.msk [vmem:[%s235 + $0x98] sm:$0xff] %vm317, %v4067
      %4104 = vst.msk [vmem:[%s235 + $0xa0] sm:$0xff] %vm317, %v4068
      %4105 = vst.msk [vmem:[%s235 + $0xa8] sm:$0xff] %vm317, %v4069
      %4106 = vst.msk [vmem:[%s235 + $0xb0] sm:$0xff] %vm317, %v4070
      %4107 = vst.msk [vmem:[%s235 + $0xb8] sm:$0xff] %vm317, %v4071
      %4108 = vst.msk [vmem:[%s235 + $0xc0] sm:$0xff] %vm317, %v4072
      %4109 = vst.msk [vmem:[%s235 + $0xc8] sm:$0xff] %vm317, %v4073
      %4110 = vst.msk [vmem:[%s235 + $0xd0] sm:$0xff] %vm317, %v4074
      %4111 = vst.msk [vmem:[%s235 + $0xd8] sm:$0xff] %vm317, %v4075
      %4112 = vst.msk [vmem:[%s235 + $0xe0] sm:$0xff] %vm317, %v4076
      %4113 = vst.msk [vmem:[%s235 + $0xe8] sm:$0xff] %vm317, %v4077
      %4114 = vst.msk [vmem:[%s235 + $0xf0] sm:$0xff] %vm317, %v4078
      %4115 = vst.msk [vmem:[%s235 + $0xf8] sm:$0xff] %vm317, %v4079
      %4116 = vst.msk [vmem:[%s235 + $0x100] sm:$0xff] %vm317, %v4080
      %4117 = vst.msk [vmem:[%s235 + $0x108] sm:$0xff] %vm317, %v4081
      %4118 = vst.msk [vmem:[%s235 + $0x110] sm:$0xff] %vm317, %v4082
      %4119 = vst.msk [vmem:[%s235 + $0x118] sm:$0xff] %vm317, %v4083
      %v4120 = vlaneseq
      %v4121 = vshrl.u32 %v4120, 7
      %v4122 = vadd.s32 %v4121, 8
      %v4123 = vadd.s32 %v4121, 16
      %v4124 = vadd.s32 %v4121, 24
      %v4125 = vadd.s32 %v4121, 32
      %v4126 = vadd.s32 %v4121, 40
      %v4127 = vadd.s32 %v4121, 48
      %v4128 = vadd.s32 %v4121, 56
      %v4129 = vadd.s32 %v4121, 64
      %v4130 = vadd.s32 %v4121, 72
      %v4131 = vadd.s32 %v4121, 80
      %v4132 = vadd.s32 %v4121, 88
      %v4133 = vadd.s32 %v4121, 96
      %v4134 = vadd.s32 %v4121, 104
      %v4135 = vadd.s32 %v4121, 112
      %v4136 = vadd.s32 %v4121, 120
      %v4137 = vadd.s32 %v4121, 128
      %v4138 = vadd.s32 %v4121, 136
      %v4139 = vadd.s32 %v4121, 144
      %v4140 = vadd.s32 %v4121, 152
      %v4141 = vadd.s32 %v4121, 160
      %v4142 = vadd.s32 %v4121, 168
      %v4143 = vadd.s32 %v4121, 176
      %v4144 = vadd.s32 %v4121, 184
      %v4145 = vadd.s32 %v4121, 192
      %v4146 = vadd.s32 %v4121, 200
      %v4147 = vadd.s32 %v4121, 208
      %v4148 = vadd.s32 %v4121, 216
      %v4149 = vadd.s32 %v4121, 224
      %v4150 = vadd.s32 %v4121, 232
      %v4151 = vadd.s32 %v4121, 240
      %v4152 = vadd.s32 %v4121, 248
      %v4153 = vadd.s32 %v4121, 256
      %v4154 = vadd.s32 %v4121, 264
      %v4155 = vadd.s32 %v4121, 272
      %v4156 = vadd.s32 %v4121, 280
      %vm4157 = vcmp.lt.s32.totalorder %v4121, 0
      %v4158 = vsub.s32 0, %v4121
      %v4159 = vsel %vm4157, %v4158, %v4121
      %v4160 = vmul.u32.u64.compose %v4159, 3817748708
      %v4161 = vextract.low.u32 %v4160
      %v4162 = vextract.high.u32 %v4160
      %v4163 = vshrl.u32 %v4162, 4
      %v4164 = vmul.u32 %v4163, 18
      %v4165 = vsub.s32 %v4159, %v4164
      %v4166 = vsub.s32 0, %v4165
      %v4167 = vsel %vm4157, %v4166, %v4165
      %vm4168 = vcmp.lt.s32.totalorder %v4122, 0
      %v4169 = vsub.s32 0, %v4122
      %v4170 = vsel %vm4168, %v4169, %v4122
      %v4171 = vmul.u32.u64.compose %v4170, 3817748708
      %v4172 = vextract.low.u32 %v4171
      %v4173 = vextract.high.u32 %v4171
      %v4174 = vshrl.u32 %v4173, 4
      %v4175 = vmul.u32 %v4174, 18
      %v4176 = vsub.s32 %v4170, %v4175
      %v4177 = vsub.s32 0, %v4176
      %v4178 = vsel %vm4168, %v4177, %v4176
      %vm4179 = vcmp.lt.s32.totalorder %v4123, 0
      %v4180 = vsub.s32 0, %v4123
      %v4181 = vsel %vm4179, %v4180, %v4123
      %v4182 = vmul.u32.u64.compose %v4181, 3817748708
      %v4183 = vextract.low.u32 %v4182
      %v4184 = vextract.high.u32 %v4182
      %v4185 = vshrl.u32 %v4184, 4
      %v4186 = vmul.u32 %v4185, 18
      %v4187 = vsub.s32 %v4181, %v4186
      %v4188 = vsub.s32 0, %v4187
      %v4189 = vsel %vm4179, %v4188, %v4187
      %vm4190 = vcmp.lt.s32.totalorder %v4124, 0
      %v4191 = vsub.s32 0, %v4124
      %v4192 = vsel %vm4190, %v4191, %v4124
      %v4193 = vmul.u32.u64.compose %v4192, 3817748708
      %v4194 = vextract.low.u32 %v4193
      %v4195 = vextract.high.u32 %v4193
      %v4196 = vshrl.u32 %v4195, 4
      %v4197 = vmul.u32 %v4196, 18
      %v4198 = vsub.s32 %v4192, %v4197
      %v4199 = vsub.s32 0, %v4198
      %v4200 = vsel %vm4190, %v4199, %v4198
      %vm4201 = vcmp.lt.s32.totalorder %v4125, 0
      %v4202 = vsub.s32 0, %v4125
      %v4203 = vsel %vm4201, %v4202, %v4125
      %v4204 = vmul.u32.u64.compose %v4203, 3817748708
      %v4205 = vextract.low.u32 %v4204
      %v4206 = vextract.high.u32 %v4204
      %v4207 = vshrl.u32 %v4206, 4
      %v4208 = vmul.u32 %v4207, 18
      %v4209 = vsub.s32 %v4203, %v4208
      %v4210 = vsub.s32 0, %v4209
      %v4211 = vsel %vm4201, %v4210, %v4209
      %vm4212 = vcmp.lt.s32.totalorder %v4126, 0
      %v4213 = vsub.s32 0, %v4126
      %v4214 = vsel %vm4212, %v4213, %v4126
      %v4215 = vmul.u32.u64.compose %v4214, 3817748708
      %v4216 = vextract.low.u32 %v4215
      %v4217 = vextract.high.u32 %v4215
      %v4218 = vshrl.u32 %v4217, 4
      %v4219 = vmul.u32 %v4218, 18
      %v4220 = vsub.s32 %v4214, %v4219
      %v4221 = vsub.s32 0, %v4220
      %v4222 = vsel %vm4212, %v4221, %v4220
      %vm4223 = vcmp.lt.s32.totalorder %v4127, 0
      %v4224 = vsub.s32 0, %v4127
      %v4225 = vsel %vm4223, %v4224, %v4127
      %v4226 = vmul.u32.u64.compose %v4225, 3817748708
      %v4227 = vextract.low.u32 %v4226
      %v4228 = vextract.high.u32 %v4226
      %v4229 = vshrl.u32 %v4228, 4
      %v4230 = vmul.u32 %v4229, 18
      %v4231 = vsub.s32 %v4225, %v4230
      %v4232 = vsub.s32 0, %v4231
      %v4233 = vsel %vm4223, %v4232, %v4231
      %vm4234 = vcmp.lt.s32.totalorder %v4128, 0
      %v4235 = vsub.s32 0, %v4128
      %v4236 = vsel %vm4234, %v4235, %v4128
      %v4237 = vmul.u32.u64.compose %v4236, 3817748708
      %v4238 = vextract.low.u32 %v4237
      %v4239 = vextract.high.u32 %v4237
      %v4240 = vshrl.u32 %v4239, 4
      %v4241 = vmul.u32 %v4240, 18
      %v4242 = vsub.s32 %v4236, %v4241
      %v4243 = vsub.s32 0, %v4242
      %v4244 = vsel %vm4234, %v4243, %v4242
      %vm4245 = vcmp.lt.s32.totalorder %v4129, 0
      %v4246 = vsub.s32 0, %v4129
      %v4247 = vsel %vm4245, %v4246, %v4129
      %v4248 = vmul.u32.u64.compose %v4247, 3817748708
      %v4249 = vextract.low.u32 %v4248
      %v4250 = vextract.high.u32 %v4248
      %v4251 = vshrl.u32 %v4250, 4
      %v4252 = vmul.u32 %v4251, 18
      %v4253 = vsub.s32 %v4247, %v4252
      %v4254 = vsub.s32 0, %v4253
      %v4255 = vsel %vm4245, %v4254, %v4253
      %vm4256 = vcmp.lt.s32.totalorder %v4130, 0
      %v4257 = vsub.s32 0, %v4130
      %v4258 = vsel %vm4256, %v4257, %v4130
      %v4259 = vmul.u32.u64.compose %v4258, 3817748708
      %v4260 = vextract.low.u32 %v4259
      %v4261 = vextract.high.u32 %v4259
      %v4262 = vshrl.u32 %v4261, 4
      %v4263 = vmul.u32 %v4262, 18
      %v4264 = vsub.s32 %v4258, %v4263
      %v4265 = vsub.s32 0, %v4264
      %v4266 = vsel %vm4256, %v4265, %v4264
      %vm4267 = vcmp.lt.s32.totalorder %v4131, 0
      %v4268 = vsub.s32 0, %v4131
      %v4269 = vsel %vm4267, %v4268, %v4131
      %v4270 = vmul.u32.u64.compose %v4269, 3817748708
      %v4271 = vextract.low.u32 %v4270
      %v4272 = vextract.high.u32 %v4270
      %v4273 = vshrl.u32 %v4272, 4
      %v4274 = vmul.u32 %v4273, 18
      %v4275 = vsub.s32 %v4269, %v4274
      %v4276 = vsub.s32 0, %v4275
      %v4277 = vsel %vm4267, %v4276, %v4275
      %vm4278 = vcmp.lt.s32.totalorder %v4132, 0
      %v4279 = vsub.s32 0, %v4132
      %v4280 = vsel %vm4278, %v4279, %v4132
      %v4281 = vmul.u32.u64.compose %v4280, 3817748708
      %v4282 = vextract.low.u32 %v4281
      %v4283 = vextract.high.u32 %v4281
      %v4284 = vshrl.u32 %v4283, 4
      %v4285 = vmul.u32 %v4284, 18
      %v4286 = vsub.s32 %v4280, %v4285
      %v4287 = vsub.s32 0, %v4286
      %v4288 = vsel %vm4278, %v4287, %v4286
      %vm4289 = vcmp.lt.s32.totalorder %v4133, 0
      %v4290 = vsub.s32 0, %v4133
      %v4291 = vsel %vm4289, %v4290, %v4133
      %v4292 = vmul.u32.u64.compose %v4291, 3817748708
      %v4293 = vextract.low.u32 %v4292
      %v4294 = vextract.high.u32 %v4292
      %v4295 = vshrl.u32 %v4294, 4
      %v4296 = vmul.u32 %v4295, 18
      %v4297 = vsub.s32 %v4291, %v4296
      %v4298 = vsub.s32 0, %v4297
      %v4299 = vsel %vm4289, %v4298, %v4297
      %vm4300 = vcmp.lt.s32.totalorder %v4134, 0
      %v4301 = vsub.s32 0, %v4134
      %v4302 = vsel %vm4300, %v4301, %v4134
      %v4303 = vmul.u32.u64.compose %v4302, 3817748708
      %v4304 = vextract.low.u32 %v4303
      %v4305 = vextract.high.u32 %v4303
      %v4306 = vshrl.u32 %v4305, 4
      %v4307 = vmul.u32 %v4306, 18
      %v4308 = vsub.s32 %v4302, %v4307
      %v4309 = vsub.s32 0, %v4308
      %v4310 = vsel %vm4300, %v4309, %v4308
      %vm4311 = vcmp.lt.s32.totalorder %v4135, 0
      %v4312 = vsub.s32 0, %v4135
      %v4313 = vsel %vm4311, %v4312, %v4135
      %v4314 = vmul.u32.u64.compose %v4313, 3817748708
      %v4315 = vextract.low.u32 %v4314
      %v4316 = vextract.high.u32 %v4314
      %v4317 = vshrl.u32 %v4316, 4
      %v4318 = vmul.u32 %v4317, 18
      %v4319 = vsub.s32 %v4313, %v4318
      %v4320 = vsub.s32 0, %v4319
      %v4321 = vsel %vm4311, %v4320, %v4319
      %vm4322 = vcmp.lt.s32.totalorder %v4136, 0
      %v4323 = vsub.s32 0, %v4136
      %v4324 = vsel %vm4322, %v4323, %v4136
      %v4325 = vmul.u32.u64.compose %v4324, 3817748708
      %v4326 = vextract.low.u32 %v4325
      %v4327 = vextract.high.u32 %v4325
      %v4328 = vshrl.u32 %v4327, 4
      %v4329 = vmul.u32 %v4328, 18
      %v4330 = vsub.s32 %v4324, %v4329
      %v4331 = vsub.s32 0, %v4330
      %v4332 = vsel %vm4322, %v4331, %v4330
      %vm4333 = vcmp.lt.s32.totalorder %v4137, 0
      %v4334 = vsub.s32 0, %v4137
      %v4335 = vsel %vm4333, %v4334, %v4137
      %v4336 = vmul.u32.u64.compose %v4335, 3817748708
      %v4337 = vextract.low.u32 %v4336
      %v4338 = vextract.high.u32 %v4336
      %v4339 = vshrl.u32 %v4338, 4
      %v4340 = vmul.u32 %v4339, 18
      %v4341 = vsub.s32 %v4335, %v4340
      %v4342 = vsub.s32 0, %v4341
      %v4343 = vsel %vm4333, %v4342, %v4341
      %vm4344 = vcmp.lt.s32.totalorder %v4138, 0
      %v4345 = vsub.s32 0, %v4138
      %v4346 = vsel %vm4344, %v4345, %v4138
      %v4347 = vmul.u32.u64.compose %v4346, 3817748708
      %v4348 = vextract.low.u32 %v4347
      %v4349 = vextract.high.u32 %v4347
      %v4350 = vshrl.u32 %v4349, 4
      %v4351 = vmul.u32 %v4350, 18
      %v4352 = vsub.s32 %v4346, %v4351
      %v4353 = vsub.s32 0, %v4352
      %v4354 = vsel %vm4344, %v4353, %v4352
      %vm4355 = vcmp.lt.s32.totalorder %v4139, 0
      %v4356 = vsub.s32 0, %v4139
      %v4357 = vsel %vm4355, %v4356, %v4139
      %v4358 = vmul.u32.u64.compose %v4357, 3817748708
      %v4359 = vextract.low.u32 %v4358
      %v4360 = vextract.high.u32 %v4358
      %v4361 = vshrl.u32 %v4360, 4
      %v4362 = vmul.u32 %v4361, 18
      %v4363 = vsub.s32 %v4357, %v4362
      %v4364 = vsub.s32 0, %v4363
      %v4365 = vsel %vm4355, %v4364, %v4363
      %vm4366 = vcmp.lt.s32.totalorder %v4140, 0
      %v4367 = vsub.s32 0, %v4140
      %v4368 = vsel %vm4366, %v4367, %v4140
      %v4369 = vmul.u32.u64.compose %v4368, 3817748708
      %v4370 = vextract.low.u32 %v4369
      %v4371 = vextract.high.u32 %v4369
      %v4372 = vshrl.u32 %v4371, 4
      %v4373 = vmul.u32 %v4372, 18
      %v4374 = vsub.s32 %v4368, %v4373
      %v4375 = vsub.s32 0, %v4374
      %v4376 = vsel %vm4366, %v4375, %v4374
      %vm4377 = vcmp.lt.s32.totalorder %v4141, 0
      %v4378 = vsub.s32 0, %v4141
      %v4379 = vsel %vm4377, %v4378, %v4141
      %v4380 = vmul.u32.u64.compose %v4379, 3817748708
      %v4381 = vextract.low.u32 %v4380
      %v4382 = vextract.high.u32 %v4380
      %v4383 = vshrl.u32 %v4382, 4
      %v4384 = vmul.u32 %v4383, 18
      %v4385 = vsub.s32 %v4379, %v4384
      %v4386 = vsub.s32 0, %v4385
      %v4387 = vsel %vm4377, %v4386, %v4385
      %vm4388 = vcmp.lt.s32.totalorder %v4142, 0
      %v4389 = vsub.s32 0, %v4142
      %v4390 = vsel %vm4388, %v4389, %v4142
      %v4391 = vmul.u32.u64.compose %v4390, 3817748708
      %v4392 = vextract.low.u32 %v4391
      %v4393 = vextract.high.u32 %v4391
      %v4394 = vshrl.u32 %v4393, 4
      %v4395 = vmul.u32 %v4394, 18
      %v4396 = vsub.s32 %v4390, %v4395
      %v4397 = vsub.s32 0, %v4396
      %v4398 = vsel %vm4388, %v4397, %v4396
      %vm4399 = vcmp.lt.s32.totalorder %v4143, 0
      %v4400 = vsub.s32 0, %v4143
      %v4401 = vsel %vm4399, %v4400, %v4143
      %v4402 = vmul.u32.u64.compose %v4401, 3817748708
      %v4403 = vextract.low.u32 %v4402
      %v4404 = vextract.high.u32 %v4402
      %v4405 = vshrl.u32 %v4404, 4
      %v4406 = vmul.u32 %v4405, 18
      %v4407 = vsub.s32 %v4401, %v4406
      %v4408 = vsub.s32 0, %v4407
      %v4409 = vsel %vm4399, %v4408, %v4407
      %vm4410 = vcmp.lt.s32.totalorder %v4144, 0
      %v4411 = vsub.s32 0, %v4144
      %v4412 = vsel %vm4410, %v4411, %v4144
      %v4413 = vmul.u32.u64.compose %v4412, 3817748708
      %v4414 = vextract.low.u32 %v4413
      %v4415 = vextract.high.u32 %v4413
      %v4416 = vshrl.u32 %v4415, 4
      %v4417 = vmul.u32 %v4416, 18
      %v4418 = vsub.s32 %v4412, %v4417
      %v4419 = vsub.s32 0, %v4418
      %v4420 = vsel %vm4410, %v4419, %v4418
      %vm4421 = vcmp.lt.s32.totalorder %v4145, 0
      %v4422 = vsub.s32 0, %v4145
      %v4423 = vsel %vm4421, %v4422, %v4145
      %v4424 = vmul.u32.u64.compose %v4423, 3817748708
      %v4425 = vextract.low.u32 %v4424
      %v4426 = vextract.high.u32 %v4424
      %v4427 = vshrl.u32 %v4426, 4
      %v4428 = vmul.u32 %v4427, 18
      %v4429 = vsub.s32 %v4423, %v4428
      %v4430 = vsub.s32 0, %v4429
      %v4431 = vsel %vm4421, %v4430, %v4429
      %vm4432 = vcmp.lt.s32.totalorder %v4146, 0
      %v4433 = vsub.s32 0, %v4146
      %v4434 = vsel %vm4432, %v4433, %v4146
      %v4435 = vmul.u32.u64.compose %v4434, 3817748708
      %v4436 = vextract.low.u32 %v4435
      %v4437 = vextract.high.u32 %v4435
      %v4438 = vshrl.u32 %v4437, 4
      %v4439 = vmul.u32 %v4438, 18
      %v4440 = vsub.s32 %v4434, %v4439
      %v4441 = vsub.s32 0, %v4440
      %v4442 = vsel %vm4432, %v4441, %v4440
      %vm4443 = vcmp.lt.s32.totalorder %v4147, 0
      %v4444 = vsub.s32 0, %v4147
      %v4445 = vsel %vm4443, %v4444, %v4147
      %v4446 = vmul.u32.u64.compose %v4445, 3817748708
      %v4447 = vextract.low.u32 %v4446
      %v4448 = vextract.high.u32 %v4446
      %v4449 = vshrl.u32 %v4448, 4
      %v4450 = vmul.u32 %v4449, 18
      %v4451 = vsub.s32 %v4445, %v4450
      %v4452 = vsub.s32 0, %v4451
      %v4453 = vsel %vm4443, %v4452, %v4451
      %vm4454 = vcmp.lt.s32.totalorder %v4148, 0
      %v4455 = vsub.s32 0, %v4148
      %v4456 = vsel %vm4454, %v4455, %v4148
      %v4457 = vmul.u32.u64.compose %v4456, 3817748708
      %v4458 = vextract.low.u32 %v4457
      %v4459 = vextract.high.u32 %v4457
      %v4460 = vshrl.u32 %v4459, 4
      %v4461 = vmul.u32 %v4460, 18
      %v4462 = vsub.s32 %v4456, %v4461
      %v4463 = vsub.s32 0, %v4462
      %v4464 = vsel %vm4454, %v4463, %v4462
      %vm4465 = vcmp.lt.s32.totalorder %v4149, 0
      %v4466 = vsub.s32 0, %v4149
      %v4467 = vsel %vm4465, %v4466, %v4149
      %v4468 = vmul.u32.u64.compose %v4467, 3817748708
      %v4469 = vextract.low.u32 %v4468
      %v4470 = vextract.high.u32 %v4468
      %v4471 = vshrl.u32 %v4470, 4
      %v4472 = vmul.u32 %v4471, 18
      %v4473 = vsub.s32 %v4467, %v4472
      %v4474 = vsub.s32 0, %v4473
      %v4475 = vsel %vm4465, %v4474, %v4473
      %vm4476 = vcmp.lt.s32.totalorder %v4150, 0
      %v4477 = vsub.s32 0, %v4150
      %v4478 = vsel %vm4476, %v4477, %v4150
      %v4479 = vmul.u32.u64.compose %v4478, 3817748708
      %v4480 = vextract.low.u32 %v4479
      %v4481 = vextract.high.u32 %v4479
      %v4482 = vshrl.u32 %v4481, 4
      %v4483 = vmul.u32 %v4482, 18
      %v4484 = vsub.s32 %v4478, %v4483
      %v4485 = vsub.s32 0, %v4484
      %v4486 = vsel %vm4476, %v4485, %v4484
      %vm4487 = vcmp.lt.s32.totalorder %v4151, 0
      %v4488 = vsub.s32 0, %v4151
      %v4489 = vsel %vm4487, %v4488, %v4151
      %v4490 = vmul.u32.u64.compose %v4489, 3817748708
      %v4491 = vextract.low.u32 %v4490
      %v4492 = vextract.high.u32 %v4490
      %v4493 = vshrl.u32 %v4492, 4
      %v4494 = vmul.u32 %v4493, 18
      %v4495 = vsub.s32 %v4489, %v4494
      %v4496 = vsub.s32 0, %v4495
      %v4497 = vsel %vm4487, %v4496, %v4495
      %vm4498 = vcmp.lt.s32.totalorder %v4152, 0
      %v4499 = vsub.s32 0, %v4152
      %v4500 = vsel %vm4498, %v4499, %v4152
      %v4501 = vmul.u32.u64.compose %v4500, 3817748708
      %v4502 = vextract.low.u32 %v4501
      %v4503 = vextract.high.u32 %v4501
      %v4504 = vshrl.u32 %v4503, 4
      %v4505 = vmul.u32 %v4504, 18
      %v4506 = vsub.s32 %v4500, %v4505
      %v4507 = vsub.s32 0, %v4506
      %v4508 = vsel %vm4498, %v4507, %v4506
      %vm4509 = vcmp.lt.s32.totalorder %v4153, 0
      %v4510 = vsub.s32 0, %v4153
      %v4511 = vsel %vm4509, %v4510, %v4153
      %v4512 = vmul.u32.u64.compose %v4511, 3817748708
      %v4513 = vextract.low.u32 %v4512
      %v4514 = vextract.high.u32 %v4512
      %v4515 = vshrl.u32 %v4514, 4
      %v4516 = vmul.u32 %v4515, 18
      %v4517 = vsub.s32 %v4511, %v4516
      %v4518 = vsub.s32 0, %v4517
      %v4519 = vsel %vm4509, %v4518, %v4517
      %vm4520 = vcmp.lt.s32.totalorder %v4154, 0
      %v4521 = vsub.s32 0, %v4154
      %v4522 = vsel %vm4520, %v4521, %v4154
      %v4523 = vmul.u32.u64.compose %v4522, 3817748708
      %v4524 = vextract.low.u32 %v4523
      %v4525 = vextract.high.u32 %v4523
      %v4526 = vshrl.u32 %v4525, 4
      %v4527 = vmul.u32 %v4526, 18
      %v4528 = vsub.s32 %v4522, %v4527
      %v4529 = vsub.s32 0, %v4528
      %v4530 = vsel %vm4520, %v4529, %v4528
      %vm4531 = vcmp.lt.s32.totalorder %v4155, 0
      %v4532 = vsub.s32 0, %v4155
      %v4533 = vsel %vm4531, %v4532, %v4155
      %v4534 = vmul.u32.u64.compose %v4533, 3817748708
      %v4535 = vextract.low.u32 %v4534
      %v4536 = vextract.high.u32 %v4534
      %v4537 = vshrl.u32 %v4536, 4
      %v4538 = vmul.u32 %v4537, 18
      %v4539 = vsub.s32 %v4533, %v4538
      %v4540 = vsub.s32 0, %v4539
      %v4541 = vsel %vm4531, %v4540, %v4539
      %vm4542 = vcmp.lt.s32.totalorder %v4156, 0
      %v4543 = vsub.s32 0, %v4156
      %v4544 = vsel %vm4542, %v4543, %v4156
      %v4545 = vmul.u32.u64.compose %v4544, 3817748708
      %v4546 = vextract.low.u32 %v4545
      %v4547 = vextract.high.u32 %v4545
      %v4548 = vshrl.u32 %v4547, 4
      %v4549 = vmul.u32 %v4548, 18
      %v4550 = vsub.s32 %v4544, %v4549
      %v4551 = vsub.s32 0, %v4550
      %v4552 = vsel %vm4542, %v4551, %v4550
      %vm4553 = vcmp.ne.s32.totalorder %v4167, 0
      %vm4554 = vcmp.ne.s32.totalorder %v4178, 0
      %vm4555 = vcmp.ne.s32.totalorder %v4189, 0
      %vm4556 = vcmp.ne.s32.totalorder %v4200, 0
      %vm4557 = vcmp.ne.s32.totalorder %v4211, 0
      %vm4558 = vcmp.ne.s32.totalorder %v4222, 0
      %vm4559 = vcmp.ne.s32.totalorder %v4233, 0
      %vm4560 = vcmp.ne.s32.totalorder %v4244, 0
      %vm4561 = vcmp.ne.s32.totalorder %v4255, 0
      %vm4562 = vcmp.ne.s32.totalorder %v4266, 0
      %vm4563 = vcmp.ne.s32.totalorder %v4277, 0
      %vm4564 = vcmp.ne.s32.totalorder %v4288, 0
      %vm4565 = vcmp.ne.s32.totalorder %v4299, 0
      %vm4566 = vcmp.ne.s32.totalorder %v4310, 0
      %vm4567 = vcmp.ne.s32.totalorder %v4321, 0
      %vm4568 = vcmp.ne.s32.totalorder %v4332, 0
      %vm4569 = vcmp.ne.s32.totalorder %v4343, 0
      %vm4570 = vcmp.ne.s32.totalorder %v4354, 0
      %vm4571 = vcmp.ne.s32.totalorder %v4365, 0
      %vm4572 = vcmp.ne.s32.totalorder %v4376, 0
      %vm4573 = vcmp.ne.s32.totalorder %v4387, 0
      %vm4574 = vcmp.ne.s32.totalorder %v4398, 0
      %vm4575 = vcmp.ne.s32.totalorder %v4409, 0
      %vm4576 = vcmp.ne.s32.totalorder %v4420, 0
      %vm4577 = vcmp.ne.s32.totalorder %v4431, 0
      %vm4578 = vcmp.ne.s32.totalorder %v4442, 0
      %vm4579 = vcmp.ne.s32.totalorder %v4453, 0
      %vm4580 = vcmp.ne.s32.totalorder %v4464, 0
      %vm4581 = vcmp.ne.s32.totalorder %v4475, 0
      %vm4582 = vcmp.ne.s32.totalorder %v4486, 0
      %vm4583 = vcmp.ne.s32.totalorder %v4497, 0
      %vm4584 = vcmp.ne.s32.totalorder %v4508, 0
      %vm4585 = vcmp.ne.s32.totalorder %v4519, 0
      %vm4586 = vcmp.ne.s32.totalorder %v4530, 0
      %vm4587 = vcmp.ne.s32.totalorder %v4541, 0
      %vm4588 = vcmp.ne.s32.totalorder %v4552, 0
      %vm4589 = vcmp.lt.s32.totalorder %v4167, 0
      %vm4590 = vcmp.lt.s32.totalorder %v4178, 0
      %vm4591 = vcmp.lt.s32.totalorder %v4189, 0
      %vm4592 = vcmp.lt.s32.totalorder %v4200, 0
      %vm4593 = vcmp.lt.s32.totalorder %v4211, 0
      %vm4594 = vcmp.lt.s32.totalorder %v4222, 0
      %vm4595 = vcmp.lt.s32.totalorder %v4233, 0
      %vm4596 = vcmp.lt.s32.totalorder %v4244, 0
      %vm4597 = vcmp.lt.s32.totalorder %v4255, 0
      %vm4598 = vcmp.lt.s32.totalorder %v4266, 0
      %vm4599 = vcmp.lt.s32.totalorder %v4277, 0
      %vm4600 = vcmp.lt.s32.totalorder %v4288, 0
      %vm4601 = vcmp.lt.s32.totalorder %v4299, 0
      %vm4602 = vcmp.lt.s32.totalorder %v4310, 0
      %vm4603 = vcmp.lt.s32.totalorder %v4321, 0
      %vm4604 = vcmp.lt.s32.totalorder %v4332, 0
      %vm4605 = vcmp.lt.s32.totalorder %v4343, 0
      %vm4606 = vcmp.lt.s32.totalorder %v4354, 0
      %vm4607 = vcmp.lt.s32.totalorder %v4365, 0
      %vm4608 = vcmp.lt.s32.totalorder %v4376, 0
      %vm4609 = vcmp.lt.s32.totalorder %v4387, 0
      %vm4610 = vcmp.lt.s32.totalorder %v4398, 0
      %vm4611 = vcmp.lt.s32.totalorder %v4409, 0
      %vm4612 = vcmp.lt.s32.totalorder %v4420, 0
      %vm4613 = vcmp.lt.s32.totalorder %v4431, 0
      %vm4614 = vcmp.lt.s32.totalorder %v4442, 0
      %vm4615 = vcmp.lt.s32.totalorder %v4453, 0
      %vm4616 = vcmp.lt.s32.totalorder %v4464, 0
      %vm4617 = vcmp.lt.s32.totalorder %v4475, 0
      %vm4618 = vcmp.lt.s32.totalorder %v4486, 0
      %vm4619 = vcmp.lt.s32.totalorder %v4497, 0
      %vm4620 = vcmp.lt.s32.totalorder %v4508, 0
      %vm4621 = vcmp.lt.s32.totalorder %v4519, 0
      %vm4622 = vcmp.lt.s32.totalorder %v4530, 0
      %vm4623 = vcmp.lt.s32.totalorder %v4541, 0
      %vm4624 = vcmp.lt.s32.totalorder %v4552, 0
      %vm4625 = vmand %vm4589, %vm4553
      %vm4626 = vmand %vm4590, %vm4554
      %vm4627 = vmand %vm4591, %vm4555
      %vm4628 = vmand %vm4592, %vm4556
      %vm4629 = vmand %vm4593, %vm4557
      %vm4630 = vmand %vm4594, %vm4558
      %vm4631 = vmand %vm4595, %vm4559
      %vm4632 = vmand %vm4596, %vm4560
      %vm4633 = vmand %vm4597, %vm4561
      %vm4634 = vmand %vm4598, %vm4562
      %vm4635 = vmand %vm4599, %vm4563
      %vm4636 = vmand %vm4600, %vm4564
      %vm4637 = vmand %vm4601, %vm4565
      %vm4638 = vmand %vm4602, %vm4566
      %vm4639 = vmand %vm4603, %vm4567
      %vm4640 = vmand %vm4604, %vm4568
      %vm4641 = vmand %vm4605, %vm4569
      %vm4642 = vmand %vm4606, %vm4570
      %vm4643 = vmand %vm4607, %vm4571
      %vm4644 = vmand %vm4608, %vm4572
      %vm4645 = vmand %vm4609, %vm4573
      %vm4646 = vmand %vm4610, %vm4574
      %vm4647 = vmand %vm4611, %vm4575
      %vm4648 = vmand %vm4612, %vm4576
      %vm4649 = vmand %vm4613, %vm4577
      %vm4650 = vmand %vm4614, %vm4578
      %vm4651 = vmand %vm4615, %vm4579
      %vm4652 = vmand %vm4616, %vm4580
      %vm4653 = vmand %vm4617, %vm4581
      %vm4654 = vmand %vm4618, %vm4582
      %vm4655 = vmand %vm4619, %vm4583
      %vm4656 = vmand %vm4620, %vm4584
      %vm4657 = vmand %vm4621, %vm4585
      %vm4658 = vmand %vm4622, %vm4586
      %vm4659 = vmand %vm4623, %vm4587
      %vm4660 = vmand %vm4624, %vm4588
      %v4661 = vadd.s32 %v4167, 18
      %v4662 = vadd.s32 %v4178, 18
      %v4663 = vadd.s32 %v4189, 18
      %v4664 = vadd.s32 %v4200, 18
      %v4665 = vadd.s32 %v4211, 18
      %v4666 = vadd.s32 %v4222, 18
      %v4667 = vadd.s32 %v4233, 18
      %v4668 = vadd.s32 %v4244, 18
      %v4669 = vadd.s32 %v4255, 18
      %v4670 = vadd.s32 %v4266, 18
      %v4671 = vadd.s32 %v4277, 18
      %v4672 = vadd.s32 %v4288, 18
      %v4673 = vadd.s32 %v4299, 18
      %v4674 = vadd.s32 %v4310, 18
      %v4675 = vadd.s32 %v4321, 18
      %v4676 = vadd.s32 %v4332, 18
      %v4677 = vadd.s32 %v4343, 18
      %v4678 = vadd.s32 %v4354, 18
      %v4679 = vadd.s32 %v4365, 18
      %v4680 = vadd.s32 %v4376, 18
      %v4681 = vadd.s32 %v4387, 18
      %v4682 = vadd.s32 %v4398, 18
      %v4683 = vadd.s32 %v4409, 18
      %v4684 = vadd.s32 %v4420, 18
      %v4685 = vadd.s32 %v4431, 18
      %v4686 = vadd.s32 %v4442, 18
      %v4687 = vadd.s32 %v4453, 18
      %v4688 = vadd.s32 %v4464, 18
      %v4689 = vadd.s32 %v4475, 18
      %v4690 = vadd.s32 %v4486, 18
      %v4691 = vadd.s32 %v4497, 18
      %v4692 = vadd.s32 %v4508, 18
      %v4693 = vadd.s32 %v4519, 18
      %v4694 = vadd.s32 %v4530, 18
      %v4695 = vadd.s32 %v4541, 18
      %v4696 = vadd.s32 %v4552, 18
      %v4697 = vsel %vm4625, %v4661, %v4167
      %v4698 = vsel %vm4626, %v4662, %v4178
      %v4699 = vsel %vm4627, %v4663, %v4189
      %v4700 = vsel %vm4628, %v4664, %v4200
      %v4701 = vsel %vm4629, %v4665, %v4211
      %v4702 = vsel %vm4630, %v4666, %v4222
      %v4703 = vsel %vm4631, %v4667, %v4233
      %v4704 = vsel %vm4632, %v4668, %v4244
      %v4705 = vsel %vm4633, %v4669, %v4255
      %v4706 = vsel %vm4634, %v4670, %v4266
      %v4707 = vsel %vm4635, %v4671, %v4277
      %v4708 = vsel %vm4636, %v4672, %v4288
      %v4709 = vsel %vm4637, %v4673, %v4299
      %v4710 = vsel %vm4638, %v4674, %v4310
      %v4711 = vsel %vm4639, %v4675, %v4321
      %v4712 = vsel %vm4640, %v4676, %v4332
      %v4713 = vsel %vm4641, %v4677, %v4343
      %v4714 = vsel %vm4642, %v4678, %v4354
      %v4715 = vsel %vm4643, %v4679, %v4365
      %v4716 = vsel %vm4644, %v4680, %v4376
      %v4717 = vsel %vm4645, %v4681, %v4387
      %v4718 = vsel %vm4646, %v4682, %v4398
      %v4719 = vsel %vm4647, %v4683, %v4409
      %v4720 = vsel %vm4648, %v4684, %v4420
      %v4721 = vsel %vm4649, %v4685, %v4431
      %v4722 = vsel %vm4650, %v4686, %v4442
      %v4723 = vsel %vm4651, %v4687, %v4453
      %v4724 = vsel %vm4652, %v4688, %v4464
      %v4725 = vsel %vm4653, %v4689, %v4475
      %v4726 = vsel %vm4654, %v4690, %v4486
      %v4727 = vsel %vm4655, %v4691, %v4497
      %v4728 = vsel %vm4656, %v4692, %v4508
      %v4729 = vsel %vm4657, %v4693, %v4519
      %v4730 = vsel %vm4658, %v4694, %v4530
      %v4731 = vsel %vm4659, %v4695, %v4541
      %v4732 = vsel %vm4660, %v4696, %v4552
      %vm4733 = vcmp.lt.s32.totalorder %v4697, 16
      %vm4734 = vcmp.lt.s32.totalorder %v4698, 16
      %vm4735 = vcmp.lt.s32.totalorder %v4699, 16
      %vm4736 = vcmp.lt.s32.totalorder %v4700, 16
      %vm4737 = vcmp.lt.s32.totalorder %v4701, 16
      %vm4738 = vcmp.lt.s32.totalorder %v4702, 16
      %vm4739 = vcmp.lt.s32.totalorder %v4703, 16
      %vm4740 = vcmp.lt.s32.totalorder %v4704, 16
      %vm4741 = vcmp.lt.s32.totalorder %v4705, 16
      %vm4742 = vcmp.lt.s32.totalorder %v4706, 16
      %vm4743 = vcmp.lt.s32.totalorder %v4707, 16
      %vm4744 = vcmp.lt.s32.totalorder %v4708, 16
      %vm4745 = vcmp.lt.s32.totalorder %v4709, 16
      %vm4746 = vcmp.lt.s32.totalorder %v4710, 16
      %vm4747 = vcmp.lt.s32.totalorder %v4711, 16
      %vm4748 = vcmp.lt.s32.totalorder %v4712, 16
      %vm4749 = vcmp.lt.s32.totalorder %v4713, 16
      %vm4750 = vcmp.lt.s32.totalorder %v4714, 16
      %vm4751 = vcmp.lt.s32.totalorder %v4715, 16
      %vm4752 = vcmp.lt.s32.totalorder %v4716, 16
      %vm4753 = vcmp.lt.s32.totalorder %v4717, 16
      %vm4754 = vcmp.lt.s32.totalorder %v4718, 16
      %vm4755 = vcmp.lt.s32.totalorder %v4719, 16
      %vm4756 = vcmp.lt.s32.totalorder %v4720, 16
      %vm4757 = vcmp.lt.s32.totalorder %v4721, 16
      %vm4758 = vcmp.lt.s32.totalorder %v4722, 16
      %vm4759 = vcmp.lt.s32.totalorder %v4723, 16
      %vm4760 = vcmp.lt.s32.totalorder %v4724, 16
      %vm4761 = vcmp.lt.s32.totalorder %v4725, 16
      %vm4762 = vcmp.lt.s32.totalorder %v4726, 16
      %vm4763 = vcmp.lt.s32.totalorder %v4727, 16
      %vm4764 = vcmp.lt.s32.totalorder %v4728, 16
      %vm4765 = vcmp.lt.s32.totalorder %v4729, 16
      %vm4766 = vcmp.lt.s32.totalorder %v4730, 16
      %vm4767 = vcmp.lt.s32.totalorder %v4731, 16
      %vm4768 = vcmp.lt.s32.totalorder %v4732, 16
      %v4769 = vsel %vm4733, 1, 0
      %v4770 = vsel %vm4734, 1, 0
      %v4771 = vsel %vm4735, 1, 0
      %v4772 = vsel %vm4736, 1, 0
      %v4773 = vsel %vm4737, 1, 0
      %v4774 = vsel %vm4738, 1, 0
      %v4775 = vsel %vm4739, 1, 0
      %v4776 = vsel %vm4740, 1, 0
      %v4777 = vsel %vm4741, 1, 0
      %v4778 = vsel %vm4742, 1, 0
      %v4779 = vsel %vm4743, 1, 0
      %v4780 = vsel %vm4744, 1, 0
      %v4781 = vsel %vm4745, 1, 0
      %v4782 = vsel %vm4746, 1, 0
      %v4783 = vsel %vm4747, 1, 0
      %v4784 = vsel %vm4748, 1, 0
      %v4785 = vsel %vm4749, 1, 0
      %v4786 = vsel %vm4750, 1, 0
      %v4787 = vsel %vm4751, 1, 0
      %v4788 = vsel %vm4752, 1, 0
      %v4789 = vsel %vm4753, 1, 0
      %v4790 = vsel %vm4754, 1, 0
      %v4791 = vsel %vm4755, 1, 0
      %v4792 = vsel %vm4756, 1, 0
      %v4793 = vsel %vm4757, 1, 0
      %v4794 = vsel %vm4758, 1, 0
      %v4795 = vsel %vm4759, 1, 0
      %v4796 = vsel %vm4760, 1, 0
      %v4797 = vsel %vm4761, 1, 0
      %v4798 = vsel %vm4762, 1, 0
      %v4799 = vsel %vm4763, 1, 0
      %v4800 = vsel %vm4764, 1, 0
      %v4801 = vsel %vm4765, 1, 0
      %v4802 = vsel %vm4766, 1, 0
      %v4803 = vsel %vm4767, 1, 0
      %v4804 = vsel %vm4768, 1, 0
      %vm4805 = vcmp.eq.s32.totalorder %v4769, 1
      %vm4806 = vcmp.eq.s32.totalorder %v4770, 1
      %vm4807 = vcmp.eq.s32.totalorder %v4771, 1
      %vm4808 = vcmp.eq.s32.totalorder %v4772, 1
      %vm4809 = vcmp.eq.s32.totalorder %v4773, 1
      %vm4810 = vcmp.eq.s32.totalorder %v4774, 1
      %vm4811 = vcmp.eq.s32.totalorder %v4775, 1
      %vm4812 = vcmp.eq.s32.totalorder %v4776, 1
      %vm4813 = vcmp.eq.s32.totalorder %v4777, 1
      %vm4814 = vcmp.eq.s32.totalorder %v4778, 1
      %vm4815 = vcmp.eq.s32.totalorder %v4779, 1
      %vm4816 = vcmp.eq.s32.totalorder %v4780, 1
      %vm4817 = vcmp.eq.s32.totalorder %v4781, 1
      %vm4818 = vcmp.eq.s32.totalorder %v4782, 1
      %vm4819 = vcmp.eq.s32.totalorder %v4783, 1
      %vm4820 = vcmp.eq.s32.totalorder %v4784, 1
      %vm4821 = vcmp.eq.s32.totalorder %v4785, 1
      %vm4822 = vcmp.eq.s32.totalorder %v4786, 1
      %vm4823 = vcmp.eq.s32.totalorder %v4787, 1
      %vm4824 = vcmp.eq.s32.totalorder %v4788, 1
      %vm4825 = vcmp.eq.s32.totalorder %v4789, 1
      %vm4826 = vcmp.eq.s32.totalorder %v4790, 1
      %vm4827 = vcmp.eq.s32.totalorder %v4791, 1
      %vm4828 = vcmp.eq.s32.totalorder %v4792, 1
      %vm4829 = vcmp.eq.s32.totalorder %v4793, 1
      %vm4830 = vcmp.eq.s32.totalorder %v4794, 1
      %vm4831 = vcmp.eq.s32.totalorder %v4795, 1
      %vm4832 = vcmp.eq.s32.totalorder %v4796, 1
      %vm4833 = vcmp.eq.s32.totalorder %v4797, 1
      %vm4834 = vcmp.eq.s32.totalorder %v4798, 1
      %vm4835 = vcmp.eq.s32.totalorder %v4799, 1
      %vm4836 = vcmp.eq.s32.totalorder %v4800, 1
      %vm4837 = vcmp.eq.s32.totalorder %v4801, 1
      %vm4838 = vcmp.eq.s32.totalorder %v4802, 1
      %vm4839 = vcmp.eq.s32.totalorder %v4803, 1
      %vm4840 = vcmp.eq.s32.totalorder %v4804, 1
      %v4841 = vsel %vm4805, %v4048, 0.0
      %v4842 = vsel %vm4806, %v4049, 0.0
      %v4843 = vsel %vm4807, %v4050, 0.0
      %v4844 = vsel %vm4808, %v4051, 0.0
      %v4845 = vsel %vm4809, %v4052, 0.0
      %v4846 = vsel %vm4810, %v4053, 0.0
      %v4847 = vsel %vm4811, %v4054, 0.0
      %v4848 = vsel %vm4812, %v4055, 0.0
      %v4849 = vsel %vm4813, %v4056, 0.0
      %v4850 = vsel %vm4814, %v4057, 0.0
      %v4851 = vsel %vm4815, %v4058, 0.0
      %v4852 = vsel %vm4816, %v4059, 0.0
      %v4853 = vsel %vm4817, %v4060, 0.0
      %v4854 = vsel %vm4818, %v4061, 0.0
      %v4855 = vsel %vm4819, %v4062, 0.0
      %v4856 = vsel %vm4820, %v4063, 0.0
      %v4857 = vsel %vm4821, %v4064, 0.0
      %v4858 = vsel %vm4822, %v4065, 0.0
      %v4859 = vsel %vm4823, %v4066, 0.0
      %v4860 = vsel %vm4824, %v4067, 0.0
      %v4861 = vsel %vm4825, %v4068, 0.0
      %v4862 = vsel %vm4826, %v4069, 0.0
      %v4863 = vsel %vm4827, %v4070, 0.0
      %v4864 = vsel %vm4828, %v4071, 0.0
      %v4865 = vsel %vm4829, %v4072, 0.0
      %v4866 = vsel %vm4830, %v4073, 0.0
      %v4867 = vsel %vm4831, %v4074, 0.0
      %v4868 = vsel %vm4832, %v4075, 0.0
      %v4869 = vsel %vm4833, %v4076, 0.0
      %v4870 = vsel %vm4834, %v4077, 0.0
      %v4871 = vsel %vm4835, %v4078, 0.0
      %v4872 = vsel %vm4836, %v4079, 0.0
      %v4873 = vsel %vm4837, %v4080, 0.0
      %v4874 = vsel %vm4838, %v4081, 0.0
      %v4875 = vsel %vm4839, %v4082, 0.0
      %v4876 = vsel %vm4840, %v4083, 0.0
      %v4877 = vsel %vm317, %v4841, 0.0
      %v4878 = vsel %vm317, %v4842, 0.0
      %v4879 = vadd.f32 %v4877, %v4878
      %v4880 = vsel %vm317, %v4843, 0.0
      %v4881 = vadd.f32 %v4879, %v4880
      %v4882 = vsel %vm317, %v4844, 0.0
      %v4883 = vadd.f32 %v4881, %v4882
      %v4884 = vsel %vm317, %v4845, 0.0
      %v4885 = vadd.f32 %v4883, %v4884
      %v4886 = vsel %vm317, %v4846, 0.0
      %v4887 = vadd.f32 %v4885, %v4886
      %v4888 = vsel %vm317, %v4847, 0.0
      %v4889 = vadd.f32 %v4887, %v4888
      %v4890 = vsel %vm317, %v4848, 0.0
      %v4891 = vadd.f32 %v4889, %v4890
      %v4892 = vsel %vm317, %v4849, 0.0
      %v4893 = vadd.f32 %v4891, %v4892
      %v4894 = vsel %vm317, %v4850, 0.0
      %v4895 = vadd.f32 %v4893, %v4894
      %v4896 = vsel %vm317, %v4851, 0.0
      %v4897 = vadd.f32 %v4895, %v4896
      %v4898 = vsel %vm317, %v4852, 0.0
      %v4899 = vadd.f32 %v4897, %v4898
      %v4900 = vsel %vm317, %v4853, 0.0
      %v4901 = vadd.f32 %v4899, %v4900
      %v4902 = vsel %vm317, %v4854, 0.0
      %v4903 = vadd.f32 %v4901, %v4902
      %v4904 = vsel %vm317, %v4855, 0.0
      %v4905 = vadd.f32 %v4903, %v4904
      %v4906 = vsel %vm317, %v4856, 0.0
      %v4907 = vadd.f32 %v4905, %v4906
      %v4908 = vsel %vm317, %v4857, 0.0
      %v4909 = vadd.f32 %v4907, %v4908
      %v4910 = vsel %vm317, %v4858, 0.0
      %v4911 = vadd.f32 %v4909, %v4910
      %v4912 = vsel %vm317, %v4859, 0.0
      %v4913 = vadd.f32 %v4911, %v4912
      %v4914 = vsel %vm317, %v4860, 0.0
      %v4915 = vadd.f32 %v4913, %v4914
      %v4916 = vsel %vm317, %v4861, 0.0
      %v4917 = vadd.f32 %v4915, %v4916
      %v4918 = vsel %vm317, %v4862, 0.0
      %v4919 = vadd.f32 %v4917, %v4918
      %v4920 = vsel %vm317, %v4863, 0.0
      %v4921 = vadd.f32 %v4919, %v4920
      %v4922 = vsel %vm317, %v4864, 0.0
      %v4923 = vadd.f32 %v4921, %v4922
      %v4924 = vsel %vm317, %v4865, 0.0
      %v4925 = vadd.f32 %v4923, %v4924
      %v4926 = vsel %vm317, %v4866, 0.0
      %v4927 = vadd.f32 %v4925, %v4926
      %v4928 = vsel %vm317, %v4867, 0.0
      %v4929 = vadd.f32 %v4927, %v4928
      %v4930 = vsel %vm317, %v4868, 0.0
      %v4931 = vadd.f32 %v4929, %v4930
      %v4932 = vsel %vm317, %v4869, 0.0
      %v4933 = vadd.f32 %v4931, %v4932
      %v4934 = vsel %vm317, %v4870, 0.0
      %v4935 = vadd.f32 %v4933, %v4934
      %v4936 = vsel %vm317, %v4871, 0.0
      %v4937 = vadd.f32 %v4935, %v4936
      %v4938 = vsel %vm317, %v4872, 0.0
      %v4939 = vadd.f32 %v4937, %v4938
      %v4940 = vsel %vm317, %v4873, 0.0
      %v4941 = vadd.f32 %v4939, %v4940
      %v4942 = vsel %vm317, %v4874, 0.0
      %v4943 = vadd.f32 %v4941, %v4942
      %v4944 = vsel %vm317, %v4875, 0.0
      %v4945 = vadd.f32 %v4943, %v4944
      %v4946 = vsel %vm317, %v4876, 0.0
      %v4947 = vadd.f32 %v4945, %v4946
      %v4948 = vrot.slane %v4947, 4
      %v4949 = vadd.f32 %v4947, %v4948
      %v4950 = vrot.slane %v4949, 2
      %v4951 = vadd.f32 %v4949, %v4950
      %v4952 = vrot.slane %v4951, 1
      %v4953 = vadd.f32 %v4951, %v4952
      %vm4954 = vcmask 24576
      %4955 = vst.msk [vmem:[%s238] sm:$0x1] %vm4954, %v4953
      %v4956 = vmul.f32 %v4841, %v4048
      %v4957 = vmul.f32 %v4842, %v4049
      %v4958 = vmul.f32 %v4843, %v4050
      %v4959 = vmul.f32 %v4844, %v4051
      %v4960 = vmul.f32 %v4845, %v4052
      %v4961 = vmul.f32 %v4846, %v4053
      %v4962 = vmul.f32 %v4847, %v4054
      %v4963 = vmul.f32 %v4848, %v4055
      %v4964 = vmul.f32 %v4849, %v4056
      %v4965 = vmul.f32 %v4850, %v4057
      %v4966 = vmul.f32 %v4851, %v4058
      %v4967 = vmul.f32 %v4852, %v4059
      %v4968 = vmul.f32 %v4853, %v4060
      %v4969 = vmul.f32 %v4854, %v4061
      %v4970 = vmul.f32 %v4855, %v4062
      %v4971 = vmul.f32 %v4856, %v4063
      %v4972 = vmul.f32 %v4857, %v4064
      %v4973 = vmul.f32 %v4858, %v4065
      %v4974 = vmul.f32 %v4859, %v4066
      %v4975 = vmul.f32 %v4860, %v4067
      %v4976 = vmul.f32 %v4861, %v4068
      %v4977 = vmul.f32 %v4862, %v4069
      %v4978 = vmul.f32 %v4863, %v4070
      %v4979 = vmul.f32 %v4864, %v4071
      %v4980 = vmul.f32 %v4865, %v4072
      %v4981 = vmul.f32 %v4866, %v4073
      %v4982 = vmul.f32 %v4867, %v4074
      %v4983 = vmul.f32 %v4868, %v4075
      %v4984 = vmul.f32 %v4869, %v4076
      %v4985 = vmul.f32 %v4870, %v4077
      %v4986 = vmul.f32 %v4871, %v4078
      %v4987 = vmul.f32 %v4872, %v4079
      %v4988 = vmul.f32 %v4873, %v4080
      %v4989 = vmul.f32 %v4874, %v4081
      %v4990 = vmul.f32 %v4875, %v4082
      %v4991 = vmul.f32 %v4876, %v4083
      %v4992 = vsel %vm317, %v4956, 0.0
      %v4993 = vsel %vm317, %v4957, 0.0
      %v4994 = vadd.f32 %v4992, %v4993
      %v4995 = vsel %vm317, %v4958, 0.0
      %v4996 = vadd.f32 %v4994, %v4995
      %v4997 = vsel %vm317, %v4959, 0.0
      %v4998 = vadd.f32 %v4996, %v4997
      %v4999 = vsel %vm317, %v4960, 0.0
      %v5000 = vadd.f32 %v4998, %v4999
      %v5001 = vsel %vm317, %v4961, 0.0
      %v5002 = vadd.f32 %v5000, %v5001
      %v5003 = vsel %vm317, %v4962, 0.0
      %v5004 = vadd.f32 %v5002, %v5003
      %v5005 = vsel %vm317, %v4963, 0.0
      %v5006 = vadd.f32 %v5004, %v5005
      %v5007 = vsel %vm317, %v4964, 0.0
      %v5008 = vadd.f32 %v5006, %v5007
      %v5009 = vsel %vm317, %v4965, 0.0
      %v5010 = vadd.f32 %v5008, %v5009
      %v5011 = vsel %vm317, %v4966, 0.0
      %v5012 = vadd.f32 %v5010, %v5011
      %v5013 = vsel %vm317, %v4967, 0.0
      %v5014 = vadd.f32 %v5012, %v5013
      %v5015 = vsel %vm317, %v4968, 0.0
      %v5016 = vadd.f32 %v5014, %v5015
      %v5017 = vsel %vm317, %v4969, 0.0
      %v5018 = vadd.f32 %v5016, %v5017
      %v5019 = vsel %vm317, %v4970, 0.0
      %v5020 = vadd.f32 %v5018, %v5019
      %v5021 = vsel %vm317, %v4971, 0.0
      %v5022 = vadd.f32 %v5020, %v5021
      %v5023 = vsel %vm317, %v4972, 0.0
      %v5024 = vadd.f32 %v5022, %v5023
      %v5025 = vsel %vm317, %v4973, 0.0
      %v5026 = vadd.f32 %v5024, %v5025
      %v5027 = vsel %vm317, %v4974, 0.0
      %v5028 = vadd.f32 %v5026, %v5027
      %v5029 = vsel %vm317, %v4975, 0.0
      %v5030 = vadd.f32 %v5028, %v5029
      %v5031 = vsel %vm317, %v4976, 0.0
      %v5032 = vadd.f32 %v5030, %v5031
      %v5033 = vsel %vm317, %v4977, 0.0
      %v5034 = vadd.f32 %v5032, %v5033
      %v5035 = vsel %vm317, %v4978, 0.0
      %v5036 = vadd.f32 %v5034, %v5035
      %v5037 = vsel %vm317, %v4979, 0.0
      %v5038 = vadd.f32 %v5036, %v5037
      %v5039 = vsel %vm317, %v4980, 0.0
      %v5040 = vadd.f32 %v5038, %v5039
      %v5041 = vsel %vm317, %v4981, 0.0
      %v5042 = vadd.f32 %v5040, %v5041
      %v5043 = vsel %vm317, %v4982, 0.0
      %v5044 = vadd.f32 %v5042, %v5043
      %v5045 = vsel %vm317, %v4983, 0.0
      %v5046 = vadd.f32 %v5044, %v5045
      %v5047 = vsel %vm317, %v4984, 0.0
      %v5048 = vadd.f32 %v5046, %v5047
      %v5049 = vsel %vm317, %v4985, 0.0
      %v5050 = vadd.f32 %v5048, %v5049
      %v5051 = vsel %vm317, %v4986, 0.0
      %v5052 = vadd.f32 %v5050, %v5051
      %v5053 = vsel %vm317, %v4987, 0.0
      %v5054 = vadd.f32 %v5052, %v5053
      %v5055 = vsel %vm317, %v4988, 0.0
      %v5056 = vadd.f32 %v5054, %v5055
      %v5057 = vsel %vm317, %v4989, 0.0
      %v5058 = vadd.f32 %v5056, %v5057
      %v5059 = vsel %vm317, %v4990, 0.0
      %v5060 = vadd.f32 %v5058, %v5059
      %v5061 = vsel %vm317, %v4991, 0.0
      %v5062 = vadd.f32 %v5060, %v5061
      %v5063 = vrot.slane %v5062, 4
      %v5064 = vadd.f32 %v5062, %v5063
      %v5065 = vrot.slane %v5064, 2
      %v5066 = vadd.f32 %v5064, %v5065
      %v5067 = vrot.slane %v5066, 1
      %v5068 = vadd.f32 %v5066, %v5067
      %5069 = vst.msk [vmem:[%s241] sm:$0x1] %vm4954, %v5068
      %p5070 = scmp.lt.s32.totalorder %s17, 1
      %s5071 = scalar_select %p5070, %s17, 1
      %s5072 = smul.addr %s5071, 36
      %s5073 = smul.addr %s5072, 8
      %s5074 = scalar_lea.vmem %s3, %s5073
      %p5075 = scmp.lt.s32.totalorder %s17, 1
      %s5076 = scalar_select %p5075, %s17, 1
      %s5077 = scalar_lea.vmem %s4, %s5076
      %p5078 = scmp.lt.s32.totalorder %s17, 1
      %s5079 = scalar_select %p5078, %s17, 1
      %s5080 = scalar_lea.vmem %s5, %s5079
      // Predicated region
      $region33: #{residual_forward.4} parent=31 // pred_check
        %p5081 = pneg %p103
      $region34: #{residual_forward.4} parent=31 // pred_check_branch
        %5083 = sbr.rel (%p5081) target = $region36
      $region35: #{residual_forward.4} parent=31 // pred_region
        _
      $region36: #{residual_forward.4} parent=31 // pred_fallthru
        _
      // Predicated region
      $region37: #{residual_forward.4} parent=31 // pred_check
        %p5084 = pneg %p129
      $region38: #{residual_forward.4} parent=31 // pred_check_branch
        %5086 = sbr.rel (%p5084) target = $region40
      $region39: #{residual_forward.4} parent=31 // pred_region
        _
      $region40: #{residual_forward.4} parent=31 // pred_fallthru
        _
      // Predicated region
      $region41: #{residual_forward.4} parent=31 // pred_check
        %p5087 = pneg %p155
      $region42: #{residual_forward.4} parent=31 // pred_check_branch
        %5089 = sbr.rel (%p5087) target = $region44
      $region43: #{residual_forward.4} parent=31 // pred_region
        _
      $region44: #{residual_forward.4} parent=31 // pred_fallthru
        _
    $region32: #{residual_forward.4} parent=5 // pred_fallthru
      _
    %p5090 = scmp.le.s32.totalorder 2, %s12
    // Predicated region
    $region45: #{residual_forward.4} parent=5 // pred_check
      %p5091 = pneg %p5090
    $region46: #{residual_forward.4} parent=5 // pred_check_branch
      %5093 = sbr.rel (%p5091) target = $region48
    $region47: #{residual_forward.4} parent=5 // pred_region
      %s5094 = ssub.s32 %s12, 2
      // Predicated region
      $region49: #{residual_forward.4} parent=47 // pred_check
        %p5095 = pneg %p109
      $region50: #{residual_forward.4} parent=47 // pred_check_branch
        %5097 = sbr.rel (%p5095) target = $region52
      $region51: #{residual_forward.4} parent=47 // pred_region
        %p5098 = scmp.lt.s32.totalorder %s18, 1
        %s5099 = scalar_select %p5098, %s18, 1
        %s5100 = smul.addr %s5099, 36
        %s5101 = smul.addr %s5100, 8
        %s5102 = scalar_lea.vmem %s3, %s5101
      $region52: #{residual_forward.4} parent=47 // pred_fallthru
        _
      // Predicated region
      $region53: #{residual_forward.4} parent=47 // pred_check
        %p5103 = pneg %p135
      $region54: #{residual_forward.4} parent=47 // pred_check_branch
        %5105 = sbr.rel (%p5103) target = $region56
      $region55: #{residual_forward.4} parent=47 // pred_region
        %p5106 = scmp.lt.s32.totalorder %s18, 1
        %s5107 = scalar_select %p5106, %s18, 1
        %s5108 = scalar_lea.vmem %s4, %s5107
      $region56: #{residual_forward.4} parent=47 // pred_fallthru
        _
      // Predicated region
      $region57: #{residual_forward.4} parent=47 // pred_check
        %p5109 = pneg %p161
      $region58: #{residual_forward.4} parent=47 // pred_check_branch
        %5111 = sbr.rel (%p5109) target = $region60
      $region59: #{residual_forward.4} parent=47 // pred_region
        %p5112 = scmp.lt.s32.totalorder %s18, 1
        %s5113 = scalar_select %p5112, %s18, 1
        %s5114 = scalar_lea.vmem %s5, %s5113
      $region60: #{residual_forward.4} parent=47 // pred_fallthru
        _
    $region48: #{residual_forward.4} parent=5 // pred_fallthru
      _
  $region6: #{residual_forward.4} parent=0 // loop_footer
    %s16 = sadd.s32 1, %s12
  $region7: #{residual_forward.4} parent=0 // loop_footer_branch
    %11 = sbr.rel target = $region3
  $region8: #{residual_forward.4} parent=0 // loop_exit
    _

// kernel: residual_forward.7
$region0: #{residual_forward.7}
  #allocation0 [shape = 'u32[]', space=smem, size = 0x4, offset = 0x4, fixed_abs, tag = 'smem constant byte address 0x4 - core index']
  #allocation1 [shape = 'u32[144,128]{1,0:T(1,128)}', space=vmem, size = 0x12000, scoped, tag = 'internal scratch']
  %s0 = inlined_call_operand.vmem [shape: f32[2,1024], index: 0, kind: input, shape index: {}]
  %s1 = inlined_call_operand.vmem [shape: f32[2,1024], index: 1, kind: input, shape index: {}, may-alias: {1,4}]
  %s2 = inlined_call_operand.vmem [shape: f32[1,1024], index: 2, kind: input, shape index: {}]
  %s3 = inlined_call_operand.vmem [shape: f32[1,1024], index: 3, kind: input, shape index: {}]
  %s4 = inlined_call_operand.vmem [shape: f32[2,1024], index: 4, kind: output, shape index: {}, may-alias: {1,4}]
  %s5 = sld [smem:[#allocation0]]
  $region26: #{residual_forward.7} parent=0
    _
  %s7 = ssub.s32 1, %s5
  %s8 = scalar_select 0, %s7, %s5
  // Predicated region
  $region2: #{residual_forward.7} parent=0 // pred_check
    _
  $region3: #{residual_forward.7} parent=0 // pred_check_branch
    %10 = sbr.rel (0) target = $region5
  $region4: #{residual_forward.7} parent=0 // pred_region
    _
  $region5: #{residual_forward.7} parent=0 // pred_fallthru
    _
  // Predicated region
  $region6: #{residual_forward.7} parent=0 // pred_check
    _
  $region7: #{residual_forward.7} parent=0 // pred_check_branch
    %12 = sbr.rel (0) target = $region9
  $region8: #{residual_forward.7} parent=0 // pred_region
    _
  $region9: #{residual_forward.7} parent=0 // pred_fallthru
    _
  // Predicated region
  $region10: #{residual_forward.7} parent=0 // pred_check
    _
  $region11: #{residual_forward.7} parent=0 // pred_check_branch
    %14 = sbr.rel (0) target = $region13
  $region12: #{residual_forward.7} parent=0 // pred_region
    _
  $region13: #{residual_forward.7} parent=0 // pred_fallthru
    _
  // Predicated region
  $region14: #{residual_forward.7} parent=0 // pred_check
    _
  $region15: #{residual_forward.7} parent=0 // pred_check_branch
    %16 = sbr.rel (0) target = $region17
  $region16: #{residual_forward.7} parent=0 // pred_region
    _
  $region17: #{residual_forward.7} parent=0 // pred_fallthru
    _
  %v17 = vld [vmem:[%s0] sm:$0xff]
  %v18 = vld [vmem:[%s0 + $0x8] sm:$0xff]
  %v19 = vld [vmem:[%s2] sm:$0xff]
  %v21 = vlaneseq
  %v22 = vshrl.u32 %v21, 7
  %v23 = vsub.s32 0, %v22
  %v24 = vrot.slane %v19, %v23
  %v25 = vlaneseq
  %v26 = vshrl.u32 %v25, 7
  %v27 = vsub.s32 1, %v26
  %v28 = vrot.slane %v19, %v27
  %v29 = vlaneseq
  %v30 = vshrl.u32 %v29, 7
  %v31 = vsub.s32 2, %v30
  %v32 = vrot.slane %v19, %v31
  %v33 = vlaneseq
  %v34 = vshrl.u32 %v33, 7
  %v35 = vsub.s32 3, %v34
  %v36 = vrot.slane %v19, %v35
  %v37 = vlaneseq
  %v38 = vshrl.u32 %v37, 7
  %v39 = vsub.s32 4, %v38
  %v40 = vrot.slane %v19, %v39
  %v41 = vlaneseq
  %v42 = vshrl.u32 %v41, 7
  %v43 = vsub.s32 5, %v42
  %v44 = vrot.slane %v19, %v43
  %v45 = vlaneseq
  %v46 = vshrl.u32 %v45, 7
  %v47 = vsub.s32 6, %v46
  %v48 = vrot.slane %v19, %v47
  %v49 = vlaneseq
  %v50 = vshrl.u32 %v49, 7
  %v51 = vsub.s32 7, %v50
  %v52 = vrot.slane %v19, %v51
  %v53 = vcombine.low %v24, %v28
  %v54 = vcombine.low %v32, %v36
  %v56 = vunpack.c.l.s4 1983009808
  %v57 = vunpack.c.0.s8 %v56
  %v58 = vlaneseq
  %v59 = vshrl.u32 %v58, 7
  %v60 = vsub.s32 %v57, %v59
  %v61 = vrot.slane %v53, %v60
  %v63 = vunpack.c.l.s4 1983009808
  %v64 = vunpack.c.0.s8 %v63
  %v65 = vlaneseq
  %v66 = vshrl.u32 %v65, 7
  %v67 = vsub.s32 %v64, %v66
  %v68 = vrot.slane %v54, %v67
  %v69 = vcombine.low %v61, %v68
  %v70 = vcombine.low %v40, %v44
  %v71 = vcombine.low %v48, %v52
  %v73 = vunpack.c.l.s4 1983009808
  %v74 = vunpack.c.0.s8 %v73
  %v75 = vlaneseq
  %v76 = vshrl.u32 %v75, 7
  %v77 = vsub.s32 %v74, %v76
  %v78 = vrot.slane %v70, %v77
  %v80 = vunpack.c.l.s4 1983009808
  %v81 = vunpack.c.0.s8 %v80
  %v82 = vlaneseq
  %v83 = vshrl.u32 %v82, 7
  %v84 = vsub.s32 %v81, %v83
  %v85 = vrot.slane %v71, %v84
  %v86 = vcombine.low %v78, %v85
  %v89 = vmul.f32 %v17, %v69
  %v90 = vmul.f32 %v18, %v86
  %v91 = vld [vmem:[%s3] sm:$0xff]
  %v93 = vlaneseq
  %v94 = vshrl.u32 %v93, 7
  %v95 = vsub.s32 0, %v94
  %v96 = vrot.slane %v91, %v95
  %v97 = vlaneseq
  %v98 = vshrl.u32 %v97, 7
  %v99 = vsub.s32 1, %v98
  %v100 = vrot.slane %v91, %v99
  %v101 = vlaneseq
  %v102 = vshrl.u32 %v101, 7
  %v103 = vsub.s32 2, %v102
  %v104 = vrot.slane %v91, %v103
  %v105 = vlaneseq
  %v106 = vshrl.u32 %v105, 7
  %v107 = vsub.s32 3, %v106
  %v108 = vrot.slane %v91, %v107
  %v109 = vlaneseq
  %v110 = vshrl.u32 %v109, 7
  %v111 = vsub.s32 4, %v110
  %v112 = vrot.slane %v91, %v111
  %v113 = vlaneseq
  %v114 = vshrl.u32 %v113, 7
  %v115 = vsub.s32 5, %v114
  %v116 = vrot.slane %v91, %v115
  %v117 = vlaneseq
  %v118 = vshrl.u32 %v117, 7
  %v119 = vsub.s32 6, %v118
  %v120 = vrot.slane %v91, %v119
  %v121 = vlaneseq
  %v122 = vshrl.u32 %v121, 7
  %v123 = vsub.s32 7, %v122
  %v124 = vrot.slane %v91, %v123
  %v125 = vcombine.low %v96, %v100
  %v126 = vcombine.low %v104, %v108
  %v128 = vunpack.c.l.s4 1983009808
  %v129 = vunpack.c.0.s8 %v128
  %v130 = vlaneseq
  %v131 = vshrl.u32 %v130, 7
  %v132 = vsub.s32 %v129, %v131
  %v133 = vrot.slane %v125, %v132
  %v135 = vunpack.c.l.s4 1983009808
  %v136 = vunpack.c.0.s8 %v135
  %v137 = vlaneseq
  %v138 = vshrl.u32 %v137, 7
  %v139 = vsub.s32 %v136, %v138
  %v140 = vrot.slane %v126, %v139
  %v141 = vcombine.low %v133, %v140
  %v142 = vcombine.low %v112, %v116
  %v143 = vcombine.low %v120, %v124
  %v145 = vunpack.c.l.s4 1983009808
  %v146 = vunpack.c.0.s8 %v145
  %v147 = vlaneseq
  %v148 = vshrl.u32 %v147, 7
  %v149 = vsub.s32 %v146, %v148
  %v150 = vrot.slane %v142, %v149
  %v152 = vunpack.c.l.s4 1983009808
  %v153 = vunpack.c.0.s8 %v152
  %v154 = vlaneseq
  %v155 = vshrl.u32 %v154, 7
  %v156 = vsub.s32 %v153, %v155
  %v157 = vrot.slane %v143, %v156
  %v158 = vcombine.low %v150, %v157
  %v161 = vadd.f32 %v89, %v141
  %v162 = vadd.f32 %v90, %v158
  %v163 = vld [vmem:[%s1] sm:$0xff]
  %v164 = vld [vmem:[%s1 + $0x8] sm:$0xff]
  %v165 = vadd.f32 %v161, %v163
  %v166 = vadd.f32 %v162, %v164
  %v167 = vmax.f32 %v165, 0.0
  %v168 = vmax.f32 %v166, 0.0
  %169 = vst [vmem:[%s4] sm:$0xff] %v167
  %170 = vst [vmem:[%s4 + $0x8] sm:$0xff] %v168
  // Predicated region
  $region18: #{residual_forward.7} parent=0 // pred_check
    _
  $region19: #{residual_forward.7} parent=0 // pred_check_branch
    %172 = sbr.rel (0) target = $region21
  $region20: #{residual_forward.7} parent=0 // pred_region
    _
  $region21: #{residual_forward.7} parent=0 // pred_fallthru
    _
  // Predicated region
  $region22: #{residual_forward.7} parent=0 // pred_check
    _
  $region23: #{residual_forward.7} parent=0 // pred_check_branch
    %174 = sbr.rel (0) target = $region25
  $region24: #{residual_forward.7} parent=0 // pred_region
    _
  $region25: #{residual_forward.7} parent=0 // pred_fallthru
    _

</llo_original>
